<compile_context>
chip_gen: v6e
topology: v6e:2x2x1
jax: 0.10.0
libtpu: 0.0.40
codegen_flags: <defaults>
</compile_context>

<pallas_src>
import math
from functools import partial

import jax
import jax.numpy as jnp
import numpy as np
from jax.experimental import pallas as pl
from jax.experimental.pallas import tpu as pltpu

EPS = 1e-5          # BatchNorm2d default eps
IN_NODES = 48
D_K = 8
NO_CLASSES = 10
CONV_CFG = [(3, 16), (16, 32), (32, 48)]   # (Cin, Cout) per conv layer


def _vmem():
    return pl.BlockSpec(memory_space=pltpu.MemorySpace.VMEM)


# ----------------------------------------------------------------------------
# Pallas kernels
# ----------------------------------------------------------------------------
def conv_s2d_bn_relu_kernel(s2d_ref, w0_ref, w1_ref, scale_ref, shift_ref, o_ref):
    # One sample per grid step.
    #   s2d_ref     : (1, Ho+1, (Wo+1)*4*Cin)  space-to-depth packed, padded input
    #   w0/w1       : ((Wo+1)*4*Cin, Wo*Cout)  conv taps with row-phase 0 / 1
    #   scale/shift : (1, Wo*Cout)             folded BatchNorm (+ conv bias)
    #   o_ref       : (1, Ho, Wo*Cout)
    ho = o_ref.shape[1]
    x = s2d_ref[0]                                              # (Ho+1, F_in)
    acc = jnp.dot(x[0:ho, :], w0_ref[...], preferred_element_type=jnp.float32)
    acc = acc + jnp.dot(x[1:ho + 1, :], w1_ref[...],
                        preferred_element_type=jnp.float32)
    o_ref[0] = jnp.maximum(acc * scale_ref[...] + shift_ref[...], 0.0)


def conv_s2d_bn_relu_gap_kernel(s2d_ref, w0_ref, w1_ref, scale_ref, shift_ref,
                                gap_ref, o_ref):
    # Same as conv_s2d_bn_relu_kernel plus the global average pool folded in,
    # expressed as a tiny matmul with a constant (Wo*Cout, Cout) pooling matrix.
    #   o_ref : (1, 1, Cout)
    ho = s2d_ref.shape[1] - 1
    x = s2d_ref[0]
    acc = jnp.dot(x[0:ho, :], w0_ref[...], preferred_element_type=jnp.float32)
    acc = acc + jnp.dot(x[1:ho + 1, :], w1_ref[...],
                        preferred_element_type=jnp.float32)
    y = jnp.maximum(acc * scale_ref[...] + shift_ref[...], 0.0)   # (Ho, Wo*Cout)
    o_ref[0] = jnp.dot(jnp.sum(y, axis=0, keepdims=True), gap_ref[...],
                       preferred_element_type=jnp.float32)        # (1, Cout)


def attention_stack_kernel(x_ref, wqkv_ref, bqkv_ref, wf_ref, bf_ref,
                           wfc_ref, bfc_ref, o_ref, *, d_k):
    # 4 Ultimus blocks + final Linear + softmax; `feat` stays in VMEM throughout.
    feat = x_ref[...]                                             # (B, 48)
    inv_sqrt_dk = 1.0 / math.sqrt(d_k)
    n_blocks = wqkv_ref.shape[0]
    for u in range(n_blocks):
        qkv = jnp.dot(feat, wqkv_ref[u],
                      preferred_element_type=jnp.float32) + bqkv_ref[u]
        qkv = jnp.maximum(qkv, 0.0)                               # (B, 3*d_k)
        q = qkv[:, 0:d_k]
        k = qkv[:, d_k:2 * d_k]
        v = qkv[:, 2 * d_k:3 * d_k]
        # SA = Q^T K (contract over the batch axis), softmax over dim 0,
        # then scaled by 1/sqrt(d_k) (folded into the reciprocal multiply).
        sa = jax.lax.dot_general(q, k, (((0,), (0,)), ((), ())),
                                 preferred_element_type=jnp.float32)  # (d_k,d_k)
        sa = sa - jnp.max(sa, axis=0, keepdims=True)
        e = jnp.exp(sa)
        denom = jnp.sum(e, axis=0, keepdims=True)
        sa_soft = e * (pl.reciprocal(denom, approx=True) * inv_sqrt_dk)
        att = jnp.dot(v, sa_soft, preferred_element_type=jnp.float32)  # (B, d_k)
        feat = jnp.maximum(
            jnp.dot(att, wf_ref[u], preferred_element_type=jnp.float32)
            + bf_ref[u], 0.0)                                     # (B, 48)
    logits = jnp.dot(feat, wfc_ref[...],
                     preferred_element_type=jnp.float32) + bfc_ref[...]
    logits = logits - jnp.max(logits, axis=1, keepdims=True)
    e = jnp.exp(logits)
    o_ref[...] = e / jnp.sum(e, axis=1, keepdims=True)


# ----------------------------------------------------------------------------
# pallas_call wrappers
# ----------------------------------------------------------------------------
def _conv_cost(n, ho, f_in, f_out):
    flops = 2 * 2 * n * ho * f_in * f_out
    bytes_accessed = 4 * (n * (ho + 1) * f_in + 2 * f_in * f_out + n * ho * f_out)
    return pl.CostEstimate(flops=flops, transcendentals=0,
                           bytes_accessed=bytes_accessed)


def conv_layer(s2d, w0, w1, scale_row, shift_row):
    n, hop1, f_in = s2d.shape
    ho = hop1 - 1
    f_out = w0.shape[1]
    return pl.pallas_call(
        conv_s2d_bn_relu_kernel,
        out_shape=jax.ShapeDtypeStruct((n, ho, f_out), jnp.float32),
        grid=(n,),
        in_specs=[
            pl.BlockSpec((1, hop1, f_in), lambda i: (i, 0, 0)),
            pl.BlockSpec(w0.shape, lambda i: (0, 0)),
            pl.BlockSpec(w1.shape, lambda i: (0, 0)),
            pl.BlockSpec(scale_row.shape, lambda i: (0, 0)),
            pl.BlockSpec(shift_row.shape, lambda i: (0, 0)),
        ],
        out_specs=pl.BlockSpec((1, ho, f_out), lambda i: (i, 0, 0)),
        compiler_params=pltpu.CompilerParams(dimension_semantics=("parallel",)),
        cost_estimate=_conv_cost(n, ho, f_in, f_out),
    )(s2d, w0, w1, scale_row, shift_row)


def conv_gap_layer(s2d, w0, w1, scale_row, shift_row, gap_mat):
    n, hop1, f_in = s2d.shape
    ho = hop1 - 1
    f_out = w0.shape[1]
    cout = gap_mat.shape[1]
    return pl.pallas_call(
        conv_s2d_bn_relu_gap_kernel,
        out_shape=jax.ShapeDtypeStruct((n, 1, cout), jnp.float32),
        grid=(n,),
        in_specs=[
            pl.BlockSpec((1, hop1, f_in), lambda i: (i, 0, 0)),
            pl.BlockSpec(w0.shape, lambda i: (0, 0)),
            pl.BlockSpec(w1.shape, lambda i: (0, 0)),
            pl.BlockSpec(scale_row.shape, lambda i: (0, 0)),
            pl.BlockSpec(shift_row.shape, lambda i: (0, 0)),
            pl.BlockSpec(gap_mat.shape, lambda i: (0, 0)),
        ],
        out_specs=pl.BlockSpec((1, 1, cout), lambda i: (i, 0, 0)),
        compiler_params=pltpu.CompilerParams(dimension_semantics=("parallel",)),
        cost_estimate=_conv_cost(n, ho, f_in, f_out),
    )(s2d, w0, w1, scale_row, shift_row, gap_mat)


def attention_stack(feat, wqkv, bqkv, wf, bf, wfc, bfc, *, d_k=D_K):
    n = feat.shape[0]
    nc = wfc.shape[1]
    return pl.pallas_call(
        partial(attention_stack_kernel, d_k=d_k),
        out_shape=jax.ShapeDtypeStruct((n, nc), jnp.float32),
        in_specs=[_vmem()] * 7,
        out_specs=_vmem(),
    )(feat, wqkv, bqkv, wf, bf, wfc, bfc)


# ----------------------------------------------------------------------------
# Glue: space-to-depth packing, one-time parameter packing, full forward
# ----------------------------------------------------------------------------
def space_to_depth_padded(x_nhwc):
    """(N, H, W, C) -> (N, H//2+1, (W//2+1)*4*C), pad=1, 2x2 phase packing.

    out[n, I, J*4C + pi*2C + pj*C + c] = x_pad[n, 2I+pi, 2J+pj, c]
    """
    n, h, w, c = x_nhwc.shape
    ho, wo = h // 2, w // 2
    xp = jnp.pad(x_nhwc, ((0, 0), (1, 1), (1, 1), (0, 0)))
    s = xp.reshape(n, ho + 1, 2, wo + 1, 2, c)
    s = jnp.transpose(s, (0, 1, 3, 2, 4, 5))
    return s.reshape(n, ho + 1, (wo + 1) * 4 * c)


def _pack_conv_weight(w_oihw, wo):
    """PyTorch (Cout, Cin, 3, 3) -> two ((wo+1)*4*Cin, wo*Cout) matrices.

    wbig[d_i][J*4Cin + pi*2Cin + pj*Cin + ci, j*Cout + co]
        = w[co, ci, 2*d_i + pi, 2*(J - j) + pj]     (when the tap indices <= 2)
    so that out[i, j*Cout+co] = sum_{d_i in {0,1}} (s2d[i+d_i, :] @ wbig[d_i])
    reproduces the stride-2, pad-1, 3x3 convolution.
    """
    cout, cin = w_oihw.shape[0], w_oihw.shape[1]
    big = np.zeros((2, wo + 1, 2, 2, cin, wo, cout), np.float32)
    for d_i in range(2):
        for pi in range(2):
            di = 2 * d_i + pi
            if di > 2:
                continue
            for d_j in range(2):
                for pj in range(2):
                    dj = 2 * d_j + pj
                    if dj > 2:
                        continue
                    wtap = np.transpose(w_oihw[:, :, di, dj])     # (Cin, Cout)
                    for j in range(wo):
                        big[d_i, j + d_j, pi, pj, :, j, :] = wtap
    return big.reshape(2, (wo + 1) * 4 * cin, wo * cout)


def prepare_params(params, *, img_hw=32, d_k=D_K):
    """One-time host-side packing of PyTorch-layout parameters for the kernels."""
    prep = {}
    hw = img_hw
    for idx, (cin, cout) in enumerate(CONV_CFG, start=1):
        ho = hw // 2
        w = np.asarray(params[f"conv{idx}_w"], np.float32)
        b = np.asarray(params[f"conv{idx}_b"], np.float32)
        gamma = np.asarray(params[f"bn{idx}_gamma"], np.float32)
        beta = np.asarray(params[f"bn{idx}_beta"], np.float32)
        wbig = _pack_conv_weight(w, ho)
        # Eval-mode BatchNorm (running_mean=0, running_var=1) folded with bias.
        scale = gamma / np.sqrt(1.0 + EPS)
        shift = b * scale + beta
        prep[f"c{idx}_w0"] = jnp.asarray(wbig[0])
        prep[f"c{idx}_w1"] = jnp.asarray(wbig[1])
        prep[f"c{idx}_scale"] = jnp.asarray(np.tile(scale, ho)[None, :])
        prep[f"c{idx}_shift"] = jnp.asarray(np.tile(shift, ho)[None, :])
        hw = ho
    # Global-average-pool matrix: (Wo*Cout, Cout), sums the Wo column groups.
    last_cout = CONV_CFG[-1][1]
    gap = np.kron(np.ones((hw, 1), np.float32),
                  np.eye(last_cout, dtype=np.float32)) / float(hw * hw)
    prep["gap_mat"] = jnp.asarray(gap)
    # Ultimus blocks: pre-transpose and concatenate Q/K/V per block.
    wqkv, bqkv, wff, bff = [], [], [], []
    for u in range(1, 5):
        wq = np.asarray(params[f"u{u}_wq"], np.float32)
        wk = np.asarray(params[f"u{u}_wk"], np.float32)
        wv = np.asarray(params[f"u{u}_wv"], np.float32)
        wqkv.append(np.concatenate([wq.T, wk.T, wv.T], axis=1))   # (48, 3*d_k)
        bqkv.append(np.concatenate(
            [np.asarray(params[f"u{u}_bq"], np.float32),
             np.asarray(params[f"u{u}_bk"], np.float32),
             np.asarray(params[f"u{u}_bv"], np.float32)])[None, :])
        wff.append(np.asarray(params[f"u{u}_wf"], np.float32).T)  # (d_k, 48)
        bff.append(np.asarray(params[f"u{u}_bf"], np.float32)[None, :])
    prep["wqkv"] = jnp.asarray(np.stack(wqkv))                    # (4, 48, 3*d_k)
    prep["bqkv"] = jnp.asarray(np.stack(bqkv))                    # (4, 1, 3*d_k)
    prep["wf"] = jnp.asarray(np.stack(wff))                       # (4, d_k, 48)
    prep["bf"] = jnp.asarray(np.stack(bff))                       # (4, 1, 48)
    prep["wfc"] = jnp.asarray(np.asarray(params["fc_w"], np.float32).T)
    prep["bfc"] = jnp.asarray(np.asarray(params["fc_b"], np.float32)[None, :])
    return prep


@jax.jit
def attention_net_forward(prep, x_nchw):
    x = jnp.transpose(x_nchw, (0, 2, 3, 1)).astype(jnp.float32)   # NCHW -> NHWC
    n = x.shape[0]
    # conv1, conv2: fused conv + BN(eval) + ReLU, one sample per grid step.
    for idx in (1, 2):
        y = conv_layer(space_to_depth_padded(x),
                       prep[f"c{idx}_w0"], prep[f"c{idx}_w1"],
                       prep[f"c{idx}_scale"], prep[f"c{idx}_shift"])
        ho, f_out = y.shape[1], y.shape[2]
        x = y.reshape(n, ho, ho, f_out // ho)     # back to NHWC (square maps)
    # conv3 + BN + ReLU + 4x4 GAP -> (N, 48)
    feat = conv_gap_layer(space_to_depth_padded(x),
                          prep["c3_w0"], prep["c3_w1"],
                          prep["c3_scale"], prep["c3_shift"], prep["gap_mat"])
    feat = feat.reshape(n, feat.shape[2])
    # 4 Ultimus blocks + final Linear + softmax, all fused in one kernel.
    return attention_stack(feat, prep["wqkv"], prep["bqkv"], prep["wf"],
                           prep["bf"], prep["wfc"], prep["bfc"])


# ----------------------------------------------------------------------------
# Parameters and pure-JAX reference (same eval-mode semantics) for sanity check
# ----------------------------------------------------------------------------
def init_params(key, in_nodes=IN_NODES, d_k=D_K, no_classes=NO_CLASSES):
    keys = iter(jax.random.split(key, 64))

    def rand(shape, scale=0.1):
        return jax.random.normal(next(keys), shape, jnp.float32) * scale

    p = {}
    for idx, (cin, cout) in enumerate(CONV_CFG, start=1):
        p[f"conv{idx}_w"] = rand((cout, cin, 3, 3), 0.2)
        p[f"conv{idx}_b"] = rand((cout,), 0.05)
        p[f"bn{idx}_gamma"] = 1.0 + rand((cout,), 0.05)
        p[f"bn{idx}_beta"] = rand((cout,), 0.05)
    for u in range(1, 5):
        p[f"u{u}_wq"] = rand((d_k, in_nodes))
        p[f"u{u}_bq"] = rand((d_k,), 0.05)
        p[f"u{u}_wk"] = rand((d_k, in_nodes))
        p[f"u{u}_bk"] = rand((d_k,), 0.05)
        p[f"u{u}_wv"] = rand((d_k, in_nodes))
        p[f"u{u}_bv"] = rand((d_k,), 0.05)
        p[f"u{u}_wf"] = rand((in_nodes, d_k))
        p[f"u{u}_bf"] = rand((in_nodes,), 0.05)
    p["fc_w"] = rand((no_classes, in_nodes))
    p["fc_b"] = rand((no_classes,), 0.05)
    return p


def im2col(x_nhwc, kh, kw, stride, pad):
    n, h, w, c = x_nhwc.shape
    xp = jnp.pad(x_nhwc, ((0, 0), (pad, pad), (pad, pad), (0, 0)))
    ho = (h + 2 * pad - kh) // stride + 1
    wo = (w + 2 * pad - kw) // stride + 1
    cols = []
    for i in range(kh):
        for j in range(kw):
            cols.append(xp[:, i:i + stride * ho:stride, j:j + stride * wo:stride, :])
    patches = jnp.stack(cols, axis=3)                  # (N, Ho, Wo, kh*kw, C)
    patches = jnp.transpose(patches, (0, 1, 2, 4, 3))  # (N, Ho, Wo, C, kh*kw)
    return patches.reshape(n * ho * wo, c * kh * kw), ho, wo


def reference_forward(params, x_nchw, d_k=D_K):
    x = jnp.transpose(x_nchw, (0, 2, 3, 1)).astype(jnp.float32)
    n = x.shape[0]
    for idx in (1, 2, 3):
        w = params[f"conv{idx}_w"]
        cout = w.shape[0]
        wflat = jnp.transpose(w.reshape(cout, -1))
        patches, ho, wo = im2col(x, 3, 3, 2, 1)
        y = patches @ wflat + params[f"conv{idx}_b"]
        scale = params[f"bn{idx}_gamma"] / jnp.sqrt(1.0 + EPS)
        y = jnp.maximum(y * scale + params[f"bn{idx}_beta"], 0.0)
        x = y.reshape(n, ho, wo, cout)
    feat = jnp.mean(x.reshape(n, -1, x.shape[-1]), axis=1)
    for u in (1, 2, 3, 4):
        q = jnp.maximum(feat @ params[f"u{u}_wq"].T + params[f"u{u}_bq"], 0.0)
        v = jnp.maximum(feat @ params[f"u{u}_wv"].T + params[f"u{u}_bv"], 0.0)
        k = jnp.maximum(feat @ params[f"u{u}_wk"].T + params[f"u{u}_bk"], 0.0)
        sa = q.T @ k
        sa_soft = jax.nn.softmax(sa, axis=0) / math.sqrt(d_k)
        att = v @ sa_soft
        feat = jnp.maximum(att @ params[f"u{u}_wf"].T + params[f"u{u}_bf"], 0.0)
    logits = feat @ params["fc_w"].T + params["fc_b"]
    return jax.nn.softmax(logits, axis=1)


if __name__ == "__main__":
    key = jax.random.PRNGKey(0)
    pkey, xkey = jax.random.split(key)
    params = init_params(pkey)
    prep = prepare_params(params)
    # CIFAR-like input (batch=2, 3, 32, 32): three stride-2 convs -> 4x4x48 -> GAP
    x = jax.random.normal(xkey, (2, 3, 32, 32), jnp.float32)

    out = attention_net_forward(prep, x)
    out = jax.block_until_ready(out)

    assert out.shape == (2, NO_CLASSES), out.shape
    np.testing.assert_allclose(np.asarray(jnp.sum(out, axis=1)), 1.0, atol=1e-3)
    ref = reference_forward(params, x)
    np.testing.assert_allclose(np.asarray(out), np.asarray(ref),
                               atol=5e-3, rtol=5e-3)
    print("KERNEL_OK")
</pallas_src>

<mosaic_0001>
module attributes {stable_mosaic.version = 11 : i64} {
  func.func @conv_s2d_bn_relu_kernel(%arg0: i32, %arg1: memref<1x17x204xf32, #tpu.memory_space<vmem>>, %arg2: memref<204x256xf32, #tpu.memory_space<vmem>>, %arg3: memref<204x256xf32, #tpu.memory_space<vmem>>, %arg4: memref<1x256xf32, #tpu.memory_space<vmem>>, %arg5: memref<1x256xf32, #tpu.memory_space<vmem>>, %arg6: memref<1x16x256xf32, #tpu.memory_space<vmem>>) attributes {dimension_semantics = [#tpu.dimension_semantics<parallel>], iteration_bounds = array<i64: 2>, scalar_prefetch = 0 : i64, scratch_operands = 0 : i64, tpu.core_type = #tpu.core_type<tc>, window_params = [{transform_indices = @transform_0, window_bounds = array<i64: 1, 17, 204>}, {pipeline_mode = #tpu.pipeline_mode<synchronous>, transform_indices = @transform_1, window_bounds = array<i64: 204, 256>}, {pipeline_mode = #tpu.pipeline_mode<synchronous>, transform_indices = @transform_2, window_bounds = array<i64: 204, 256>}, {pipeline_mode = #tpu.pipeline_mode<synchronous>, transform_indices = @transform_3, window_bounds = array<i64: 1, 256>}, {pipeline_mode = #tpu.pipeline_mode<synchronous>, transform_indices = @transform_4, window_bounds = array<i64: 1, 256>}, {transform_indices = @transform_5, window_bounds = array<i64: 1, 16, 256>}]} {
    %c0 = arith.constant 0 : index
    %c0_0 = arith.constant 0 : index
    %c0_1 = arith.constant 0 : index
    %0 = vector.load %arg1[%c0, %c0_0, %c0_1] : memref<1x17x204xf32, #tpu.memory_space<vmem>>, vector<1x17x204xf32>
    %1 = vector.shape_cast %0 : vector<1x17x204xf32> to vector<17x204xf32>
    %2 = vector.extract_strided_slice %1 {offsets = [0, 0], sizes = [16, 204], strides = [1, 1]} : vector<17x204xf32> to vector<16x204xf32>
    %c0_2 = arith.constant 0 : index
    %c0_3 = arith.constant 0 : index
    %3 = vector.load %arg2[%c0_2, %c0_3] : memref<204x256xf32, #tpu.memory_space<vmem>>, vector<204x256xf32>
    %cst = arith.constant dense<0.000000e+00> : vector<16x256xf32>
    %4 = tpu.matmul %2, %3, %cst {dimension_numbers = #tpu.dot_dimension_numbers<[1], [0], [0], [1], [0, 0, 1, 1], [], []>} : vector<16x204xf32>, vector<204x256xf32>, vector<16x256xf32> -> vector<16x256xf32>
    %5 = vector.extract_strided_slice %1 {offsets = [1, 0], sizes = [16, 204], strides = [1, 1]} : vector<17x204xf32> to vector<16x204xf32>
    %c0_4 = arith.constant 0 : index
    %c0_5 = arith.constant 0 : index
    %6 = vector.load %arg3[%c0_4, %c0_5] : memref<204x256xf32, #tpu.memory_space<vmem>>, vector<204x256xf32>
    %cst_6 = arith.constant dense<0.000000e+00> : vector<16x256xf32>
    %7 = tpu.matmul %5, %6, %cst_6 {dimension_numbers = #tpu.dot_dimension_numbers<[1], [0], [0], [1], [0, 0, 1, 1], [], []>} : vector<16x204xf32>, vector<204x256xf32>, vector<16x256xf32> -> vector<16x256xf32>
    %8 = arith.addf %4, %7 : vector<16x256xf32>
    %c0_7 = arith.constant 0 : index
    %c0_8 = arith.constant 0 : index
    %9 = vector.load %arg4[%c0_7, %c0_8] : memref<1x256xf32, #tpu.memory_space<vmem>>, vector<1x256xf32>
    %10 = vector.broadcast %9 : vector<1x256xf32> to vector<16x256xf32>
    %11 = arith.mulf %8, %10 : vector<16x256xf32>
    %c0_9 = arith.constant 0 : index
    %c0_10 = arith.constant 0 : index
    %12 = vector.load %arg5[%c0_9, %c0_10] : memref<1x256xf32, #tpu.memory_space<vmem>>, vector<1x256xf32>
    %13 = vector.broadcast %12 : vector<1x256xf32> to vector<16x256xf32>
    %14 = arith.addf %11, %13 : vector<16x256xf32>
    %cst_11 = arith.constant 0.000000e+00 : f32
    %15 = vector.broadcast %cst_11 : f32 to vector<16x256xf32>
    %16 = arith.maximumf %14, %15 : vector<16x256xf32>
    %c0_12 = arith.constant 0 : index
    %c0_13 = arith.constant 0 : index
    %c0_14 = arith.constant 0 : index
    %17 = vector.load %arg6[%c0_12, %c0_13, %c0_14] : memref<1x16x256xf32, #tpu.memory_space<vmem>>, vector<1x16x256xf32>
    %18 = vector.shape_cast %17 : vector<1x16x256xf32> to vector<16x256xf32>
    %19 = vector.shape_cast %16 : vector<16x256xf32> to vector<1x16x256xf32>
    tpu.vector_store %arg6[%c0_12, %c0_13, %c0_14], %19 {strides = array<i32>} : memref<1x16x256xf32, #tpu.memory_space<vmem>>, vector<1x16x256xf32>,
    return
  }
  func.func @transform_0(%arg0: i32) -> (i32, i32, i32) {
    %c0_i32 = arith.constant 0 : i32
    %c0_i32_0 = arith.constant 0 : i32
    %c0_i32_1 = arith.constant 0 : i32
    return %arg0, %c0_i32, %c0_i32_0 : i32, i32, i32
  }
  func.func @transform_1(%arg0: i32) -> (i32, i32) {
    %c0_i32 = arith.constant 0 : i32
    %c0_i32_0 = arith.constant 0 : i32
    %c0_i32_1 = arith.constant 0 : i32
    return %c0_i32, %c0_i32_0 : i32, i32
  }
  func.func @transform_2(%arg0: i32) -> (i32, i32) {
    %c0_i32 = arith.constant 0 : i32
    %c0_i32_0 = arith.constant 0 : i32
    %c0_i32_1 = arith.constant 0 : i32
    return %c0_i32, %c0_i32_0 : i32, i32
  }
  func.func @transform_3(%arg0: i32) -> (i32, i32) {
    %c0_i32 = arith.constant 0 : i32
    %c0_i32_0 = arith.constant 0 : i32
    %c0_i32_1 = arith.constant 0 : i32
    return %c0_i32, %c0_i32_0 : i32, i32
  }
  func.func @transform_4(%arg0: i32) -> (i32, i32) {
    %c0_i32 = arith.constant 0 : i32
    %c0_i32_0 = arith.constant 0 : i32
    %c0_i32_1 = arith.constant 0 : i32
    return %c0_i32, %c0_i32_0 : i32, i32
  }
  func.func @transform_5(%arg0: i32) -> (i32, i32, i32) {
    %c0_i32 = arith.constant 0 : i32
    %c0_i32_0 = arith.constant 0 : i32
    %c0_i32_1 = arith.constant 0 : i32
    return %arg0, %c0_i32, %c0_i32_0 : i32, i32, i32
  }
}

module attributes {stable_mosaic.version = 11 : i64} {
  func.func @conv_s2d_bn_relu_kernel(%arg0: i32, %arg1: memref<1x9x576xf32, #tpu.memory_space<vmem>>, %arg2: memref<576x256xf32, #tpu.memory_space<vmem>>, %arg3: memref<576x256xf32, #tpu.memory_space<vmem>>, %arg4: memref<1x256xf32, #tpu.memory_space<vmem>>, %arg5: memref<1x256xf32, #tpu.memory_space<vmem>>, %arg6: memref<1x8x256xf32, #tpu.memory_space<vmem>>) attributes {dimension_semantics = [#tpu.dimension_semantics<parallel>], iteration_bounds = array<i64: 2>, scalar_prefetch = 0 : i64, scratch_operands = 0 : i64, tpu.core_type = #tpu.core_type<tc>, window_params = [{transform_indices = @transform_0, window_bounds = array<i64: 1, 9, 576>}, {pipeline_mode = #tpu.pipeline_mode<synchronous>, transform_indices = @transform_1, window_bounds = array<i64: 576, 256>}, {pipeline_mode = #tpu.pipeline_mode<synchronous>, transform_indices = @transform_2, window_bounds = array<i64: 576, 256>}, {pipeline_mode = #tpu.pipeline_mode<synchronous>, transform_indices = @transform_3, window_bounds = array<i64: 1, 256>}, {pipeline_mode = #tpu.pipeline_mode<synchronous>, transform_indices = @transform_4, window_bounds = array<i64: 1, 256>}, {transform_indices = @transform_5, window_bounds = array<i64: 1, 8, 256>}]} {
    %c0 = arith.constant 0 : index
    %c0_0 = arith.constant 0 : index
    %c0_1 = arith.constant 0 : index
    %0 = vector.load %arg1[%c0, %c0_0, %c0_1] : memref<1x9x576xf32, #tpu.memory_space<vmem>>, vector<1x9x576xf32>
    %1 = vector.shape_cast %0 : vector<1x9x576xf32> to vector<9x576xf32>
    %2 = vector.extract_strided_slice %1 {offsets = [0, 0], sizes = [8, 576], strides = [1, 1]} : vector<9x576xf32> to vector<8x576xf32>
    %c0_2 = arith.constant 0 : index
    %c0_3 = arith.constant 0 : index
    %3 = vector.load %arg2[%c0_2, %c0_3] : memref<576x256xf32, #tpu.memory_space<vmem>>, vector<576x256xf32>
    %cst = arith.constant dense<0.000000e+00> : vector<8x256xf32>
    %4 = tpu.matmul %2, %3, %cst {dimension_numbers = #tpu.dot_dimension_numbers<[1], [0], [0], [1], [0, 0, 1, 1], [], []>} : vector<8x576xf32>, vector<576x256xf32>, vector<8x256xf32> -> vector<8x256xf32>
    %5 = vector.extract_strided_slice %1 {offsets = [1, 0], sizes = [8, 576], strides = [1, 1]} : vector<9x576xf32> to vector<8x576xf32>
    %c0_4 = arith.constant 0 : index
    %c0_5 = arith.constant 0 : index
    %6 = vector.load %arg3[%c0_4, %c0_5] : memref<576x256xf32, #tpu.memory_space<vmem>>, vector<576x256xf32>
    %cst_6 = arith.constant dense<0.000000e+00> : vector<8x256xf32>
    %7 = tpu.matmul %5, %6, %cst_6 {dimension_numbers = #tpu.dot_dimension_numbers<[1], [0], [0], [1], [0, 0, 1, 1], [], []>} : vector<8x576xf32>, vector<576x256xf32>, vector<8x256xf32> -> vector<8x256xf32>
    %8 = arith.addf %4, %7 : vector<8x256xf32>
    %c0_7 = arith.constant 0 : index
    %c0_8 = arith.constant 0 : index
    %9 = vector.load %arg4[%c0_7, %c0_8] : memref<1x256xf32, #tpu.memory_space<vmem>>, vector<1x256xf32>
    %10 = vector.broadcast %9 : vector<1x256xf32> to vector<8x256xf32>
    %11 = arith.mulf %8, %10 : vector<8x256xf32>
    %c0_9 = arith.constant 0 : index
    %c0_10 = arith.constant 0 : index
    %12 = vector.load %arg5[%c0_9, %c0_10] : memref<1x256xf32, #tpu.memory_space<vmem>>, vector<1x256xf32>
    %13 = vector.broadcast %12 : vector<1x256xf32> to vector<8x256xf32>
    %14 = arith.addf %11, %13 : vector<8x256xf32>
    %cst_11 = arith.constant 0.000000e+00 : f32
    %15 = vector.broadcast %cst_11 : f32 to vector<8x256xf32>
    %16 = arith.maximumf %14, %15 : vector<8x256xf32>
    %c0_12 = arith.constant 0 : index
    %c0_13 = arith.constant 0 : index
    %c0_14 = arith.constant 0 : index
    %17 = vector.load %arg6[%c0_12, %c0_13, %c0_14] : memref<1x8x256xf32, #tpu.memory_space<vmem>>, vector<1x8x256xf32>
    %18 = vector.shape_cast %17 : vector<1x8x256xf32> to vector<8x256xf32>
    %19 = vector.shape_cast %16 : vector<8x256xf32> to vector<1x8x256xf32>
    tpu.vector_store %arg6[%c0_12, %c0_13, %c0_14], %19 {strides = array<i32>} : memref<1x8x256xf32, #tpu.memory_space<vmem>>, vector<1x8x256xf32>,
    return
  }
  func.func @transform_0(%arg0: i32) -> (i32, i32, i32) {
    %c0_i32 = arith.constant 0 : i32
    %c0_i32_0 = arith.constant 0 : i32
    %c0_i32_1 = arith.constant 0 : i32
    return %arg0, %c0_i32, %c0_i32_0 : i32, i32, i32
  }
  func.func @transform_1(%arg0: i32) -> (i32, i32) {
    %c0_i32 = arith.constant 0 : i32
    %c0_i32_0 = arith.constant 0 : i32
    %c0_i32_1 = arith.constant 0 : i32
    return %c0_i32, %c0_i32_0 : i32, i32
  }
  func.func @transform_2(%arg0: i32) -> (i32, i32) {
    %c0_i32 = arith.constant 0 : i32
    %c0_i32_0 = arith.constant 0 : i32
    %c0_i32_1 = arith.constant 0 : i32
    return %c0_i32, %c0_i32_0 : i32, i32
  }
  func.func @transform_3(%arg0: i32) -> (i32, i32) {
    %c0_i32 = arith.constant 0 : i32
    %c0_i32_0 = arith.constant 0 : i32
    %c0_i32_1 = arith.constant 0 : i32
    return %c0_i32, %c0_i32_0 : i32, i32
  }
  func.func @transform_4(%arg0: i32) -> (i32, i32) {
    %c0_i32 = arith.constant 0 : i32
    %c0_i32_0 = arith.constant 0 : i32
    %c0_i32_1 = arith.constant 0 : i32
    return %c0_i32, %c0_i32_0 : i32, i32
  }
  func.func @transform_5(%arg0: i32) -> (i32, i32, i32) {
    %c0_i32 = arith.constant 0 : i32
    %c0_i32_0 = arith.constant 0 : i32
    %c0_i32_1 = arith.constant 0 : i32
    return %arg0, %c0_i32, %c0_i32_0 : i32, i32, i32
  }
}

module attributes {stable_mosaic.version = 11 : i64} {
  func.func @conv_s2d_bn_relu_gap_kernel(%arg0: i32, %arg1: memref<1x5x640xf32, #tpu.memory_space<vmem>>, %arg2: memref<640x192xf32, #tpu.memory_space<vmem>>, %arg3: memref<640x192xf32, #tpu.memory_space<vmem>>, %arg4: memref<1x192xf32, #tpu.memory_space<vmem>>, %arg5: memref<1x192xf32, #tpu.memory_space<vmem>>, %arg6: memref<192x48xf32, #tpu.memory_space<vmem>>, %arg7: memref<1x1x48xf32, #tpu.memory_space<vmem>>) attributes {dimension_semantics = [#tpu.dimension_semantics<parallel>], iteration_bounds = array<i64: 2>, scalar_prefetch = 0 : i64, scratch_operands = 0 : i64, tpu.core_type = #tpu.core_type<tc>, window_params = [{transform_indices = @transform_0, window_bounds = array<i64: 1, 5, 640>}, {pipeline_mode = #tpu.pipeline_mode<synchronous>, transform_indices = @transform_1, window_bounds = array<i64: 640, 192>}, {pipeline_mode = #tpu.pipeline_mode<synchronous>, transform_indices = @transform_2, window_bounds = array<i64: 640, 192>}, {pipeline_mode = #tpu.pipeline_mode<synchronous>, transform_indices = @transform_3, window_bounds = array<i64: 1, 192>}, {pipeline_mode = #tpu.pipeline_mode<synchronous>, transform_indices = @transform_4, window_bounds = array<i64: 1, 192>}, {pipeline_mode = #tpu.pipeline_mode<synchronous>, transform_indices = @transform_5, window_bounds = array<i64: 192, 48>}, {transform_indices = @transform_6, window_bounds = array<i64: 1, 1, 48>}]} {
    %c0 = arith.constant 0 : index
    %c0_0 = arith.constant 0 : index
    %c0_1 = arith.constant 0 : index
    %0 = vector.load %arg1[%c0, %c0_0, %c0_1] : memref<1x5x640xf32, #tpu.memory_space<vmem>>, vector<1x5x640xf32>
    %1 = vector.shape_cast %0 : vector<1x5x640xf32> to vector<5x640xf32>
    %2 = vector.extract_strided_slice %1 {offsets = [0, 0], sizes = [4, 640], strides = [1, 1]} : vector<5x640xf32> to vector<4x640xf32>
    %c0_2 = arith.constant 0 : index
    %c0_3 = arith.constant 0 : index
    %3 = vector.load %arg2[%c0_2, %c0_3] : memref<640x192xf32, #tpu.memory_space<vmem>>, vector<640x192xf32>
    %cst = arith.constant dense<0.000000e+00> : vector<4x192xf32>
    %4 = tpu.matmul %2, %3, %cst {dimension_numbers = #tpu.dot_dimension_numbers<[1], [0], [0], [1], [0, 0, 1, 1], [], []>} : vector<4x640xf32>, vector<640x192xf32>, vector<4x192xf32> -> vector<4x192xf32>
    %5 = vector.extract_strided_slice %1 {offsets = [1, 0], sizes = [4, 640], strides = [1, 1]} : vector<5x640xf32> to vector<4x640xf32>
    %c0_4 = arith.constant 0 : index
    %c0_5 = arith.constant 0 : index
    %6 = vector.load %arg3[%c0_4, %c0_5] : memref<640x192xf32, #tpu.memory_space<vmem>>, vector<640x192xf32>
    %cst_6 = arith.constant dense<0.000000e+00> : vector<4x192xf32>
    %7 = tpu.matmul %5, %6, %cst_6 {dimension_numbers = #tpu.dot_dimension_numbers<[1], [0], [0], [1], [0, 0, 1, 1], [], []>} : vector<4x640xf32>, vector<640x192xf32>, vector<4x192xf32> -> vector<4x192xf32>
    %8 = arith.addf %4, %7 : vector<4x192xf32>
    %c0_7 = arith.constant 0 : index
    %c0_8 = arith.constant 0 : index
    %9 = vector.load %arg4[%c0_7, %c0_8] : memref<1x192xf32, #tpu.memory_space<vmem>>, vector<1x192xf32>
    %10 = vector.broadcast %9 : vector<1x192xf32> to vector<4x192xf32>
    %11 = arith.mulf %8, %10 : vector<4x192xf32>
    %c0_9 = arith.constant 0 : index
    %c0_10 = arith.constant 0 : index
    %12 = vector.load %arg5[%c0_9, %c0_10] : memref<1x192xf32, #tpu.memory_space<vmem>>, vector<1x192xf32>
    %13 = vector.broadcast %12 : vector<1x192xf32> to vector<4x192xf32>
    %14 = arith.addf %11, %13 : vector<4x192xf32>
    %cst_11 = arith.constant 0.000000e+00 : f32
    %15 = vector.broadcast %cst_11 : f32 to vector<4x192xf32>
    %16 = arith.maximumf %14, %15 : vector<4x192xf32>
    %cst_12 = arith.constant dense<0.000000e+00> : vector<192xf32>
    %17 = vector.multi_reduction <add>, %16, %cst_12 [0] : vector<4x192xf32> to vector<192xf32>
    %18 = vector.shape_cast %17 : vector<192xf32> to vector<1x192xf32>
    %c0_13 = arith.constant 0 : index
    %c0_14 = arith.constant 0 : index
    %19 = vector.load %arg6[%c0_13, %c0_14] : memref<192x48xf32, #tpu.memory_space<vmem>>, vector<192x48xf32>
    %cst_15 = arith.constant dense<0.000000e+00> : vector<1x48xf32>
    %20 = tpu.matmul %18, %19, %cst_15 {dimension_numbers = #tpu.dot_dimension_numbers<[1], [0], [0], [1], [0, 0, 1, 1], [], []>} : vector<1x192xf32>, vector<192x48xf32>, vector<1x48xf32> -> vector<1x48xf32>
    %c0_16 = arith.constant 0 : index
    %c0_17 = arith.constant 0 : index
    %c0_18 = arith.constant 0 : index
    %21 = vector.load %arg7[%c0_16, %c0_17, %c0_18] : memref<1x1x48xf32, #tpu.memory_space<vmem>>, vector<1x1x48xf32>
    %22 = vector.shape_cast %21 : vector<1x1x48xf32> to vector<1x48xf32>
    %23 = vector.shape_cast %20 : vector<1x48xf32> to vector<1x1x48xf32>
    tpu.vector_store %arg7[%c0_16, %c0_17, %c0_18], %23 {strides = array<i32>} : memref<1x1x48xf32, #tpu.memory_space<vmem>>, vector<1x1x48xf32>,
    return
  }
  func.func @transform_0(%arg0: i32) -> (i32, i32, i32) {
    %c0_i32 = arith.constant 0 : i32
    %c0_i32_0 = arith.constant 0 : i32
    %c0_i32_1 = arith.constant 0 : i32
    return %arg0, %c0_i32, %c0_i32_0 : i32, i32, i32
  }
  func.func @transform_1(%arg0: i32) -> (i32, i32) {
    %c0_i32 = arith.constant 0 : i32
    %c0_i32_0 = arith.constant 0 : i32
    %c0_i32_1 = arith.constant 0 : i32
    return %c0_i32, %c0_i32_0 : i32, i32
  }
  func.func @transform_2(%arg0: i32) -> (i32, i32) {
    %c0_i32 = arith.constant 0 : i32
    %c0_i32_0 = arith.constant 0 : i32
    %c0_i32_1 = arith.constant 0 : i32
    return %c0_i32, %c0_i32_0 : i32, i32
  }
  func.func @transform_3(%arg0: i32) -> (i32, i32) {
    %c0_i32 = arith.constant 0 : i32
    %c0_i32_0 = arith.constant 0 : i32
    %c0_i32_1 = arith.constant 0 : i32
    return %c0_i32, %c0_i32_0 : i32, i32
  }
  func.func @transform_4(%arg0: i32) -> (i32, i32) {
    %c0_i32 = arith.constant 0 : i32
    %c0_i32_0 = arith.constant 0 : i32
    %c0_i32_1 = arith.constant 0 : i32
    return %c0_i32, %c0_i32_0 : i32, i32
  }
  func.func @transform_5(%arg0: i32) -> (i32, i32) {
    %c0_i32 = arith.constant 0 : i32
    %c0_i32_0 = arith.constant 0 : i32
    %c0_i32_1 = arith.constant 0 : i32
    return %c0_i32, %c0_i32_0 : i32, i32
  }
  func.func @transform_6(%arg0: i32) -> (i32, i32, i32) {
    %c0_i32 = arith.constant 0 : i32
    %c0_i32_0 = arith.constant 0 : i32
    %c0_i32_1 = arith.constant 0 : i32
    return %arg0, %c0_i32, %c0_i32_0 : i32, i32, i32
  }
}

module attributes {stable_mosaic.version = 11 : i64} {
  func.func @attention_stack_kernel(%arg0: memref<2x48xf32, #tpu.memory_space<vmem>>, %arg1: memref<4x48x24xf32, #tpu.memory_space<vmem>>, %arg2: memref<4x1x24xf32, #tpu.memory_space<vmem>>, %arg3: memref<4x8x48xf32, #tpu.memory_space<vmem>>, %arg4: memref<4x1x48xf32, #tpu.memory_space<vmem>>, %arg5: memref<48x10xf32, #tpu.memory_space<vmem>>, %arg6: memref<1x10xf32, #tpu.memory_space<vmem>>, %arg7: memref<2x10xf32, #tpu.memory_space<vmem>>) attributes {dimension_semantics = [], scalar_prefetch = 0 : i64, scratch_operands = 0 : i64, tpu.core_type = #tpu.core_type<tc>} {
    %c0 = arith.constant 0 : index
    %c0_0 = arith.constant 0 : index
    %0 = vector.load %arg0[%c0, %c0_0] : memref<2x48xf32, #tpu.memory_space<vmem>>, vector<2x48xf32>
    %c0_1 = arith.constant 0 : index
    %c0_2 = arith.constant 0 : index
    %c0_3 = arith.constant 0 : index
    %1 = vector.load %arg1[%c0_1, %c0_2, %c0_3] : memref<4x48x24xf32, #tpu.memory_space<vmem>>, vector<1x48x24xf32>
    %2 = vector.shape_cast %1 : vector<1x48x24xf32> to vector<48x24xf32>
    %cst = arith.constant dense<0.000000e+00> : vector<2x24xf32>
    %3 = tpu.matmul %0, %2, %cst {dimension_numbers = #tpu.dot_dimension_numbers<[1], [0], [0], [1], [0, 0, 1, 1], [], []>} : vector<2x48xf32>, vector<48x24xf32>, vector<2x24xf32> -> vector<2x24xf32>
    %c0_4 = arith.constant 0 : index
    %c0_5 = arith.constant 0 : index
    %c0_6 = arith.constant 0 : index
    %4 = vector.load %arg2[%c0_4, %c0_5, %c0_6] : memref<4x1x24xf32, #tpu.memory_space<vmem>>, vector<1x1x24xf32>
    %5 = vector.shape_cast %4 : vector<1x1x24xf32> to vector<1x24xf32>
    %6 = vector.broadcast %5 : vector<1x24xf32> to vector<2x24xf32>
    %7 = arith.addf %3, %6 : vector<2x24xf32>
    %cst_7 = arith.constant 0.000000e+00 : f32
    %8 = vector.broadcast %cst_7 : f32 to vector<2x24xf32>
    %9 = arith.maximumf %7, %8 : vector<2x24xf32>
    %10 = vector.extract_strided_slice %9 {offsets = [0, 0], sizes = [2, 8], strides = [1, 1]} : vector<2x24xf32> to vector<2x8xf32>
    %11 = vector.extract_strided_slice %9 {offsets = [0, 8], sizes = [2, 8], strides = [1, 1]} : vector<2x24xf32> to vector<2x8xf32>
    %12 = vector.extract_strided_slice %9 {offsets = [0, 16], sizes = [2, 8], strides = [1, 1]} : vector<2x24xf32> to vector<2x8xf32>
    %cst_8 = arith.constant dense<0.000000e+00> : vector<8x8xf32>
    %13 = tpu.matmul %10, %11, %cst_8 {dimension_numbers = #tpu.dot_dimension_numbers<[0], [0], [1], [1], [0, 1, 1, 1], [], []>} : vector<2x8xf32>, vector<2x8xf32>, vector<8x8xf32> -> vector<8x8xf32>
    %cst_9 = arith.constant dense<0xFF800000> : vector<8xf32>
    %14 = vector.multi_reduction <maximumf>, %13, %cst_9 [0] : vector<8x8xf32> to vector<8xf32>
    %15 = vector.shape_cast %14 : vector<8xf32> to vector<1x8xf32>
    %16 = vector.broadcast %15 : vector<1x8xf32> to vector<8x8xf32>
    %17 = arith.subf %13, %16 : vector<8x8xf32>
    %18 = math.exp %17 : vector<8x8xf32>
    %cst_10 = arith.constant dense<0.000000e+00> : vector<8xf32>
    %19 = vector.multi_reduction <add>, %18, %cst_10 [0] : vector<8x8xf32> to vector<8xf32>
    %20 = vector.shape_cast %19 : vector<8xf32> to vector<1x8xf32>
    %21 = tpu.reciprocal %20 {approx = true} : vector<1x8xf32> -> vector<1x8xf32>
    %cst_11 = arith.constant 0.353553385 : f32
    %22 = vector.broadcast %cst_11 : f32 to vector<1x8xf32>
    %23 = arith.mulf %21, %22 : vector<1x8xf32>
    %24 = vector.broadcast %23 : vector<1x8xf32> to vector<8x8xf32>
    %25 = arith.mulf %18, %24 : vector<8x8xf32>
    %cst_12 = arith.constant dense<0.000000e+00> : vector<2x8xf32>
    %26 = tpu.matmul %12, %25, %cst_12 {dimension_numbers = #tpu.dot_dimension_numbers<[1], [0], [0], [1], [0, 0, 1, 1], [], []>} : vector<2x8xf32>, vector<8x8xf32>, vector<2x8xf32> -> vector<2x8xf32>
    %c0_13 = arith.constant 0 : index
    %c0_14 = arith.constant 0 : index
    %c0_15 = arith.constant 0 : index
    %27 = vector.load %arg3[%c0_13, %c0_14, %c0_15] : memref<4x8x48xf32, #tpu.memory_space<vmem>>, vector<1x8x48xf32>
    %28 = vector.shape_cast %27 : vector<1x8x48xf32> to vector<8x48xf32>
    %cst_16 = arith.constant dense<0.000000e+00> : vector<2x48xf32>
    %29 = tpu.matmul %26, %28, %cst_16 {dimension_numbers = #tpu.dot_dimension_numbers<[1], [0], [0], [1], [0, 0, 1, 1], [], []>} : vector<2x8xf32>, vector<8x48xf32>, vector<2x48xf32> -> vector<2x48xf32>
    %c0_17 = arith.constant 0 : index
    %c0_18 = arith.constant 0 : index
    %c0_19 = arith.constant 0 : index
    %30 = vector.load %arg4[%c0_17, %c0_18, %c0_19] : memref<4x1x48xf32, #tpu.memory_space<vmem>>, vector<1x1x48xf32>
    %31 = vector.shape_cast %30 : vector<1x1x48xf32> to vector<1x48xf32>
    %32 = vector.broadcast %31 : vector<1x48xf32> to vector<2x48xf32>
    %33 = arith.addf %29, %32 : vector<2x48xf32>
    %cst_20 = arith.constant 0.000000e+00 : f32
    %34 = vector.broadcast %cst_20 : f32 to vector<2x48xf32>
    %35 = arith.maximumf %33, %34 : vector<2x48xf32>
    %c1 = arith.constant 1 : index
    %c0_21 = arith.constant 0 : index
    %c0_22 = arith.constant 0 : index
    %36 = vector.load %arg1[%c1, %c0_21, %c0_22] : memref<4x48x24xf32, #tpu.memory_space<vmem>>, vector<1x48x24xf32>
    %37 = vector.shape_cast %36 : vector<1x48x24xf32> to vector<48x24xf32>
    %cst_23 = arith.constant dense<0.000000e+00> : vector<2x24xf32>
    %38 = tpu.matmul %35, %37, %cst_23 {dimension_numbers = #tpu.dot_dimension_numbers<[1], [0], [0], [1], [0, 0, 1, 1], [], []>} : vector<2x48xf32>, vector<48x24xf32>, vector<2x24xf32> -> vector<2x24xf32>
    %c1_24 = arith.constant 1 : index
    %c0_25 = arith.constant 0 : index
    %c0_26 = arith.constant 0 : index
    %39 = vector.load %arg2[%c1_24, %c0_25, %c0_26] : memref<4x1x24xf32, #tpu.memory_space<vmem>>, vector<1x1x24xf32>
    %40 = vector.shape_cast %39 : vector<1x1x24xf32> to vector<1x24xf32>
    %41 = vector.broadcast %40 : vector<1x24xf32> to vector<2x24xf32>
    %42 = arith.addf %38, %41 : vector<2x24xf32>
    %cst_27 = arith.constant 0.000000e+00 : f32
    %43 = vector.broadcast %cst_27 : f32 to vector<2x24xf32>
    %44 = arith.maximumf %42, %43 : vector<2x24xf32>
    %45 = vector.extract_strided_slice %44 {offsets = [0, 0], sizes = [2, 8], strides = [1, 1]} : vector<2x24xf32> to vector<2x8xf32>
    %46 = vector.extract_strided_slice %44 {offsets = [0, 8], sizes = [2, 8], strides = [1, 1]} : vector<2x24xf32> to vector<2x8xf32>
    %47 = vector.extract_strided_slice %44 {offsets = [0, 16], sizes = [2, 8], strides = [1, 1]} : vector<2x24xf32> to vector<2x8xf32>
    %cst_28 = arith.constant dense<0.000000e+00> : vector<8x8xf32>
    %48 = tpu.matmul %45, %46, %cst_28 {dimension_numbers = #tpu.dot_dimension_numbers<[0], [0], [1], [1], [0, 1, 1, 1], [], []>} : vector<2x8xf32>, vector<2x8xf32>, vector<8x8xf32> -> vector<8x8xf32>
    %cst_29 = arith.constant dense<0xFF800000> : vector<8xf32>
    %49 = vector.multi_reduction <maximumf>, %48, %cst_29 [0] : vector<8x8xf32> to vector<8xf32>
    %50 = vector.shape_cast %49 : vector<8xf32> to vector<1x8xf32>
    %51 = vector.broadcast %50 : vector<1x8xf32> to vector<8x8xf32>
    %52 = arith.subf %48, %51 : vector<8x8xf32>
    %53 = math.exp %52 : vector<8x8xf32>
    %cst_30 = arith.constant dense<0.000000e+00> : vector<8xf32>
    %54 = vector.multi_reduction <add>, %53, %cst_30 [0] : vector<8x8xf32> to vector<8xf32>
    %55 = vector.shape_cast %54 : vector<8xf32> to vector<1x8xf32>
    %56 = tpu.reciprocal %55 {approx = true} : vector<1x8xf32> -> vector<1x8xf32>
    %cst_31 = arith.constant 0.353553385 : f32
    %57 = vector.broadcast %cst_31 : f32 to vector<1x8xf32>
    %58 = arith.mulf %56, %57 : vector<1x8xf32>
    %59 = vector.broadcast %58 : vector<1x8xf32> to vector<8x8xf32>
    %60 = arith.mulf %53, %59 : vector<8x8xf32>
    %cst_32 = arith.constant dense<0.000000e+00> : vector<2x8xf32>
    %61 = tpu.matmul %47, %60, %cst_32 {dimension_numbers = #tpu.dot_dimension_numbers<[1], [0], [0], [1], [0, 0, 1, 1], [], []>} : vector<2x8xf32>, vector<8x8xf32>, vector<2x8xf32> -> vector<2x8xf32>
    %c1_33 = arith.constant 1 : index
    %c0_34 = arith.constant 0 : index
    %c0_35 = arith.constant 0 : index
    %62 = vector.load %arg3[%c1_33, %c0_34, %c0_35] : memref<4x8x48xf32, #tpu.memory_space<vmem>>, vector<1x8x48xf32>
    %63 = vector.shape_cast %62 : vector<1x8x48xf32> to vector<8x48xf32>
    %cst_36 = arith.constant dense<0.000000e+00> : vector<2x48xf32>
    %64 = tpu.matmul %61, %63, %cst_36 {dimension_numbers = #tpu.dot_dimension_numbers<[1], [0], [0], [1], [0, 0, 1, 1], [], []>} : vector<2x8xf32>, vector<8x48xf32>, vector<2x48xf32> -> vector<2x48xf32>
    %c1_37 = arith.constant 1 : index
    %c0_38 = arith.constant 0 : index
    %c0_39 = arith.constant 0 : index
    %65 = vector.load %arg4[%c1_37, %c0_38, %c0_39] : memref<4x1x48xf32, #tpu.memory_space<vmem>>, vector<1x1x48xf32>
    %66 = vector.shape_cast %65 : vector<1x1x48xf32> to vector<1x48xf32>
    %67 = vector.broadcast %66 : vector<1x48xf32> to vector<2x48xf32>
    %68 = arith.addf %64, %67 : vector<2x48xf32>
    %cst_40 = arith.constant 0.000000e+00 : f32
    %69 = vector.broadcast %cst_40 : f32 to vector<2x48xf32>
    %70 = arith.maximumf %68, %69 : vector<2x48xf32>
    %c2 = arith.constant 2 : index
    %c0_41 = arith.constant 0 : index
    %c0_42 = arith.constant 0 : index
    %71 = vector.load %arg1[%c2, %c0_41, %c0_42] : memref<4x48x24xf32, #tpu.memory_space<vmem>>, vector<1x48x24xf32>
    %72 = vector.shape_cast %71 : vector<1x48x24xf32> to vector<48x24xf32>
    %cst_43 = arith.constant dense<0.000000e+00> : vector<2x24xf32>
    %73 = tpu.matmul %70, %72, %cst_43 {dimension_numbers = #tpu.dot_dimension_numbers<[1], [0], [0], [1], [0, 0, 1, 1], [], []>} : vector<2x48xf32>, vector<48x24xf32>, vector<2x24xf32> -> vector<2x24xf32>
    %c2_44 = arith.constant 2 : index
    %c0_45 = arith.constant 0 : index
    %c0_46 = arith.constant 0 : index
    %74 = vector.load %arg2[%c2_44, %c0_45, %c0_46] : memref<4x1x24xf32, #tpu.memory_space<vmem>>, vector<1x1x24xf32>
    %75 = vector.shape_cast %74 : vector<1x1x24xf32> to vector<1x24xf32>
    %76 = vector.broadcast %75 : vector<1x24xf32> to vector<2x24xf32>
    %77 = arith.addf %73, %76 : vector<2x24xf32>
    %cst_47 = arith.constant 0.000000e+00 : f32
    %78 = vector.broadcast %cst_47 : f32 to vector<2x24xf32>
    %79 = arith.maximumf %77, %78 : vector<2x24xf32>
    %80 = vector.extract_strided_slice %79 {offsets = [0, 0], sizes = [2, 8], strides = [1, 1]} : vector<2x24xf32> to vector<2x8xf32>
    %81 = vector.extract_strided_slice %79 {offsets = [0, 8], sizes = [2, 8], strides = [1, 1]} : vector<2x24xf32> to vector<2x8xf32>
    %82 = vector.extract_strided_slice %79 {offsets = [0, 16], sizes = [2, 8], strides = [1, 1]} : vector<2x24xf32> to vector<2x8xf32>
    %cst_48 = arith.constant dense<0.000000e+00> : vector<8x8xf32>
    %83 = tpu.matmul %80, %81, %cst_48 {dimension_numbers = #tpu.dot_dimension_numbers<[0], [0], [1], [1], [0, 1, 1, 1], [], []>} : vector<2x8xf32>, vector<2x8xf32>, vector<8x8xf32> -> vector<8x8xf32>
    %cst_49 = arith.constant dense<0xFF800000> : vector<8xf32>
    %84 = vector.multi_reduction <maximumf>, %83, %cst_49 [0] : vector<8x8xf32> to vector<8xf32>
    %85 = vector.shape_cast %84 : vector<8xf32> to vector<1x8xf32>
    %86 = vector.broadcast %85 : vector<1x8xf32> to vector<8x8xf32>
    %87 = arith.subf %83, %86 : vector<8x8xf32>
    %88 = math.exp %87 : vector<8x8xf32>
    %cst_50 = arith.constant dense<0.000000e+00> : vector<8xf32>
    %89 = vector.multi_reduction <add>, %88, %cst_50 [0] : vector<8x8xf32> to vector<8xf32>
    %90 = vector.shape_cast %89 : vector<8xf32> to vector<1x8xf32>
    %91 = tpu.reciprocal %90 {approx = true} : vector<1x8xf32> -> vector<1x8xf32>
    %cst_51 = arith.constant 0.353553385 : f32
    %92 = vector.broadcast %cst_51 : f32 to vector<1x8xf32>
    %93 = arith.mulf %91, %92 : vector<1x8xf32>
    %94 = vector.broadcast %93 : vector<1x8xf32> to vector<8x8xf32>
    %95 = arith.mulf %88, %94 : vector<8x8xf32>
    %cst_52 = arith.constant dense<0.000000e+00> : vector<2x8xf32>
    %96 = tpu.matmul %82, %95, %cst_52 {dimension_numbers = #tpu.dot_dimension_numbers<[1], [0], [0], [1], [0, 0, 1, 1], [], []>} : vector<2x8xf32>, vector<8x8xf32>, vector<2x8xf32> -> vector<2x8xf32>
    %c2_53 = arith.constant 2 : index
    %c0_54 = arith.constant 0 : index
    %c0_55 = arith.constant 0 : index
    %97 = vector.load %arg3[%c2_53, %c0_54, %c0_55] : memref<4x8x48xf32, #tpu.memory_space<vmem>>, vector<1x8x48xf32>
    %98 = vector.shape_cast %97 : vector<1x8x48xf32> to vector<8x48xf32>
    %cst_56 = arith.constant dense<0.000000e+00> : vector<2x48xf32>
    %99 = tpu.matmul %96, %98, %cst_56 {dimension_numbers = #tpu.dot_dimension_numbers<[1], [0], [0], [1], [0, 0, 1, 1], [], []>} : vector<2x8xf32>, vector<8x48xf32>, vector<2x48xf32> -> vector<2x48xf32>
    %c2_57 = arith.constant 2 : index
    %c0_58 = arith.constant 0 : index
    %c0_59 = arith.constant 0 : index
    %100 = vector.load %arg4[%c2_57, %c0_58, %c0_59] : memref<4x1x48xf32, #tpu.memory_space<vmem>>, vector<1x1x48xf32>
    %101 = vector.shape_cast %100 : vector<1x1x48xf32> to vector<1x48xf32>
    %102 = vector.broadcast %101 : vector<1x48xf32> to vector<2x48xf32>
    %103 = arith.addf %99, %102 : vector<2x48xf32>
    %cst_60 = arith.constant 0.000000e+00 : f32
    %104 = vector.broadcast %cst_60 : f32 to vector<2x48xf32>
    %105 = arith.maximumf %103, %104 : vector<2x48xf32>
    %c3 = arith.constant 3 : index
    %c0_61 = arith.constant 0 : index
    %c0_62 = arith.constant 0 : index
    %106 = vector.load %arg1[%c3, %c0_61, %c0_62] : memref<4x48x24xf32, #tpu.memory_space<vmem>>, vector<1x48x24xf32>
    %107 = vector.shape_cast %106 : vector<1x48x24xf32> to vector<48x24xf32>
    %cst_63 = arith.constant dense<0.000000e+00> : vector<2x24xf32>
    %108 = tpu.matmul %105, %107, %cst_63 {dimension_numbers = #tpu.dot_dimension_numbers<[1], [0], [0], [1], [0, 0, 1, 1], [], []>} : vector<2x48xf32>, vector<48x24xf32>, vector<2x24xf32> -> vector<2x24xf32>
    %c3_64 = arith.constant 3 : index
    %c0_65 = arith.constant 0 : index
    %c0_66 = arith.constant 0 : index
    %109 = vector.load %arg2[%c3_64, %c0_65, %c0_66] : memref<4x1x24xf32, #tpu.memory_space<vmem>>, vector<1x1x24xf32>
    %110 = vector.shape_cast %109 : vector<1x1x24xf32> to vector<1x24xf32>
    %111 = vector.broadcast %110 : vector<1x24xf32> to vector<2x24xf32>
    %112 = arith.addf %108, %111 : vector<2x24xf32>
    %cst_67 = arith.constant 0.000000e+00 : f32
    %113 = vector.broadcast %cst_67 : f32 to vector<2x24xf32>
    %114 = arith.maximumf %112, %113 : vector<2x24xf32>
    %115 = vector.extract_strided_slice %114 {offsets = [0, 0], sizes = [2, 8], strides = [1, 1]} : vector<2x24xf32> to vector<2x8xf32>
    %116 = vector.extract_strided_slice %114 {offsets = [0, 8], sizes = [2, 8], strides = [1, 1]} : vector<2x24xf32> to vector<2x8xf32>
    %117 = vector.extract_strided_slice %114 {offsets = [0, 16], sizes = [2, 8], strides = [1, 1]} : vector<2x24xf32> to vector<2x8xf32>
    %cst_68 = arith.constant dense<0.000000e+00> : vector<8x8xf32>
    %118 = tpu.matmul %115, %116, %cst_68 {dimension_numbers = #tpu.dot_dimension_numbers<[0], [0], [1], [1], [0, 1, 1, 1], [], []>} : vector<2x8xf32>, vector<2x8xf32>, vector<8x8xf32> -> vector<8x8xf32>
    %cst_69 = arith.constant dense<0xFF800000> : vector<8xf32>
    %119 = vector.multi_reduction <maximumf>, %118, %cst_69 [0] : vector<8x8xf32> to vector<8xf32>
    %120 = vector.shape_cast %119 : vector<8xf32> to vector<1x8xf32>
    %121 = vector.broadcast %120 : vector<1x8xf32> to vector<8x8xf32>
    %122 = arith.subf %118, %121 : vector<8x8xf32>
    %123 = math.exp %122 : vector<8x8xf32>
    %cst_70 = arith.constant dense<0.000000e+00> : vector<8xf32>
    %124 = vector.multi_reduction <add>, %123, %cst_70 [0] : vector<8x8xf32> to vector<8xf32>
    %125 = vector.shape_cast %124 : vector<8xf32> to vector<1x8xf32>
    %126 = tpu.reciprocal %125 {approx = true} : vector<1x8xf32> -> vector<1x8xf32>
    %cst_71 = arith.constant 0.353553385 : f32
    %127 = vector.broadcast %cst_71 : f32 to vector<1x8xf32>
    %128 = arith.mulf %126, %127 : vector<1x8xf32>
    %129 = vector.broadcast %128 : vector<1x8xf32> to vector<8x8xf32>
    %130 = arith.mulf %123, %129 : vector<8x8xf32>
    %cst_72 = arith.constant dense<0.000000e+00> : vector<2x8xf32>
    %131 = tpu.matmul %117, %130, %cst_72 {dimension_numbers = #tpu.dot_dimension_numbers<[1], [0], [0], [1], [0, 0, 1, 1], [], []>} : vector<2x8xf32>, vector<8x8xf32>, vector<2x8xf32> -> vector<2x8xf32>
    %c3_73 = arith.constant 3 : index
    %c0_74 = arith.constant 0 : index
    %c0_75 = arith.constant 0 : index
    %132 = vector.load %arg3[%c3_73, %c0_74, %c0_75] : memref<4x8x48xf32, #tpu.memory_space<vmem>>, vector<1x8x48xf32>
    %133 = vector.shape_cast %132 : vector<1x8x48xf32> to vector<8x48xf32>
    %cst_76 = arith.constant dense<0.000000e+00> : vector<2x48xf32>
    %134 = tpu.matmul %131, %133, %cst_76 {dimension_numbers = #tpu.dot_dimension_numbers<[1], [0], [0], [1], [0, 0, 1, 1], [], []>} : vector<2x8xf32>, vector<8x48xf32>, vector<2x48xf32> -> vector<2x48xf32>
    %c3_77 = arith.constant 3 : index
    %c0_78 = arith.constant 0 : index
    %c0_79 = arith.constant 0 : index
    %135 = vector.load %arg4[%c3_77, %c0_78, %c0_79] : memref<4x1x48xf32, #tpu.memory_space<vmem>>, vector<1x1x48xf32>
    %136 = vector.shape_cast %135 : vector<1x1x48xf32> to vector<1x48xf32>
    %137 = vector.broadcast %136 : vector<1x48xf32> to vector<2x48xf32>
    %138 = arith.addf %134, %137 : vector<2x48xf32>
    %cst_80 = arith.constant 0.000000e+00 : f32
    %139 = vector.broadcast %cst_80 : f32 to vector<2x48xf32>
    %140 = arith.maximumf %138, %139 : vector<2x48xf32>
    %c0_81 = arith.constant 0 : index
    %c0_82 = arith.constant 0 : index
    %141 = vector.load %arg5[%c0_81, %c0_82] : memref<48x10xf32, #tpu.memory_space<vmem>>, vector<48x10xf32>
    %cst_83 = arith.constant dense<0.000000e+00> : vector<2x10xf32>
    %142 = tpu.matmul %140, %141, %cst_83 {dimension_numbers = #tpu.dot_dimension_numbers<[1], [0], [0], [1], [0, 0, 1, 1], [], []>} : vector<2x48xf32>, vector<48x10xf32>, vector<2x10xf32> -> vector<2x10xf32>
    %c0_84 = arith.constant 0 : index
    %c0_85 = arith.constant 0 : index
    %143 = vector.load %arg6[%c0_84, %c0_85] : memref<1x10xf32, #tpu.memory_space<vmem>>, vector<1x10xf32>
    %144 = vector.broadcast %143 : vector<1x10xf32> to vector<2x10xf32>
    %145 = arith.addf %142, %144 : vector<2x10xf32>
    %cst_86 = arith.constant dense<0xFF800000> : vector<2xf32>
    %146 = vector.multi_reduction <maximumf>, %145, %cst_86 [1] : vector<2x10xf32> to vector<2xf32>
    %147 = vector.shape_cast %146 : vector<2xf32> to vector<2x1xf32>
    %148 = vector.broadcast %147 : vector<2x1xf32> to vector<2x10xf32>
    %149 = arith.subf %145, %148 : vector<2x10xf32>
    %150 = math.exp %149 : vector<2x10xf32>
    %cst_87 = arith.constant dense<0.000000e+00> : vector<2xf32>
    %151 = vector.multi_reduction <add>, %150, %cst_87 [1] : vector<2x10xf32> to vector<2xf32>
    %152 = vector.shape_cast %151 : vector<2xf32> to vector<2x1xf32>
    %153 = vector.broadcast %152 : vector<2x1xf32> to vector<2x10xf32>
    %154 = arith.divf %150, %153 : vector<2x10xf32>
    %c0_88 = arith.constant 0 : index
    %c0_89 = arith.constant 0 : index
    %155 = vector.load %arg7[%c0_88, %c0_89] : memref<2x10xf32, #tpu.memory_space<vmem>>, vector<2x10xf32>
    tpu.vector_store %arg7[%c0_88, %c0_89], %154 {strides = array<i32>} : memref<2x10xf32, #tpu.memory_space<vmem>>, vector<2x10xf32>,
    return
  }
}

</mosaic_0001>

<llo_original>
// kernel: attention_net_forward.4
$region0: #{attention_net_forward.4}
  #allocation0 [shape = 'u32[]', space=smem, size = 0x4, offset = 0x4, fixed_abs, tag = 'smem constant byte address 0x4 - core index']
  #allocation1 [shape = 'u32[144,128]{1,0:T(1,128)}', space=vmem, size = 0x12000, scoped, tag = 'internal scratch']
  %s0 = inlined_call_operand.vmem [shape: f32[2,17,204], index: 0, kind: input, shape index: {}]
  %s1 = inlined_call_operand.vmem [shape: f32[204,256], index: 1, kind: input, shape index: {}]
  %s2 = inlined_call_operand.vmem [shape: f32[204,256], index: 2, kind: input, shape index: {}]
  %s3 = inlined_call_operand.vmem [shape: f32[1,256], index: 3, kind: input, shape index: {}]
  %s4 = inlined_call_operand.vmem [shape: f32[1,256], index: 4, kind: input, shape index: {}]
  %s5 = inlined_call_operand.vmem [shape: f32[2,16,256], index: 5, kind: output, shape index: {}]
  %s6 = sld [smem:[#allocation0]]
  $region53: #{attention_net_forward.4} parent=0
    _
  %s8 = ssub.s32 1, %s6
  %s9 = scalar_select 0, %s8, %s6
  loop: start=0, step=1, limit=4
  $region2: #{attention_net_forward.4} parent=0 // loop_pre_header
    _
  $region3: #{attention_net_forward.4} parent=0 // loop_header
    %s11 = sphi 0, %s15
    %p12 = scmp.ge.s32.totalorder %s11, 4
    %s21 = sphi 0, %s23
    %s24 = sphi 0, %s21
    %s25 = sphi 0, %s24
    %s41 = sphi 0, %s25
    %s45 = sphi 0, %s45
    %s47 = sphi 0, %s45
    %s48 = sphi 0, %s47
    %s62 = sphi 0, %s48
    %s66 = sphi 0, %s66
    %s68 = sphi 0, %s66
    %s69 = sphi 0, %s68
    %s83 = sphi 0, %s69
    %s87 = sphi 0, %s87
    %s89 = sphi 0, %s87
    %s90 = sphi 0, %s89
    %s104 = sphi 0, %s90
    %s108 = sphi 0, %s108
    %s110 = sphi 0, %s108
    %s111 = sphi 0, %s110
    %s125 = sphi 0, %s111
    %s131 = sphi 0, %s133
    %s134 = sphi 0, %s131
    %s135 = sphi 0, %s134
    %s151 = sphi 0, %s135
  $region4: #{attention_net_forward.4} parent=0 // loop_header_branch
    %14 = sbr.rel (%p12) target = $region8
  $region5: #{attention_net_forward.4} parent=0 // loop_body
    %s16 = ssub.s32 %s11, 1
    %s17 = ssub.s32 %s11, 2
    %s18 = sadd.s32 %s11, 1
    %s19 = ssub.s32 %s11, %s18
    %p20 = scmp.eq.s32.totalorder %s19, 0
    %s22 = sadd.s32 %s21, 1
    %s23 = scalar_select %p20, %s21, %s22
    %p26 = pneg %p20
    %p27 = scmp.eq.s32.totalorder %s11, 1
    %p28 = por %p26, %p27
    %p29 = scmp.ne.s32.totalorder %s21, %s24
    %p30 = scmp.eq.s32.totalorder %s11, 0
    %p31 = por %p29, %p30
    %p32 = scmp.ne.s32.totalorder %s21, %s24
    %p33 = scmp.eq.s32.totalorder %s16, 1
    %p34 = por %p32, %p33
    %p35 = scmp.ne.s32.totalorder %s24, %s25
    %p36 = scmp.eq.s32.totalorder %s16, 0
    %p37 = por %p35, %p36
    %p38 = scmp.ne.s32.totalorder %s24, %s25
    %p39 = scmp.eq.s32.totalorder %s17, 1
    %p40 = por %p38, %p39
    %p42 = scmp.ne.s32.totalorder %s25, %s41
    %p43 = scmp.eq.s32.totalorder %s17, 0
    %p44 = por %p42, %p43
    %s46 = sadd.s32 %s45, 1
    %p49 = scmp.eq.s32.totalorder %s11, 1
    %p50 = scmp.ne.s32.totalorder %s45, %s47
    %p51 = scmp.eq.s32.totalorder %s11, 0
    %p52 = por %p50, %p51
    %p53 = scmp.ne.s32.totalorder %s45, %s47
    %p54 = scmp.eq.s32.totalorder %s16, 1
    %p55 = por %p53, %p54
    %p56 = scmp.ne.s32.totalorder %s47, %s48
    %p57 = scmp.eq.s32.totalorder %s16, 0
    %p58 = por %p56, %p57
    %p59 = scmp.ne.s32.totalorder %s47, %s48
    %p60 = scmp.eq.s32.totalorder %s17, 1
    %p61 = por %p59, %p60
    %p63 = scmp.ne.s32.totalorder %s48, %s62
    %p64 = scmp.eq.s32.totalorder %s17, 0
    %p65 = por %p63, %p64
    %s67 = sadd.s32 %s66, 1
    %p70 = scmp.eq.s32.totalorder %s11, 1
    %p71 = scmp.ne.s32.totalorder %s66, %s68
    %p72 = scmp.eq.s32.totalorder %s11, 0
    %p73 = por %p71, %p72
    %p74 = scmp.ne.s32.totalorder %s66, %s68
    %p75 = scmp.eq.s32.totalorder %s16, 1
    %p76 = por %p74, %p75
    %p77 = scmp.ne.s32.totalorder %s68, %s69
    %p78 = scmp.eq.s32.totalorder %s16, 0
    %p79 = por %p77, %p78
    %p80 = scmp.ne.s32.totalorder %s68, %s69
    %p81 = scmp.eq.s32.totalorder %s17, 1
    %p82 = por %p80, %p81
    %p84 = scmp.ne.s32.totalorder %s69, %s83
    %p85 = scmp.eq.s32.totalorder %s17, 0
    %p86 = por %p84, %p85
    %s88 = sadd.s32 %s87, 1
    %p91 = scmp.eq.s32.totalorder %s11, 1
    %p92 = scmp.ne.s32.totalorder %s87, %s89
    %p93 = scmp.eq.s32.totalorder %s11, 0
    %p94 = por %p92, %p93
    %p95 = scmp.ne.s32.totalorder %s87, %s89
    %p96 = scmp.eq.s32.totalorder %s16, 1
    %p97 = por %p95, %p96
    %p98 = scmp.ne.s32.totalorder %s89, %s90
    %p99 = scmp.eq.s32.totalorder %s16, 0
    %p100 = por %p98, %p99
    %p101 = scmp.ne.s32.totalorder %s89, %s90
    %p102 = scmp.eq.s32.totalorder %s17, 1
    %p103 = por %p101, %p102
    %p105 = scmp.ne.s32.totalorder %s90, %s104
    %p106 = scmp.eq.s32.totalorder %s17, 0
    %p107 = por %p105, %p106
    %s109 = sadd.s32 %s108, 1
    %p112 = scmp.eq.s32.totalorder %s11, 1
    %p113 = scmp.ne.s32.totalorder %s108, %s110
    %p114 = scmp.eq.s32.totalorder %s11, 0
    %p115 = por %p113, %p114
    %p116 = scmp.ne.s32.totalorder %s108, %s110
    %p117 = scmp.eq.s32.totalorder %s16, 1
    %p118 = por %p116, %p117
    %p119 = scmp.ne.s32.totalorder %s110, %s111
    %p120 = scmp.eq.s32.totalorder %s16, 0
    %p121 = por %p119, %p120
    %p122 = scmp.ne.s32.totalorder %s110, %s111
    %p123 = scmp.eq.s32.totalorder %s17, 1
    %p124 = por %p122, %p123
    %p126 = scmp.ne.s32.totalorder %s111, %s125
    %p127 = scmp.eq.s32.totalorder %s17, 0
    %p128 = por %p126, %p127
    %s129 = ssub.s32 %s11, %s18
    %p130 = scmp.eq.s32.totalorder %s129, 0
    %s132 = sadd.s32 %s131, 1
    %s133 = scalar_select %p130, %s131, %s132
    %p136 = pneg %p130
    %p137 = scmp.eq.s32.totalorder %s11, 1
    %p138 = por %p136, %p137
    %p139 = scmp.ne.s32.totalorder %s131, %s134
    %p140 = scmp.eq.s32.totalorder %s11, 0
    %p141 = por %p139, %p140
    %p142 = scmp.ne.s32.totalorder %s131, %s134
    %p143 = scmp.eq.s32.totalorder %s16, 1
    %p144 = por %p142, %p143
    %p145 = scmp.ne.s32.totalorder %s134, %s135
    %p146 = scmp.eq.s32.totalorder %s16, 0
    %p147 = por %p145, %p146
    %p148 = scmp.ne.s32.totalorder %s134, %s135
    %p149 = scmp.eq.s32.totalorder %s17, 1
    %p150 = por %p148, %p149
    %p152 = scmp.ne.s32.totalorder %s135, %s151
    %p153 = scmp.eq.s32.totalorder %s17, 0
    %p154 = por %p152, %p153
    %p155 = scmp.le.s32.totalorder 1, %s11
    %p156 = scmp.lt.s32.totalorder %s11, 3
    %p157 = pnand %p155, %p156
    %p158 = pneg %p157
    // Predicated region
    $region9: #{attention_net_forward.4} parent=5 // pred_check
      _
    $region10: #{attention_net_forward.4} parent=5 // pred_check_branch
      %160 = sbr.rel (%p157) target = $region12
    $region11: #{attention_net_forward.4} parent=5 // pred_region
      %s161 = ssub.s32 %s11, 1
      // Predicated region
      $region13: #{attention_net_forward.4} parent=11 // pred_check
        %p162 = pneg %p58
      $region14: #{attention_net_forward.4} parent=11 // pred_check_branch
        %164 = sbr.rel (%p162) target = $region16
      $region15: #{attention_net_forward.4} parent=11 // pred_region
        _
      $region16: #{attention_net_forward.4} parent=11 // pred_fallthru
        _
      // Predicated region
      $region17: #{attention_net_forward.4} parent=11 // pred_check
        %p165 = pneg %p79
      $region18: #{attention_net_forward.4} parent=11 // pred_check_branch
        %167 = sbr.rel (%p165) target = $region20
      $region19: #{attention_net_forward.4} parent=11 // pred_region
        _
      $region20: #{attention_net_forward.4} parent=11 // pred_fallthru
        _
      // Predicated region
      $region21: #{attention_net_forward.4} parent=11 // pred_check
        %p168 = pneg %p100
      $region22: #{attention_net_forward.4} parent=11 // pred_check_branch
        %170 = sbr.rel (%p168) target = $region24
      $region23: #{attention_net_forward.4} parent=11 // pred_region
        _
      $region24: #{attention_net_forward.4} parent=11 // pred_fallthru
        _
      // Predicated region
      $region25: #{attention_net_forward.4} parent=11 // pred_check
        %p171 = pneg %p121
      $region26: #{attention_net_forward.4} parent=11 // pred_check_branch
        %173 = sbr.rel (%p171) target = $region28
      $region27: #{attention_net_forward.4} parent=11 // pred_region
        _
      $region28: #{attention_net_forward.4} parent=11 // pred_fallthru
        _
    $region12: #{attention_net_forward.4} parent=5 // pred_fallthru
      _
    %p174 = scmp.lt.s32.totalorder %s11, 2
    // Predicated region
    $region29: #{attention_net_forward.4} parent=5 // pred_check
      %p175 = pneg %p174
    $region30: #{attention_net_forward.4} parent=5 // pred_check_branch
      %177 = sbr.rel (%p175) target = $region32
    $region31: #{attention_net_forward.4} parent=5 // pred_region
      // Predicated region
      $region33: #{attention_net_forward.4} parent=31 // pred_check
        %p178 = pneg %p31
      $region34: #{attention_net_forward.4} parent=31 // pred_check_branch
        %180 = sbr.rel (%p178) target = $region36
      $region35: #{attention_net_forward.4} parent=31 // pred_region
        %p181 = scmp.lt.s32.totalorder %s11, 1
        %s182 = scalar_select %p181, %s11, 1
        %s183 = smul.addr %s182, 6
        %s184 = smul.addr %s183, 8
        %s185 = scalar_lea.vmem %s0, %s184
      $region36: #{attention_net_forward.4} parent=31 // pred_fallthru
        _
    $region32: #{attention_net_forward.4} parent=5 // pred_fallthru
      _
    %p186 = scmp.le.s32.totalorder 1, %s11
    %p187 = scmp.lt.s32.totalorder %s11, 3
    %p188 = pnand %p186, %p187
    %p189 = pneg %p188
    // Predicated region
    $region37: #{attention_net_forward.4} parent=5 // pred_check
      _
    $region38: #{attention_net_forward.4} parent=5 // pred_check_branch
      %191 = sbr.rel (%p188) target = $region40
    $region39: #{attention_net_forward.4} parent=5 // pred_region
      %s192 = ssub.s32 %s11, 1
      %p193 = scmp.lt.s32.totalorder %s16, 1
      %s194 = scalar_select %p193, %s16, 1
      %s195 = smul.addr %s194, 6
      %s196 = smul.addr %s195, 8
      %s197 = scalar_lea.vmem %s0, %s196
      %p198 = pneg %p37
      %p199 = pneg %p34
      %p200 = pneg %p58
      %p201 = pneg %p55
      %p202 = pneg %p79
      %p203 = pneg %p76
      %p204 = pneg %p100
      %p205 = pneg %p97
      %p206 = pneg %p121
      %p207 = pneg %p118
      %p208 = pneg %p147
      %p209 = pneg %p144
      %p210 = scmp.lt.s32.totalorder %s16, 1
      %s211 = scalar_select %p210, %s16, 1
      %s212 = smul.addr %s211, 4
      %s213 = smul.addr %s212, 8
      %s214 = scalar_lea.vmem %s5, %s213
      %p215 = scmp.lt.s32.totalorder %s16, 1
      %s216 = scalar_select %p215, %s16, 1
      %s217 = smul.addr %s216, 6
      %s218 = smul.addr %s217, 8
      %s219 = scalar_lea.vmem %s0, %s218
      %p220 = scmp.lt.s32.totalorder %s16, 1
      %s221 = scalar_select %p220, %s16, 1
      %s222 = smul.addr %s221, 4
      %s223 = smul.addr %s222, 8
      %s224 = scalar_lea.vmem %s5, %s223
      %v225 = vld [vmem:[%s219] sm:$0xff]
      %v226 = vld [vmem:[%s219 + $0x8] sm:$0xff]
      %v227 = vld [vmem:[%s219 + $0x10] sm:$0xff]
      %v228 = vld [vmem:[%s219 + $0x18] sm:$0xff]
      %v229 = vld [vmem:[%s219 + $0x20] sm:$0x1]
      %v230 = vld [vmem:[%s219 + $0x28] sm:$0x1]
      %v231 = vld [vmem:[%s1] sm:$0xff]
      %v232 = vld [vmem:[%s1 + $0x8] sm:$0xff]
      %v233 = vld [vmem:[%s1 + $0x10] sm:$0xff]
      %v234 = vld [vmem:[%s1 + $0x18] sm:$0xff]
      %v235 = vld [vmem:[%s1 + $0x20] sm:$0xff]
      %v236 = vld [vmem:[%s1 + $0x28] sm:$0xff]
      %v237 = vld [vmem:[%s1 + $0x30] sm:$0xff]
      %v238 = vld [vmem:[%s1 + $0x38] sm:$0xff]
      %v239 = vld [vmem:[%s1 + $0x40] sm:$0xff]
      %v240 = vld [vmem:[%s1 + $0x48] sm:$0xff]
      %v241 = vld [vmem:[%s1 + $0x50] sm:$0xff]
      %v242 = vld [vmem:[%s1 + $0x58] sm:$0xff]
      %v243 = vld [vmem:[%s1 + $0x60] sm:$0xff]
      %v244 = vld [vmem:[%s1 + $0x68] sm:$0xff]
      %v245 = vld [vmem:[%s1 + $0x70] sm:$0xff]
      %v246 = vld [vmem:[%s1 + $0x78] sm:$0xff]
      %v247 = vld [vmem:[%s1 + $0x80] sm:$0xff]
      %v248 = vld [vmem:[%s1 + $0x88] sm:$0xff]
      %v249 = vld [vmem:[%s1 + $0x90] sm:$0xff]
      %v250 = vld [vmem:[%s1 + $0x98] sm:$0xff]
      %v251 = vld [vmem:[%s1 + $0xa0] sm:$0xff]
      %v252 = vld [vmem:[%s1 + $0xa8] sm:$0xff]
      %v253 = vld [vmem:[%s1 + $0xb0] sm:$0xff]
      %v254 = vld [vmem:[%s1 + $0xb8] sm:$0xff]
      %v255 = vld [vmem:[%s1 + $0xc0] sm:$0xff]
      %v256 = vld [vmem:[%s1 + $0xc8] sm:$0xff]
      %v257 = vld [vmem:[%s1 + $0xd0] sm:$0xff]
      %v258 = vld [vmem:[%s1 + $0xd8] sm:$0xff]
      %v259 = vld [vmem:[%s1 + $0xe0] sm:$0xff]
      %v260 = vld [vmem:[%s1 + $0xe8] sm:$0xff]
      %v261 = vld [vmem:[%s1 + $0xf0] sm:$0xff]
      %v262 = vld [vmem:[%s1 + $0xf8] sm:$0xff]
      %v263 = vld [vmem:[%s1 + $0x100] sm:$0xff]
      %v264 = vld [vmem:[%s1 + $0x108] sm:$0xff]
      %v265 = vld [vmem:[%s1 + $0x110] sm:$0xff]
      %v266 = vld [vmem:[%s1 + $0x118] sm:$0xff]
      %v267 = vld [vmem:[%s1 + $0x120] sm:$0xff]
      %v268 = vld [vmem:[%s1 + $0x128] sm:$0xff]
      %v269 = vld [vmem:[%s1 + $0x130] sm:$0xff]
      %v270 = vld [vmem:[%s1 + $0x138] sm:$0xff]
      %v271 = vld [vmem:[%s1 + $0x140] sm:$0xff]
      %v272 = vld [vmem:[%s1 + $0x148] sm:$0xff]
      %v273 = vld [vmem:[%s1 + $0x150] sm:$0xff]
      %v274 = vld [vmem:[%s1 + $0x158] sm:$0xff]
      %v275 = vld [vmem:[%s1 + $0x160] sm:$0xff]
      %v276 = vld [vmem:[%s1 + $0x168] sm:$0xff]
      %v277 = vld [vmem:[%s1 + $0x170] sm:$0xff]
      %v278 = vld [vmem:[%s1 + $0x178] sm:$0xff]
      %v279 = vld [vmem:[%s1 + $0x180] sm:$0xff]
      %v280 = vld [vmem:[%s1 + $0x188] sm:$0xff]
      %v281 = vld [vmem:[%s1 + $0x190] sm:$0xf]
      %v282 = vld [vmem:[%s1 + $0x198] sm:$0xf]
      %v283 = vld [vmem:[%s2] sm:$0xff]
      %v284 = vld [vmem:[%s2 + $0x8] sm:$0xff]
      %v285 = vld [vmem:[%s2 + $0x10] sm:$0xff]
      %v286 = vld [vmem:[%s2 + $0x18] sm:$0xff]
      %v287 = vld [vmem:[%s2 + $0x20] sm:$0xff]
      %v288 = vld [vmem:[%s2 + $0x28] sm:$0xff]
      %v289 = vld [vmem:[%s2 + $0x30] sm:$0xff]
      %v290 = vld [vmem:[%s2 + $0x38] sm:$0xff]
      %v291 = vld [vmem:[%s2 + $0x40] sm:$0xff]
      %v292 = vld [vmem:[%s2 + $0x48] sm:$0xff]
      %v293 = vld [vmem:[%s2 + $0x50] sm:$0xff]
      %v294 = vld [vmem:[%s2 + $0x58] sm:$0xff]
      %v295 = vld [vmem:[%s2 + $0x60] sm:$0xff]
      %v296 = vld [vmem:[%s2 + $0x68] sm:$0xff]
      %v297 = vld [vmem:[%s2 + $0x70] sm:$0xff]
      %v298 = vld [vmem:[%s2 + $0x78] sm:$0xff]
      %v299 = vld [vmem:[%s2 + $0x80] sm:$0xff]
      %v300 = vld [vmem:[%s2 + $0x88] sm:$0xff]
      %v301 = vld [vmem:[%s2 + $0x90] sm:$0xff]
      %v302 = vld [vmem:[%s2 + $0x98] sm:$0xff]
      %v303 = vld [vmem:[%s2 + $0xa0] sm:$0xff]
      %v304 = vld [vmem:[%s2 + $0xa8] sm:$0xff]
      %v305 = vld [vmem:[%s2 + $0xb0] sm:$0xff]
      %v306 = vld [vmem:[%s2 + $0xb8] sm:$0xff]
      %v307 = vld [vmem:[%s2 + $0xc0] sm:$0xff]
      %v308 = vld [vmem:[%s2 + $0xc8] sm:$0xff]
      %v309 = vld [vmem:[%s2 + $0xd0] sm:$0xff]
      %v310 = vld [vmem:[%s2 + $0xd8] sm:$0xff]
      %v311 = vld [vmem:[%s2 + $0xe0] sm:$0xff]
      %v312 = vld [vmem:[%s2 + $0xe8] sm:$0xff]
      %v313 = vld [vmem:[%s2 + $0xf0] sm:$0xff]
      %v314 = vld [vmem:[%s2 + $0xf8] sm:$0xff]
      %v315 = vld [vmem:[%s2 + $0x100] sm:$0xff]
      %v316 = vld [vmem:[%s2 + $0x108] sm:$0xff]
      %v317 = vld [vmem:[%s2 + $0x110] sm:$0xff]
      %v318 = vld [vmem:[%s2 + $0x118] sm:$0xff]
      %v319 = vld [vmem:[%s2 + $0x120] sm:$0xff]
      %v320 = vld [vmem:[%s2 + $0x128] sm:$0xff]
      %v321 = vld [vmem:[%s2 + $0x130] sm:$0xff]
      %v322 = vld [vmem:[%s2 + $0x138] sm:$0xff]
      %v323 = vld [vmem:[%s2 + $0x140] sm:$0xff]
      %v324 = vld [vmem:[%s2 + $0x148] sm:$0xff]
      %v325 = vld [vmem:[%s2 + $0x150] sm:$0xff]
      %v326 = vld [vmem:[%s2 + $0x158] sm:$0xff]
      %v327 = vld [vmem:[%s2 + $0x160] sm:$0xff]
      %v328 = vld [vmem:[%s2 + $0x168] sm:$0xff]
      %v329 = vld [vmem:[%s2 + $0x170] sm:$0xff]
      %v330 = vld [vmem:[%s2 + $0x178] sm:$0xff]
      %v331 = vld [vmem:[%s2 + $0x180] sm:$0xff]
      %v332 = vld [vmem:[%s2 + $0x188] sm:$0xff]
      %v333 = vld [vmem:[%s2 + $0x190] sm:$0xf]
      %v334 = vld [vmem:[%s2 + $0x198] sm:$0xf]
      %vm341 = vcmask 1046528
      %v342 = vrot.slane %v225, 1
      %v343 = vrot.slane %v227, 1
      %v344 = vsel %vm341, %v342, %v343
      %v345 = vrot.slane %v226, 1
      %v346 = vrot.slane %v228, 1
      %v347 = vsel %vm341, %v345, %v346
      %v348 = vrot.slane %v229, 1
      %v349 = vsel %vm341, %v343, %v348
      %v350 = vrot.slane %v230, 1
      %v351 = vsel %vm341, %v346, %v350
      %vm354 = vcmask 621568
      %v355 = vsel %vm354, %v347, 0
      %v357 = vsel %vm354, %v351, 0
      %vm359 = vcmask 1043456
      %v361 = vsel %vm359, %v333, 0
      %v364 = vsel %vm359, %v334, 0
      %366 = vmatprep.subr.mxu0 %v314
      %367 = vmatpush1.msra.mxu0 %v313
      %368 = vmatprep.subr.mxu0 %v312
      %369 = vmatpush1.msra.mxu0 %v311
      %370 = vmatprep.subr.mxu0 %v310
      %371 = vmatpush1.msra.mxu0 %v309
      %372 = vmatprep.subr.mxu0 %v308
      %373 = vmatpush1.msra.mxu0 %v307
      %374 = vmatprep.subr.mxu0 %v306
      %375 = vmatpush1.msra.mxu0 %v305
      %376 = vmatprep.subr.mxu0 %v304
      %377 = vmatpush1.msra.mxu0 %v303
      %378 = vmatprep.subr.mxu0 %v302
      %379 = vmatpush1.msra.mxu0 %v301
      %380 = vmatprep.subr.mxu0 %v300
      %381 = vmatpush1.msra.mxu0 %v299
      %382 = vmatprep.subr.mxu0 %v298
      %383 = vmatpush1.msra.mxu0 %v297
      %384 = vmatprep.subr.mxu0 %v296
      %385 = vmatpush1.msra.mxu0 %v295
      %386 = vmatprep.subr.mxu0 %v294
      %387 = vmatpush1.msra.mxu0 %v293
      %388 = vmatprep.subr.mxu0 %v292
      %389 = vmatpush1.msra.mxu0 %v291
      %390 = vmatprep.subr.mxu0 %v290
      %391 = vmatpush1.msra.mxu0 %v289
      %392 = vmatprep.subr.mxu0 %v288
      %393 = vmatpush1.msra.mxu0 %v287
      %394 = vmatprep.subr.mxu0 %v286
      %395 = vmatpush1.msra.mxu0 %v285
      %396 = vmatprep.subr.mxu0 %v284
      %397 = vmatpush1.msra.mxu0 %v283
      %398 = vmatprep.subr.mxu0 0.0
      %399 = vmatpush2.msra.mxu0 0.0
      %400 = vmatprep.subr.mxu0 0.0
      %401 = vmatpush2.msra.mxu0 0.0
      %402 = vmatprep.subr.mxu0 0.0
      %403 = vmatpush2.msra.mxu0 0.0
      %404 = vmatprep.subr.mxu0 0.0
      %405 = vmatpush2.msra.mxu0 0.0
      %406 = vmatprep.subr.mxu0 0.0
      %407 = vmatpush2.msra.mxu0 0.0
      %408 = vmatprep.subr.mxu0 0.0
      %409 = vmatpush2.msra.mxu0 0.0
      %410 = vmatprep.subr.mxu0 %v364
      %411 = vmatpush2.msra.mxu0 %v361
      %412 = vmatprep.subr.mxu0 %v332
      %413 = vmatpush2.msra.mxu0 %v331
      %414 = vmatprep.subr.mxu0 %v330
      %415 = vmatpush2.msra.mxu0 %v329
      %416 = vmatprep.subr.mxu0 %v328
      %417 = vmatpush2.msra.mxu0 %v327
      %418 = vmatprep.subr.mxu0 %v326
      %419 = vmatpush2.msra.mxu0 %v325
      %420 = vmatprep.subr.mxu0 %v324
      %421 = vmatpush2.msra.mxu0 %v323
      %422 = vmatprep.subr.mxu0 %v322
      %423 = vmatpush2.msra.mxu0 %v321
      %424 = vmatprep.subr.mxu0 %v320
      %425 = vmatpush2.msra.mxu0 %v319
      %426 = vmatprep.subr.mxu0 %v318
      %427 = vmatpush2.msra.mxu0 %v317
      %428 = vmatprep.subr.mxu0 %v316
      %429 = vmatpush2.msra.mxu0 %v315
      %430 = vmatprep.mubr.f32.mxu0 %v355
      %431 = vmatmul.mubr.f32.gmra.mxu0 %v344
      %v432 = vpop.f32.mrf.mxu0
      %v433 = vadd.f32 0.0, %v432
      %v434 = vpop.f32.mrf.mxu0
      %v435 = vadd.f32 0.0, %v434
      %436 = vmatprep.mubr.f32.mxu0 %v357
      %437 = vmatmul.mubr.f32.gmra.mxu0 %v349
      %v438 = vpop.f32.mrf.mxu0
      %v439 = vadd.f32 0.0, %v438
      %v440 = vpop.f32.mrf.mxu0
      %v441 = vadd.f32 0.0, %v440
      %442 = vdwg.mxu0
      %v443 = vsel %vm354, %v226, 0
      %v445 = vsel %vm354, %v228, 0
      %v448 = vsel %vm359, %v281, 0
      %v451 = vsel %vm359, %v282, 0
      %453 = vmatprep.subr.mxu0 %v262
      %454 = vmatpush1.msra.mxu0 %v261
      %455 = vmatprep.subr.mxu0 %v260
      %456 = vmatpush1.msra.mxu0 %v259
      %457 = vmatprep.subr.mxu0 %v258
      %458 = vmatpush1.msra.mxu0 %v257
      %459 = vmatprep.subr.mxu0 %v256
      %460 = vmatpush1.msra.mxu0 %v255
      %461 = vmatprep.subr.mxu0 %v254
      %462 = vmatpush1.msra.mxu0 %v253
      %463 = vmatprep.subr.mxu0 %v252
      %464 = vmatpush1.msra.mxu0 %v251
      %465 = vmatprep.subr.mxu0 %v250
      %466 = vmatpush1.msra.mxu0 %v249
      %467 = vmatprep.subr.mxu0 %v248
      %468 = vmatpush1.msra.mxu0 %v247
      %469 = vmatprep.subr.mxu0 %v246
      %470 = vmatpush1.msra.mxu0 %v245
      %471 = vmatprep.subr.mxu0 %v244
      %472 = vmatpush1.msra.mxu0 %v243
      %473 = vmatprep.subr.mxu0 %v242
      %474 = vmatpush1.msra.mxu0 %v241
      %475 = vmatprep.subr.mxu0 %v240
      %476 = vmatpush1.msra.mxu0 %v239
      %477 = vmatprep.subr.mxu0 %v238
      %478 = vmatpush1.msra.mxu0 %v237
      %479 = vmatprep.subr.mxu0 %v236
      %480 = vmatpush1.msra.mxu0 %v235
      %481 = vmatprep.subr.mxu0 %v234
      %482 = vmatpush1.msra.mxu0 %v233
      %483 = vmatprep.subr.mxu0 %v232
      %484 = vmatpush1.msra.mxu0 %v231
      %485 = vmatprep.subr.mxu0 0.0
      %486 = vmatpush2.msra.mxu0 0.0
      %487 = vmatprep.subr.mxu0 0.0
      %488 = vmatpush2.msra.mxu0 0.0
      %489 = vmatprep.subr.mxu0 0.0
      %490 = vmatpush2.msra.mxu0 0.0
      %491 = vmatprep.subr.mxu0 0.0
      %492 = vmatpush2.msra.mxu0 0.0
      %493 = vmatprep.subr.mxu0 0.0
      %494 = vmatpush2.msra.mxu0 0.0
      %495 = vmatprep.subr.mxu0 0.0
      %496 = vmatpush2.msra.mxu0 0.0
      %497 = vmatprep.subr.mxu0 %v451
      %498 = vmatpush2.msra.mxu0 %v448
      %499 = vmatprep.subr.mxu0 %v280
      %500 = vmatpush2.msra.mxu0 %v279
      %501 = vmatprep.subr.mxu0 %v278
      %502 = vmatpush2.msra.mxu0 %v277
      %503 = vmatprep.subr.mxu0 %v276
      %504 = vmatpush2.msra.mxu0 %v275
      %505 = vmatprep.subr.mxu0 %v274
      %506 = vmatpush2.msra.mxu0 %v273
      %507 = vmatprep.subr.mxu0 %v272
      %508 = vmatpush2.msra.mxu0 %v271
      %509 = vmatprep.subr.mxu0 %v270
      %510 = vmatpush2.msra.mxu0 %v269
      %511 = vmatprep.subr.mxu0 %v268
      %512 = vmatpush2.msra.mxu0 %v267
      %513 = vmatprep.subr.mxu0 %v266
      %514 = vmatpush2.msra.mxu0 %v265
      %515 = vmatprep.subr.mxu0 %v264
      %516 = vmatpush2.msra.mxu0 %v263
      %517 = vmatprep.mubr.f32.mxu0 %v443
      %518 = vmatmul.mubr.f32.gmra.mxu0 %v225
      %v519 = vpop.f32.mrf.mxu0
      %v520 = vadd.f32 %v433, %v519
      %v521 = vpop.f32.mrf.mxu0
      %v522 = vadd.f32 %v435, %v521
      %523 = vmatprep.mubr.f32.mxu0 %v445
      %524 = vmatmul.mubr.f32.gmra.mxu0 %v227
      %v525 = vpop.f32.mrf.mxu0
      %v526 = vadd.f32 %v439, %v525
      %v527 = vpop.f32.mrf.mxu0
      %v528 = vadd.f32 %v441, %v527
      %529 = vdwg.mxu0
      %v530 = vld [vmem:[%s3] sm:$0x3]
      %v532 = vlaneseq
      %v533 = vshrl.u32 %v532, 7
      %v534 = vsub.s32 0, %v533
      %v535 = vrot.slane %v530, %v534
      %v536 = vlaneseq
      %v537 = vshrl.u32 %v536, 7
      %v538 = vsub.s32 1, %v537
      %v539 = vrot.slane %v530, %v538
      %v542 = vmul.f32 %v520, %v535
      %v543 = vmul.f32 %v522, %v539
      %v544 = vmul.f32 %v526, %v535
      %v545 = vmul.f32 %v528, %v539
      %v546 = vld [vmem:[%s4] sm:$0x3]
      %v548 = vlaneseq
      %v549 = vshrl.u32 %v548, 7
      %v550 = vsub.s32 0, %v549
      %v551 = vrot.slane %v546, %v550
      %v552 = vlaneseq
      %v553 = vshrl.u32 %v552, 7
      %v554 = vsub.s32 1, %v553
      %v555 = vrot.slane %v546, %v554
      %v558 = vadd.f32 %v542, %v551
      %v559 = vadd.f32 %v543, %v555
      %v560 = vadd.f32 %v544, %v551
      %v561 = vadd.f32 %v545, %v555
      %v562 = vmax.f32 %v558, 0.0
      %v563 = vmax.f32 %v559, 0.0
      %v564 = vmax.f32 %v560, 0.0
      %v565 = vmax.f32 %v561, 0.0
      %566 = vst [vmem:[%s224] sm:$0xff] %v562
      %567 = vst [vmem:[%s224 + $0x8] sm:$0xff] %v563
      %568 = vst [vmem:[%s224 + $0x10] sm:$0xff] %v564
      %569 = vst [vmem:[%s224 + $0x18] sm:$0xff] %v565
      %p570 = scmp.lt.s32.totalorder %s16, 1
      %s571 = scalar_select %p570, %s16, 1
      %s572 = smul.addr %s571, 4
      %s573 = smul.addr %s572, 8
      %s574 = scalar_lea.vmem %s5, %s573
      // Predicated region
      $region41: #{attention_net_forward.4} parent=39 // pred_check
        %p575 = pneg %p144
      $region42: #{attention_net_forward.4} parent=39 // pred_check_branch
        %577 = sbr.rel (%p575) target = $region44
      $region43: #{attention_net_forward.4} parent=39 // pred_region
        _
      $region44: #{attention_net_forward.4} parent=39 // pred_fallthru
        _
    $region40: #{attention_net_forward.4} parent=5 // pred_fallthru
      _
    %p578 = scmp.le.s32.totalorder 2, %s11
    // Predicated region
    $region45: #{attention_net_forward.4} parent=5 // pred_check
      %p579 = pneg %p578
    $region46: #{attention_net_forward.4} parent=5 // pred_check_branch
      %581 = sbr.rel (%p579) target = $region48
    $region47: #{attention_net_forward.4} parent=5 // pred_region
      %s582 = ssub.s32 %s11, 2
      // Predicated region
      $region49: #{attention_net_forward.4} parent=47 // pred_check
        %p583 = pneg %p150
      $region50: #{attention_net_forward.4} parent=47 // pred_check_branch
        %585 = sbr.rel (%p583) target = $region52
      $region51: #{attention_net_forward.4} parent=47 // pred_region
        %p586 = scmp.lt.s32.totalorder %s17, 1
        %s587 = scalar_select %p586, %s17, 1
        %s588 = smul.addr %s587, 4
        %s589 = smul.addr %s588, 8
        %s590 = scalar_lea.vmem %s5, %s589
      $region52: #{attention_net_forward.4} parent=47 // pred_fallthru
        _
    $region48: #{attention_net_forward.4} parent=5 // pred_fallthru
      _
  $region6: #{attention_net_forward.4} parent=0 // loop_footer
    %s15 = sadd.s32 1, %s11
  $region7: #{attention_net_forward.4} parent=0 // loop_footer_branch
    %10 = sbr.rel target = $region3
  $region8: #{attention_net_forward.4} parent=0 // loop_exit
    _

// kernel: attention_net_forward.5
$region0: #{attention_net_forward.5}
  #allocation0 [shape = 'u32[]', space=smem, size = 0x4, offset = 0x4, fixed_abs, tag = 'smem constant byte address 0x4 - core index']
  #allocation1 [shape = 'u32[144,128]{1,0:T(1,128)}', space=vmem, size = 0x12000, scoped, tag = 'internal scratch']
  %s0 = inlined_call_operand.vmem [shape: f32[2,9,576], index: 0, kind: input, shape index: {}]
  %s1 = inlined_call_operand.vmem [shape: f32[576,256], index: 1, kind: input, shape index: {}]
  %s2 = inlined_call_operand.vmem [shape: f32[576,256], index: 2, kind: input, shape index: {}]
  %s3 = inlined_call_operand.vmem [shape: f32[1,256], index: 3, kind: input, shape index: {}]
  %s4 = inlined_call_operand.vmem [shape: f32[1,256], index: 4, kind: input, shape index: {}]
  %s5 = inlined_call_operand.vmem [shape: f32[2,8,256], index: 5, kind: output, shape index: {}]
  %s6 = sld [smem:[#allocation0]]
  $region53: #{attention_net_forward.5} parent=0
    _
  %s8 = ssub.s32 1, %s6
  %s9 = scalar_select 0, %s8, %s6
  loop: start=0, step=1, limit=4
  $region2: #{attention_net_forward.5} parent=0 // loop_pre_header
    _
  $region3: #{attention_net_forward.5} parent=0 // loop_header
    %s11 = sphi 0, %s15
    %p12 = scmp.ge.s32.totalorder %s11, 4
    %s21 = sphi 0, %s23
    %s24 = sphi 0, %s21
    %s25 = sphi 0, %s24
    %s41 = sphi 0, %s25
    %s45 = sphi 0, %s45
    %s47 = sphi 0, %s45
    %s48 = sphi 0, %s47
    %s62 = sphi 0, %s48
    %s66 = sphi 0, %s66
    %s68 = sphi 0, %s66
    %s69 = sphi 0, %s68
    %s83 = sphi 0, %s69
    %s87 = sphi 0, %s87
    %s89 = sphi 0, %s87
    %s90 = sphi 0, %s89
    %s104 = sphi 0, %s90
    %s108 = sphi 0, %s108
    %s110 = sphi 0, %s108
    %s111 = sphi 0, %s110
    %s125 = sphi 0, %s111
    %s131 = sphi 0, %s133
    %s134 = sphi 0, %s131
    %s135 = sphi 0, %s134
    %s151 = sphi 0, %s135
  $region4: #{attention_net_forward.5} parent=0 // loop_header_branch
    %14 = sbr.rel (%p12) target = $region8
  $region5: #{attention_net_forward.5} parent=0 // loop_body
    %s16 = ssub.s32 %s11, 1
    %s17 = ssub.s32 %s11, 2
    %s18 = sadd.s32 %s11, 1
    %s19 = ssub.s32 %s11, %s18
    %p20 = scmp.eq.s32.totalorder %s19, 0
    %s22 = sadd.s32 %s21, 1
    %s23 = scalar_select %p20, %s21, %s22
    %p26 = pneg %p20
    %p27 = scmp.eq.s32.totalorder %s11, 1
    %p28 = por %p26, %p27
    %p29 = scmp.ne.s32.totalorder %s21, %s24
    %p30 = scmp.eq.s32.totalorder %s11, 0
    %p31 = por %p29, %p30
    %p32 = scmp.ne.s32.totalorder %s21, %s24
    %p33 = scmp.eq.s32.totalorder %s16, 1
    %p34 = por %p32, %p33
    %p35 = scmp.ne.s32.totalorder %s24, %s25
    %p36 = scmp.eq.s32.totalorder %s16, 0
    %p37 = por %p35, %p36
    %p38 = scmp.ne.s32.totalorder %s24, %s25
    %p39 = scmp.eq.s32.totalorder %s17, 1
    %p40 = por %p38, %p39
    %p42 = scmp.ne.s32.totalorder %s25, %s41
    %p43 = scmp.eq.s32.totalorder %s17, 0
    %p44 = por %p42, %p43
    %s46 = sadd.s32 %s45, 1
    %p49 = scmp.eq.s32.totalorder %s11, 1
    %p50 = scmp.ne.s32.totalorder %s45, %s47
    %p51 = scmp.eq.s32.totalorder %s11, 0
    %p52 = por %p50, %p51
    %p53 = scmp.ne.s32.totalorder %s45, %s47
    %p54 = scmp.eq.s32.totalorder %s16, 1
    %p55 = por %p53, %p54
    %p56 = scmp.ne.s32.totalorder %s47, %s48
    %p57 = scmp.eq.s32.totalorder %s16, 0
    %p58 = por %p56, %p57
    %p59 = scmp.ne.s32.totalorder %s47, %s48
    %p60 = scmp.eq.s32.totalorder %s17, 1
    %p61 = por %p59, %p60
    %p63 = scmp.ne.s32.totalorder %s48, %s62
    %p64 = scmp.eq.s32.totalorder %s17, 0
    %p65 = por %p63, %p64
    %s67 = sadd.s32 %s66, 1
    %p70 = scmp.eq.s32.totalorder %s11, 1
    %p71 = scmp.ne.s32.totalorder %s66, %s68
    %p72 = scmp.eq.s32.totalorder %s11, 0
    %p73 = por %p71, %p72
    %p74 = scmp.ne.s32.totalorder %s66, %s68
    %p75 = scmp.eq.s32.totalorder %s16, 1
    %p76 = por %p74, %p75
    %p77 = scmp.ne.s32.totalorder %s68, %s69
    %p78 = scmp.eq.s32.totalorder %s16, 0
    %p79 = por %p77, %p78
    %p80 = scmp.ne.s32.totalorder %s68, %s69
    %p81 = scmp.eq.s32.totalorder %s17, 1
    %p82 = por %p80, %p81
    %p84 = scmp.ne.s32.totalorder %s69, %s83
    %p85 = scmp.eq.s32.totalorder %s17, 0
    %p86 = por %p84, %p85
    %s88 = sadd.s32 %s87, 1
    %p91 = scmp.eq.s32.totalorder %s11, 1
    %p92 = scmp.ne.s32.totalorder %s87, %s89
    %p93 = scmp.eq.s32.totalorder %s11, 0
    %p94 = por %p92, %p93
    %p95 = scmp.ne.s32.totalorder %s87, %s89
    %p96 = scmp.eq.s32.totalorder %s16, 1
    %p97 = por %p95, %p96
    %p98 = scmp.ne.s32.totalorder %s89, %s90
    %p99 = scmp.eq.s32.totalorder %s16, 0
    %p100 = por %p98, %p99
    %p101 = scmp.ne.s32.totalorder %s89, %s90
    %p102 = scmp.eq.s32.totalorder %s17, 1
    %p103 = por %p101, %p102
    %p105 = scmp.ne.s32.totalorder %s90, %s104
    %p106 = scmp.eq.s32.totalorder %s17, 0
    %p107 = por %p105, %p106
    %s109 = sadd.s32 %s108, 1
    %p112 = scmp.eq.s32.totalorder %s11, 1
    %p113 = scmp.ne.s32.totalorder %s108, %s110
    %p114 = scmp.eq.s32.totalorder %s11, 0
    %p115 = por %p113, %p114
    %p116 = scmp.ne.s32.totalorder %s108, %s110
    %p117 = scmp.eq.s32.totalorder %s16, 1
    %p118 = por %p116, %p117
    %p119 = scmp.ne.s32.totalorder %s110, %s111
    %p120 = scmp.eq.s32.totalorder %s16, 0
    %p121 = por %p119, %p120
    %p122 = scmp.ne.s32.totalorder %s110, %s111
    %p123 = scmp.eq.s32.totalorder %s17, 1
    %p124 = por %p122, %p123
    %p126 = scmp.ne.s32.totalorder %s111, %s125
    %p127 = scmp.eq.s32.totalorder %s17, 0
    %p128 = por %p126, %p127
    %s129 = ssub.s32 %s11, %s18
    %p130 = scmp.eq.s32.totalorder %s129, 0
    %s132 = sadd.s32 %s131, 1
    %s133 = scalar_select %p130, %s131, %s132
    %p136 = pneg %p130
    %p137 = scmp.eq.s32.totalorder %s11, 1
    %p138 = por %p136, %p137
    %p139 = scmp.ne.s32.totalorder %s131, %s134
    %p140 = scmp.eq.s32.totalorder %s11, 0
    %p141 = por %p139, %p140
    %p142 = scmp.ne.s32.totalorder %s131, %s134
    %p143 = scmp.eq.s32.totalorder %s16, 1
    %p144 = por %p142, %p143
    %p145 = scmp.ne.s32.totalorder %s134, %s135
    %p146 = scmp.eq.s32.totalorder %s16, 0
    %p147 = por %p145, %p146
    %p148 = scmp.ne.s32.totalorder %s134, %s135
    %p149 = scmp.eq.s32.totalorder %s17, 1
    %p150 = por %p148, %p149
    %p152 = scmp.ne.s32.totalorder %s135, %s151
    %p153 = scmp.eq.s32.totalorder %s17, 0
    %p154 = por %p152, %p153
    %p155 = scmp.le.s32.totalorder 1, %s11
    %p156 = scmp.lt.s32.totalorder %s11, 3
    %p157 = pnand %p155, %p156
    %p158 = pneg %p157
    // Predicated region
    $region9: #{attention_net_forward.5} parent=5 // pred_check
      _
    $region10: #{attention_net_forward.5} parent=5 // pred_check_branch
      %160 = sbr.rel (%p157) target = $region12
    $region11: #{attention_net_forward.5} parent=5 // pred_region
      %s161 = ssub.s32 %s11, 1
      // Predicated region
      $region13: #{attention_net_forward.5} parent=11 // pred_check
        %p162 = pneg %p58
      $region14: #{attention_net_forward.5} parent=11 // pred_check_branch
        %164 = sbr.rel (%p162) target = $region16
      $region15: #{attention_net_forward.5} parent=11 // pred_region
        _
      $region16: #{attention_net_forward.5} parent=11 // pred_fallthru
        _
      // Predicated region
      $region17: #{attention_net_forward.5} parent=11 // pred_check
        %p165 = pneg %p79
      $region18: #{attention_net_forward.5} parent=11 // pred_check_branch
        %167 = sbr.rel (%p165) target = $region20
      $region19: #{attention_net_forward.5} parent=11 // pred_region
        _
      $region20: #{attention_net_forward.5} parent=11 // pred_fallthru
        _
      // Predicated region
      $region21: #{attention_net_forward.5} parent=11 // pred_check
        %p168 = pneg %p100
      $region22: #{attention_net_forward.5} parent=11 // pred_check_branch
        %170 = sbr.rel (%p168) target = $region24
      $region23: #{attention_net_forward.5} parent=11 // pred_region
        _
      $region24: #{attention_net_forward.5} parent=11 // pred_fallthru
        _
      // Predicated region
      $region25: #{attention_net_forward.5} parent=11 // pred_check
        %p171 = pneg %p121
      $region26: #{attention_net_forward.5} parent=11 // pred_check_branch
        %173 = sbr.rel (%p171) target = $region28
      $region27: #{attention_net_forward.5} parent=11 // pred_region
        _
      $region28: #{attention_net_forward.5} parent=11 // pred_fallthru
        _
    $region12: #{attention_net_forward.5} parent=5 // pred_fallthru
      _
    %p174 = scmp.lt.s32.totalorder %s11, 2
    // Predicated region
    $region29: #{attention_net_forward.5} parent=5 // pred_check
      %p175 = pneg %p174
    $region30: #{attention_net_forward.5} parent=5 // pred_check_branch
      %177 = sbr.rel (%p175) target = $region32
    $region31: #{attention_net_forward.5} parent=5 // pred_region
      // Predicated region
      $region33: #{attention_net_forward.5} parent=31 // pred_check
        %p178 = pneg %p31
      $region34: #{attention_net_forward.5} parent=31 // pred_check_branch
        %180 = sbr.rel (%p178) target = $region36
      $region35: #{attention_net_forward.5} parent=31 // pred_region
        %p181 = scmp.lt.s32.totalorder %s11, 1
        %s182 = scalar_select %p181, %s11, 1
        %s183 = smul.addr %s182, 10
        %s184 = smul.addr %s183, 8
        %s185 = scalar_lea.vmem %s0, %s184
      $region36: #{attention_net_forward.5} parent=31 // pred_fallthru
        _
    $region32: #{attention_net_forward.5} parent=5 // pred_fallthru
      _
    %p186 = scmp.le.s32.totalorder 1, %s11
    %p187 = scmp.lt.s32.totalorder %s11, 3
    %p188 = pnand %p186, %p187
    %p189 = pneg %p188
    // Predicated region
    $region37: #{attention_net_forward.5} parent=5 // pred_check
      _
    $region38: #{attention_net_forward.5} parent=5 // pred_check_branch
      %191 = sbr.rel (%p188) target = $region40
    $region39: #{attention_net_forward.5} parent=5 // pred_region
      %s192 = ssub.s32 %s11, 1
      %p193 = scmp.lt.s32.totalorder %s16, 1
      %s194 = scalar_select %p193, %s16, 1
      %s195 = smul.addr %s194, 10
      %s196 = smul.addr %s195, 8
      %s197 = scalar_lea.vmem %s0, %s196
      %p198 = pneg %p37
      %p199 = pneg %p34
      %p200 = pneg %p58
      %p201 = pneg %p55
      %p202 = pneg %p79
      %p203 = pneg %p76
      %p204 = pneg %p100
      %p205 = pneg %p97
      %p206 = pneg %p121
      %p207 = pneg %p118
      %p208 = pneg %p147
      %p209 = pneg %p144
      %p210 = scmp.lt.s32.totalorder %s16, 1
      %s211 = scalar_select %p210, %s16, 1
      %s212 = smul.addr %s211, 2
      %s213 = smul.addr %s212, 8
      %s214 = scalar_lea.vmem %s5, %s213
      %p215 = scmp.lt.s32.totalorder %s16, 1
      %s216 = scalar_select %p215, %s16, 1
      %s217 = smul.addr %s216, 10
      %s218 = smul.addr %s217, 8
      %s219 = scalar_lea.vmem %s0, %s218
      %p220 = scmp.lt.s32.totalorder %s16, 1
      %s221 = scalar_select %p220, %s16, 1
      %s222 = smul.addr %s221, 2
      %s223 = smul.addr %s222, 8
      %s224 = scalar_lea.vmem %s5, %s223
      %v225 = vld [vmem:[%s219] sm:$0xff]
      %v226 = vld [vmem:[%s219 + $0x8] sm:$0xff]
      %v227 = vld [vmem:[%s219 + $0x10] sm:$0xff]
      %v228 = vld [vmem:[%s219 + $0x18] sm:$0xff]
      %v229 = vld [vmem:[%s219 + $0x20] sm:$0xff]
      %v230 = vld [vmem:[%s219 + $0x28] sm:$0x1]
      %v231 = vld [vmem:[%s219 + $0x30] sm:$0x1]
      %v232 = vld [vmem:[%s219 + $0x38] sm:$0x1]
      %v233 = vld [vmem:[%s219 + $0x40] sm:$0x1]
      %v234 = vld [vmem:[%s219 + $0x48] sm:$0x1]
      %v235 = vld [vmem:[%s1] sm:$0xff]
      %v236 = vld [vmem:[%s1 + $0x8] sm:$0xff]
      %v237 = vld [vmem:[%s1 + $0x10] sm:$0xff]
      %v238 = vld [vmem:[%s1 + $0x18] sm:$0xff]
      %v239 = vld [vmem:[%s1 + $0x20] sm:$0xff]
      %v240 = vld [vmem:[%s1 + $0x28] sm:$0xff]
      %v241 = vld [vmem:[%s1 + $0x30] sm:$0xff]
      %v242 = vld [vmem:[%s1 + $0x38] sm:$0xff]
      %v243 = vld [vmem:[%s1 + $0x40] sm:$0xff]
      %v244 = vld [vmem:[%s1 + $0x48] sm:$0xff]
      %v245 = vld [vmem:[%s1 + $0x50] sm:$0xff]
      %v246 = vld [vmem:[%s1 + $0x58] sm:$0xff]
      %v247 = vld [vmem:[%s1 + $0x60] sm:$0xff]
      %v248 = vld [vmem:[%s1 + $0x68] sm:$0xff]
      %v249 = vld [vmem:[%s1 + $0x70] sm:$0xff]
      %v250 = vld [vmem:[%s1 + $0x78] sm:$0xff]
      %v251 = vld [vmem:[%s1 + $0x80] sm:$0xff]
      %v252 = vld [vmem:[%s1 + $0x88] sm:$0xff]
      %v253 = vld [vmem:[%s1 + $0x90] sm:$0xff]
      %v254 = vld [vmem:[%s1 + $0x98] sm:$0xff]
      %v255 = vld [vmem:[%s1 + $0xa0] sm:$0xff]
      %v256 = vld [vmem:[%s1 + $0xa8] sm:$0xff]
      %v257 = vld [vmem:[%s1 + $0xb0] sm:$0xff]
      %v258 = vld [vmem:[%s1 + $0xb8] sm:$0xff]
      %v259 = vld [vmem:[%s1 + $0xc0] sm:$0xff]
      %v260 = vld [vmem:[%s1 + $0xc8] sm:$0xff]
      %v261 = vld [vmem:[%s1 + $0xd0] sm:$0xff]
      %v262 = vld [vmem:[%s1 + $0xd8] sm:$0xff]
      %v263 = vld [vmem:[%s1 + $0xe0] sm:$0xff]
      %v264 = vld [vmem:[%s1 + $0xe8] sm:$0xff]
      %v265 = vld [vmem:[%s1 + $0xf0] sm:$0xff]
      %v266 = vld [vmem:[%s1 + $0xf8] sm:$0xff]
      %v267 = vld [vmem:[%s1 + $0x100] sm:$0xff]
      %v268 = vld [vmem:[%s1 + $0x108] sm:$0xff]
      %v269 = vld [vmem:[%s1 + $0x110] sm:$0xff]
      %v270 = vld [vmem:[%s1 + $0x118] sm:$0xff]
      %v271 = vld [vmem:[%s1 + $0x120] sm:$0xff]
      %v272 = vld [vmem:[%s1 + $0x128] sm:$0xff]
      %v273 = vld [vmem:[%s1 + $0x130] sm:$0xff]
      %v274 = vld [vmem:[%s1 + $0x138] sm:$0xff]
      %v275 = vld [vmem:[%s1 + $0x140] sm:$0xff]
      %v276 = vld [vmem:[%s1 + $0x148] sm:$0xff]
      %v277 = vld [vmem:[%s1 + $0x150] sm:$0xff]
      %v278 = vld [vmem:[%s1 + $0x158] sm:$0xff]
      %v279 = vld [vmem:[%s1 + $0x160] sm:$0xff]
      %v280 = vld [vmem:[%s1 + $0x168] sm:$0xff]
      %v281 = vld [vmem:[%s1 + $0x170] sm:$0xff]
      %v282 = vld [vmem:[%s1 + $0x178] sm:$0xff]
      %v283 = vld [vmem:[%s1 + $0x180] sm:$0xff]
      %v284 = vld [vmem:[%s1 + $0x188] sm:$0xff]
      %v285 = vld [vmem:[%s1 + $0x190] sm:$0xff]
      %v286 = vld [vmem:[%s1 + $0x198] sm:$0xff]
      %v287 = vld [vmem:[%s1 + $0x1a0] sm:$0xff]
      %v288 = vld [vmem:[%s1 + $0x1a8] sm:$0xff]
      %v289 = vld [vmem:[%s1 + $0x1b0] sm:$0xff]
      %v290 = vld [vmem:[%s1 + $0x1b8] sm:$0xff]
      %v291 = vld [vmem:[%s1 + $0x1c0] sm:$0xff]
      %v292 = vld [vmem:[%s1 + $0x1c8] sm:$0xff]
      %v293 = vld [vmem:[%s1 + $0x1d0] sm:$0xff]
      %v294 = vld [vmem:[%s1 + $0x1d8] sm:$0xff]
      %v295 = vld [vmem:[%s1 + $0x1e0] sm:$0xff]
      %v296 = vld [vmem:[%s1 + $0x1e8] sm:$0xff]
      %v297 = vld [vmem:[%s1 + $0x1f0] sm:$0xff]
      %v298 = vld [vmem:[%s1 + $0x1f8] sm:$0xff]
      %v299 = vld [vmem:[%s1 + $0x200] sm:$0xff]
      %v300 = vld [vmem:[%s1 + $0x208] sm:$0xff]
      %v301 = vld [vmem:[%s1 + $0x210] sm:$0xff]
      %v302 = vld [vmem:[%s1 + $0x218] sm:$0xff]
      %v303 = vld [vmem:[%s1 + $0x220] sm:$0xff]
      %v304 = vld [vmem:[%s1 + $0x228] sm:$0xff]
      %v305 = vld [vmem:[%s1 + $0x230] sm:$0xff]
      %v306 = vld [vmem:[%s1 + $0x238] sm:$0xff]
      %v307 = vld [vmem:[%s1 + $0x240] sm:$0xff]
      %v308 = vld [vmem:[%s1 + $0x248] sm:$0xff]
      %v309 = vld [vmem:[%s1 + $0x250] sm:$0xff]
      %v310 = vld [vmem:[%s1 + $0x258] sm:$0xff]
      %v311 = vld [vmem:[%s1 + $0x260] sm:$0xff]
      %v312 = vld [vmem:[%s1 + $0x268] sm:$0xff]
      %v313 = vld [vmem:[%s1 + $0x270] sm:$0xff]
      %v314 = vld [vmem:[%s1 + $0x278] sm:$0xff]
      %v315 = vld [vmem:[%s1 + $0x280] sm:$0xff]
      %v316 = vld [vmem:[%s1 + $0x288] sm:$0xff]
      %v317 = vld [vmem:[%s1 + $0x290] sm:$0xff]
      %v318 = vld [vmem:[%s1 + $0x298] sm:$0xff]
      %v319 = vld [vmem:[%s1 + $0x2a0] sm:$0xff]
      %v320 = vld [vmem:[%s1 + $0x2a8] sm:$0xff]
      %v321 = vld [vmem:[%s1 + $0x2b0] sm:$0xff]
      %v322 = vld [vmem:[%s1 + $0x2b8] sm:$0xff]
      %v323 = vld [vmem:[%s1 + $0x2c0] sm:$0xff]
      %v324 = vld [vmem:[%s1 + $0x2c8] sm:$0xff]
      %v325 = vld [vmem:[%s1 + $0x2d0] sm:$0xff]
      %v326 = vld [vmem:[%s1 + $0x2d8] sm:$0xff]
      %v327 = vld [vmem:[%s1 + $0x2e0] sm:$0xff]
      %v328 = vld [vmem:[%s1 + $0x2e8] sm:$0xff]
      %v329 = vld [vmem:[%s1 + $0x2f0] sm:$0xff]
      %v330 = vld [vmem:[%s1 + $0x2f8] sm:$0xff]
      %v331 = vld [vmem:[%s1 + $0x300] sm:$0xff]
      %v332 = vld [vmem:[%s1 + $0x308] sm:$0xff]
      %v333 = vld [vmem:[%s1 + $0x310] sm:$0xff]
      %v334 = vld [vmem:[%s1 + $0x318] sm:$0xff]
      %v335 = vld [vmem:[%s1 + $0x320] sm:$0xff]
      %v336 = vld [vmem:[%s1 + $0x328] sm:$0xff]
      %v337 = vld [vmem:[%s1 + $0x330] sm:$0xff]
      %v338 = vld [vmem:[%s1 + $0x338] sm:$0xff]
      %v339 = vld [vmem:[%s1 + $0x340] sm:$0xff]
      %v340 = vld [vmem:[%s1 + $0x348] sm:$0xff]
      %v341 = vld [vmem:[%s1 + $0x350] sm:$0xff]
      %v342 = vld [vmem:[%s1 + $0x358] sm:$0xff]
      %v343 = vld [vmem:[%s1 + $0x360] sm:$0xff]
      %v344 = vld [vmem:[%s1 + $0x368] sm:$0xff]
      %v345 = vld [vmem:[%s1 + $0x370] sm:$0xff]
      %v346 = vld [vmem:[%s1 + $0x378] sm:$0xff]
      %v347 = vld [vmem:[%s1 + $0x380] sm:$0xff]
      %v348 = vld [vmem:[%s1 + $0x388] sm:$0xff]
      %v349 = vld [vmem:[%s1 + $0x390] sm:$0xff]
      %v350 = vld [vmem:[%s1 + $0x398] sm:$0xff]
      %v351 = vld [vmem:[%s1 + $0x3a0] sm:$0xff]
      %v352 = vld [vmem:[%s1 + $0x3a8] sm:$0xff]
      %v353 = vld [vmem:[%s1 + $0x3b0] sm:$0xff]
      %v354 = vld [vmem:[%s1 + $0x3b8] sm:$0xff]
      %v355 = vld [vmem:[%s1 + $0x3c0] sm:$0xff]
      %v356 = vld [vmem:[%s1 + $0x3c8] sm:$0xff]
      %v357 = vld [vmem:[%s1 + $0x3d0] sm:$0xff]
      %v358 = vld [vmem:[%s1 + $0x3d8] sm:$0xff]
      %v359 = vld [vmem:[%s1 + $0x3e0] sm:$0xff]
      %v360 = vld [vmem:[%s1 + $0x3e8] sm:$0xff]
      %v361 = vld [vmem:[%s1 + $0x3f0] sm:$0xff]
      %v362 = vld [vmem:[%s1 + $0x3f8] sm:$0xff]
      %v363 = vld [vmem:[%s1 + $0x400] sm:$0xff]
      %v364 = vld [vmem:[%s1 + $0x408] sm:$0xff]
      %v365 = vld [vmem:[%s1 + $0x410] sm:$0xff]
      %v366 = vld [vmem:[%s1 + $0x418] sm:$0xff]
      %v367 = vld [vmem:[%s1 + $0x420] sm:$0xff]
      %v368 = vld [vmem:[%s1 + $0x428] sm:$0xff]
      %v369 = vld [vmem:[%s1 + $0x430] sm:$0xff]
      %v370 = vld [vmem:[%s1 + $0x438] sm:$0xff]
      %v371 = vld [vmem:[%s1 + $0x440] sm:$0xff]
      %v372 = vld [vmem:[%s1 + $0x448] sm:$0xff]
      %v373 = vld [vmem:[%s1 + $0x450] sm:$0xff]
      %v374 = vld [vmem:[%s1 + $0x458] sm:$0xff]
      %v375 = vld [vmem:[%s1 + $0x460] sm:$0xff]
      %v376 = vld [vmem:[%s1 + $0x468] sm:$0xff]
      %v377 = vld [vmem:[%s1 + $0x470] sm:$0xff]
      %v378 = vld [vmem:[%s1 + $0x478] sm:$0xff]
      %v379 = vld [vmem:[%s2] sm:$0xff]
      %v380 = vld [vmem:[%s2 + $0x8] sm:$0xff]
      %v381 = vld [vmem:[%s2 + $0x10] sm:$0xff]
      %v382 = vld [vmem:[%s2 + $0x18] sm:$0xff]
      %v383 = vld [vmem:[%s2 + $0x20] sm:$0xff]
      %v384 = vld [vmem:[%s2 + $0x28] sm:$0xff]
      %v385 = vld [vmem:[%s2 + $0x30] sm:$0xff]
      %v386 = vld [vmem:[%s2 + $0x38] sm:$0xff]
      %v387 = vld [vmem:[%s2 + $0x40] sm:$0xff]
      %v388 = vld [vmem:[%s2 + $0x48] sm:$0xff]
      %v389 = vld [vmem:[%s2 + $0x50] sm:$0xff]
      %v390 = vld [vmem:[%s2 + $0x58] sm:$0xff]
      %v391 = vld [vmem:[%s2 + $0x60] sm:$0xff]
      %v392 = vld [vmem:[%s2 + $0x68] sm:$0xff]
      %v393 = vld [vmem:[%s2 + $0x70] sm:$0xff]
      %v394 = vld [vmem:[%s2 + $0x78] sm:$0xff]
      %v395 = vld [vmem:[%s2 + $0x80] sm:$0xff]
      %v396 = vld [vmem:[%s2 + $0x88] sm:$0xff]
      %v397 = vld [vmem:[%s2 + $0x90] sm:$0xff]
      %v398 = vld [vmem:[%s2 + $0x98] sm:$0xff]
      %v399 = vld [vmem:[%s2 + $0xa0] sm:$0xff]
      %v400 = vld [vmem:[%s2 + $0xa8] sm:$0xff]
      %v401 = vld [vmem:[%s2 + $0xb0] sm:$0xff]
      %v402 = vld [vmem:[%s2 + $0xb8] sm:$0xff]
      %v403 = vld [vmem:[%s2 + $0xc0] sm:$0xff]
      %v404 = vld [vmem:[%s2 + $0xc8] sm:$0xff]
      %v405 = vld [vmem:[%s2 + $0xd0] sm:$0xff]
      %v406 = vld [vmem:[%s2 + $0xd8] sm:$0xff]
      %v407 = vld [vmem:[%s2 + $0xe0] sm:$0xff]
      %v408 = vld [vmem:[%s2 + $0xe8] sm:$0xff]
      %v409 = vld [vmem:[%s2 + $0xf0] sm:$0xff]
      %v410 = vld [vmem:[%s2 + $0xf8] sm:$0xff]
      %v411 = vld [vmem:[%s2 + $0x100] sm:$0xff]
      %v412 = vld [vmem:[%s2 + $0x108] sm:$0xff]
      %v413 = vld [vmem:[%s2 + $0x110] sm:$0xff]
      %v414 = vld [vmem:[%s2 + $0x118] sm:$0xff]
      %v415 = vld [vmem:[%s2 + $0x120] sm:$0xff]
      %v416 = vld [vmem:[%s2 + $0x128] sm:$0xff]
      %v417 = vld [vmem:[%s2 + $0x130] sm:$0xff]
      %v418 = vld [vmem:[%s2 + $0x138] sm:$0xff]
      %v419 = vld [vmem:[%s2 + $0x140] sm:$0xff]
      %v420 = vld [vmem:[%s2 + $0x148] sm:$0xff]
      %v421 = vld [vmem:[%s2 + $0x150] sm:$0xff]
      %v422 = vld [vmem:[%s2 + $0x158] sm:$0xff]
      %v423 = vld [vmem:[%s2 + $0x160] sm:$0xff]
      %v424 = vld [vmem:[%s2 + $0x168] sm:$0xff]
      %v425 = vld [vmem:[%s2 + $0x170] sm:$0xff]
      %v426 = vld [vmem:[%s2 + $0x178] sm:$0xff]
      %v427 = vld [vmem:[%s2 + $0x180] sm:$0xff]
      %v428 = vld [vmem:[%s2 + $0x188] sm:$0xff]
      %v429 = vld [vmem:[%s2 + $0x190] sm:$0xff]
      %v430 = vld [vmem:[%s2 + $0x198] sm:$0xff]
      %v431 = vld [vmem:[%s2 + $0x1a0] sm:$0xff]
      %v432 = vld [vmem:[%s2 + $0x1a8] sm:$0xff]
      %v433 = vld [vmem:[%s2 + $0x1b0] sm:$0xff]
      %v434 = vld [vmem:[%s2 + $0x1b8] sm:$0xff]
      %v435 = vld [vmem:[%s2 + $0x1c0] sm:$0xff]
      %v436 = vld [vmem:[%s2 + $0x1c8] sm:$0xff]
      %v437 = vld [vmem:[%s2 + $0x1d0] sm:$0xff]
      %v438 = vld [vmem:[%s2 + $0x1d8] sm:$0xff]
      %v439 = vld [vmem:[%s2 + $0x1e0] sm:$0xff]
      %v440 = vld [vmem:[%s2 + $0x1e8] sm:$0xff]
      %v441 = vld [vmem:[%s2 + $0x1f0] sm:$0xff]
      %v442 = vld [vmem:[%s2 + $0x1f8] sm:$0xff]
      %v443 = vld [vmem:[%s2 + $0x200] sm:$0xff]
      %v444 = vld [vmem:[%s2 + $0x208] sm:$0xff]
      %v445 = vld [vmem:[%s2 + $0x210] sm:$0xff]
      %v446 = vld [vmem:[%s2 + $0x218] sm:$0xff]
      %v447 = vld [vmem:[%s2 + $0x220] sm:$0xff]
      %v448 = vld [vmem:[%s2 + $0x228] sm:$0xff]
      %v449 = vld [vmem:[%s2 + $0x230] sm:$0xff]
      %v450 = vld [vmem:[%s2 + $0x238] sm:$0xff]
      %v451 = vld [vmem:[%s2 + $0x240] sm:$0xff]
      %v452 = vld [vmem:[%s2 + $0x248] sm:$0xff]
      %v453 = vld [vmem:[%s2 + $0x250] sm:$0xff]
      %v454 = vld [vmem:[%s2 + $0x258] sm:$0xff]
      %v455 = vld [vmem:[%s2 + $0x260] sm:$0xff]
      %v456 = vld [vmem:[%s2 + $0x268] sm:$0xff]
      %v457 = vld [vmem:[%s2 + $0x270] sm:$0xff]
      %v458 = vld [vmem:[%s2 + $0x278] sm:$0xff]
      %v459 = vld [vmem:[%s2 + $0x280] sm:$0xff]
      %v460 = vld [vmem:[%s2 + $0x288] sm:$0xff]
      %v461 = vld [vmem:[%s2 + $0x290] sm:$0xff]
      %v462 = vld [vmem:[%s2 + $0x298] sm:$0xff]
      %v463 = vld [vmem:[%s2 + $0x2a0] sm:$0xff]
      %v464 = vld [vmem:[%s2 + $0x2a8] sm:$0xff]
      %v465 = vld [vmem:[%s2 + $0x2b0] sm:$0xff]
      %v466 = vld [vmem:[%s2 + $0x2b8] sm:$0xff]
      %v467 = vld [vmem:[%s2 + $0x2c0] sm:$0xff]
      %v468 = vld [vmem:[%s2 + $0x2c8] sm:$0xff]
      %v469 = vld [vmem:[%s2 + $0x2d0] sm:$0xff]
      %v470 = vld [vmem:[%s2 + $0x2d8] sm:$0xff]
      %v471 = vld [vmem:[%s2 + $0x2e0] sm:$0xff]
      %v472 = vld [vmem:[%s2 + $0x2e8] sm:$0xff]
      %v473 = vld [vmem:[%s2 + $0x2f0] sm:$0xff]
      %v474 = vld [vmem:[%s2 + $0x2f8] sm:$0xff]
      %v475 = vld [vmem:[%s2 + $0x300] sm:$0xff]
      %v476 = vld [vmem:[%s2 + $0x308] sm:$0xff]
      %v477 = vld [vmem:[%s2 + $0x310] sm:$0xff]
      %v478 = vld [vmem:[%s2 + $0x318] sm:$0xff]
      %v479 = vld [vmem:[%s2 + $0x320] sm:$0xff]
      %v480 = vld [vmem:[%s2 + $0x328] sm:$0xff]
      %v481 = vld [vmem:[%s2 + $0x330] sm:$0xff]
      %v482 = vld [vmem:[%s2 + $0x338] sm:$0xff]
      %v483 = vld [vmem:[%s2 + $0x340] sm:$0xff]
      %v484 = vld [vmem:[%s2 + $0x348] sm:$0xff]
      %v485 = vld [vmem:[%s2 + $0x350] sm:$0xff]
      %v486 = vld [vmem:[%s2 + $0x358] sm:$0xff]
      %v487 = vld [vmem:[%s2 + $0x360] sm:$0xff]
      %v488 = vld [vmem:[%s2 + $0x368] sm:$0xff]
      %v489 = vld [vmem:[%s2 + $0x370] sm:$0xff]
      %v490 = vld [vmem:[%s2 + $0x378] sm:$0xff]
      %v491 = vld [vmem:[%s2 + $0x380] sm:$0xff]
      %v492 = vld [vmem:[%s2 + $0x388] sm:$0xff]
      %v493 = vld [vmem:[%s2 + $0x390] sm:$0xff]
      %v494 = vld [vmem:[%s2 + $0x398] sm:$0xff]
      %v495 = vld [vmem:[%s2 + $0x3a0] sm:$0xff]
      %v496 = vld [vmem:[%s2 + $0x3a8] sm:$0xff]
      %v497 = vld [vmem:[%s2 + $0x3b0] sm:$0xff]
      %v498 = vld [vmem:[%s2 + $0x3b8] sm:$0xff]
      %v499 = vld [vmem:[%s2 + $0x3c0] sm:$0xff]
      %v500 = vld [vmem:[%s2 + $0x3c8] sm:$0xff]
      %v501 = vld [vmem:[%s2 + $0x3d0] sm:$0xff]
      %v502 = vld [vmem:[%s2 + $0x3d8] sm:$0xff]
      %v503 = vld [vmem:[%s2 + $0x3e0] sm:$0xff]
      %v504 = vld [vmem:[%s2 + $0x3e8] sm:$0xff]
      %v505 = vld [vmem:[%s2 + $0x3f0] sm:$0xff]
      %v506 = vld [vmem:[%s2 + $0x3f8] sm:$0xff]
      %v507 = vld [vmem:[%s2 + $0x400] sm:$0xff]
      %v508 = vld [vmem:[%s2 + $0x408] sm:$0xff]
      %v509 = vld [vmem:[%s2 + $0x410] sm:$0xff]
      %v510 = vld [vmem:[%s2 + $0x418] sm:$0xff]
      %v511 = vld [vmem:[%s2 + $0x420] sm:$0xff]
      %v512 = vld [vmem:[%s2 + $0x428] sm:$0xff]
      %v513 = vld [vmem:[%s2 + $0x430] sm:$0xff]
      %v514 = vld [vmem:[%s2 + $0x438] sm:$0xff]
      %v515 = vld [vmem:[%s2 + $0x440] sm:$0xff]
      %v516 = vld [vmem:[%s2 + $0x448] sm:$0xff]
      %v517 = vld [vmem:[%s2 + $0x450] sm:$0xff]
      %v518 = vld [vmem:[%s2 + $0x458] sm:$0xff]
      %v519 = vld [vmem:[%s2 + $0x460] sm:$0xff]
      %v520 = vld [vmem:[%s2 + $0x468] sm:$0xff]
      %v521 = vld [vmem:[%s2 + $0x470] sm:$0xff]
      %v522 = vld [vmem:[%s2 + $0x478] sm:$0xff]
      %vm533 = vcmask 1046528
      %v534 = vrot.slane %v225, 1
      %v535 = vrot.slane %v230, 1
      %v536 = vsel %vm533, %v534, %v535
      %v537 = vrot.slane %v226, 1
      %v538 = vrot.slane %v231, 1
      %v539 = vsel %vm533, %v537, %v538
      %v540 = vrot.slane %v227, 1
      %v541 = vrot.slane %v232, 1
      %v542 = vsel %vm533, %v540, %v541
      %v543 = vrot.slane %v228, 1
      %v544 = vrot.slane %v233, 1
      %v545 = vsel %vm533, %v543, %v544
      %v546 = vrot.slane %v229, 1
      %v547 = vrot.slane %v234, 1
      %v548 = vsel %vm533, %v546, %v547
      %vm553 = vcmask 523264
      %v554 = vsel %vm553, %v548, 0
      %556 = vmatprep.subr.mxu0 %v410
      %557 = vmatpush1.msra.mxu0 %v409
      %558 = vmatprep.subr.mxu0 %v408
      %559 = vmatpush1.msra.mxu0 %v407
      %560 = vmatprep.subr.mxu0 %v406
      %561 = vmatpush1.msra.mxu0 %v405
      %562 = vmatprep.subr.mxu0 %v404
      %563 = vmatpush1.msra.mxu0 %v403
      %564 = vmatprep.subr.mxu0 %v402
      %565 = vmatpush1.msra.mxu0 %v401
      %566 = vmatprep.subr.mxu0 %v400
      %567 = vmatpush1.msra.mxu0 %v399
      %568 = vmatprep.subr.mxu0 %v398
      %569 = vmatpush1.msra.mxu0 %v397
      %570 = vmatprep.subr.mxu0 %v396
      %571 = vmatpush1.msra.mxu0 %v395
      %572 = vmatprep.subr.mxu0 %v394
      %573 = vmatpush1.msra.mxu0 %v393
      %574 = vmatprep.subr.mxu0 %v392
      %575 = vmatpush1.msra.mxu0 %v391
      %576 = vmatprep.subr.mxu0 %v390
      %577 = vmatpush1.msra.mxu0 %v389
      %578 = vmatprep.subr.mxu0 %v388
      %579 = vmatpush1.msra.mxu0 %v387
      %580 = vmatprep.subr.mxu0 %v386
      %581 = vmatpush1.msra.mxu0 %v385
      %582 = vmatprep.subr.mxu0 %v384
      %583 = vmatpush1.msra.mxu0 %v383
      %584 = vmatprep.subr.mxu0 %v382
      %585 = vmatpush1.msra.mxu0 %v381
      %586 = vmatprep.subr.mxu0 %v380
      %587 = vmatpush1.msra.mxu0 %v379
      %588 = vmatprep.subr.mxu0 %v442
      %589 = vmatpush2.msra.mxu0 %v441
      %590 = vmatprep.subr.mxu0 %v440
      %591 = vmatpush2.msra.mxu0 %v439
      %592 = vmatprep.subr.mxu0 %v438
      %593 = vmatpush2.msra.mxu0 %v437
      %594 = vmatprep.subr.mxu0 %v436
      %595 = vmatpush2.msra.mxu0 %v435
      %596 = vmatprep.subr.mxu0 %v434
      %597 = vmatpush2.msra.mxu0 %v433
      %598 = vmatprep.subr.mxu0 %v432
      %599 = vmatpush2.msra.mxu0 %v431
      %600 = vmatprep.subr.mxu0 %v430
      %601 = vmatpush2.msra.mxu0 %v429
      %602 = vmatprep.subr.mxu0 %v428
      %603 = vmatpush2.msra.mxu0 %v427
      %604 = vmatprep.subr.mxu0 %v426
      %605 = vmatpush2.msra.mxu0 %v425
      %606 = vmatprep.subr.mxu0 %v424
      %607 = vmatpush2.msra.mxu0 %v423
      %608 = vmatprep.subr.mxu0 %v422
      %609 = vmatpush2.msra.mxu0 %v421
      %610 = vmatprep.subr.mxu0 %v420
      %611 = vmatpush2.msra.mxu0 %v419
      %612 = vmatprep.subr.mxu0 %v418
      %613 = vmatpush2.msra.mxu0 %v417
      %614 = vmatprep.subr.mxu0 %v416
      %615 = vmatpush2.msra.mxu0 %v415
      %616 = vmatprep.subr.mxu0 %v414
      %617 = vmatpush2.msra.mxu0 %v413
      %618 = vmatprep.subr.mxu0 %v412
      %619 = vmatpush2.msra.mxu0 %v411
      %620 = vmatprep.mubr.f32.mxu0 %v539
      %621 = vmatmul.mubr.f32.gmra.mxu0 %v536
      %v622 = vpop.f32.mrf.mxu0
      %v623 = vadd.f32 0.0, %v622
      %v624 = vpop.f32.mrf.mxu0
      %v625 = vadd.f32 0.0, %v624
      %626 = vdwg.mxu0
      %627 = vmatprep.subr.mxu0 %v474
      %628 = vmatpush1.msra.mxu0 %v473
      %629 = vmatprep.subr.mxu0 %v472
      %630 = vmatpush1.msra.mxu0 %v471
      %631 = vmatprep.subr.mxu0 %v470
      %632 = vmatpush1.msra.mxu0 %v469
      %633 = vmatprep.subr.mxu0 %v468
      %634 = vmatpush1.msra.mxu0 %v467
      %635 = vmatprep.subr.mxu0 %v466
      %636 = vmatpush1.msra.mxu0 %v465
      %637 = vmatprep.subr.mxu0 %v464
      %638 = vmatpush1.msra.mxu0 %v463
      %639 = vmatprep.subr.mxu0 %v462
      %640 = vmatpush1.msra.mxu0 %v461
      %641 = vmatprep.subr.mxu0 %v460
      %642 = vmatpush1.msra.mxu0 %v459
      %643 = vmatprep.subr.mxu0 %v458
      %644 = vmatpush1.msra.mxu0 %v457
      %645 = vmatprep.subr.mxu0 %v456
      %646 = vmatpush1.msra.mxu0 %v455
      %647 = vmatprep.subr.mxu0 %v454
      %648 = vmatpush1.msra.mxu0 %v453
      %649 = vmatprep.subr.mxu0 %v452
      %650 = vmatpush1.msra.mxu0 %v451
      %651 = vmatprep.subr.mxu0 %v450
      %652 = vmatpush1.msra.mxu0 %v449
      %653 = vmatprep.subr.mxu0 %v448
      %654 = vmatpush1.msra.mxu0 %v447
      %655 = vmatprep.subr.mxu0 %v446
      %656 = vmatpush1.msra.mxu0 %v445
      %657 = vmatprep.subr.mxu0 %v444
      %658 = vmatpush1.msra.mxu0 %v443
      %659 = vmatprep.subr.mxu0 %v506
      %660 = vmatpush2.msra.mxu0 %v505
      %661 = vmatprep.subr.mxu0 %v504
      %662 = vmatpush2.msra.mxu0 %v503
      %663 = vmatprep.subr.mxu0 %v502
      %664 = vmatpush2.msra.mxu0 %v501
      %665 = vmatprep.subr.mxu0 %v500
      %666 = vmatpush2.msra.mxu0 %v499
      %667 = vmatprep.subr.mxu0 %v498
      %668 = vmatpush2.msra.mxu0 %v497
      %669 = vmatprep.subr.mxu0 %v496
      %670 = vmatpush2.msra.mxu0 %v495
      %671 = vmatprep.subr.mxu0 %v494
      %672 = vmatpush2.msra.mxu0 %v493
      %673 = vmatprep.subr.mxu0 %v492
      %674 = vmatpush2.msra.mxu0 %v491
      %675 = vmatprep.subr.mxu0 %v490
      %676 = vmatpush2.msra.mxu0 %v489
      %677 = vmatprep.subr.mxu0 %v488
      %678 = vmatpush2.msra.mxu0 %v487
      %679 = vmatprep.subr.mxu0 %v486
      %680 = vmatpush2.msra.mxu0 %v485
      %681 = vmatprep.subr.mxu0 %v484
      %682 = vmatpush2.msra.mxu0 %v483
      %683 = vmatprep.subr.mxu0 %v482
      %684 = vmatpush2.msra.mxu0 %v481
      %685 = vmatprep.subr.mxu0 %v480
      %686 = vmatpush2.msra.mxu0 %v479
      %687 = vmatprep.subr.mxu0 %v478
      %688 = vmatpush2.msra.mxu0 %v477
      %689 = vmatprep.subr.mxu0 %v476
      %690 = vmatpush2.msra.mxu0 %v475
      %691 = vmatprep.mubr.f32.mxu0 %v545
      %692 = vmatmul.mubr.f32.gmra.mxu0 %v542
      %v693 = vpop.f32.mrf.mxu0
      %v694 = vadd.f32 %v623, %v693
      %v695 = vpop.f32.mrf.mxu0
      %v696 = vadd.f32 %v625, %v695
      %697 = vdwg.mxu0
      %698 = vmatprep.subr.mxu0 0.0
      %699 = vmatpush1.msra.mxu0 0.0
      %700 = vmatprep.subr.mxu0 0.0
      %701 = vmatpush1.msra.mxu0 0.0
      %702 = vmatprep.subr.mxu0 0.0
      %703 = vmatpush1.msra.mxu0 0.0
      %704 = vmatprep.subr.mxu0 0.0
      %705 = vmatpush1.msra.mxu0 0.0
      %706 = vmatprep.subr.mxu0 0.0
      %707 = vmatpush1.msra.mxu0 0.0
      %708 = vmatprep.subr.mxu0 0.0
      %709 = vmatpush1.msra.mxu0 0.0
      %710 = vmatprep.subr.mxu0 0.0
      %711 = vmatpush1.msra.mxu0 0.0
      %712 = vmatprep.subr.mxu0 0.0
      %713 = vmatpush1.msra.mxu0 0.0
      %714 = vmatprep.subr.mxu0 %v522
      %715 = vmatpush1.msra.mxu0 %v521
      %716 = vmatprep.subr.mxu0 %v520
      %717 = vmatpush1.msra.mxu0 %v519
      %718 = vmatprep.subr.mxu0 %v518
      %719 = vmatpush1.msra.mxu0 %v517
      %720 = vmatprep.subr.mxu0 %v516
      %721 = vmatpush1.msra.mxu0 %v515
      %722 = vmatprep.subr.mxu0 %v514
      %723 = vmatpush1.msra.mxu0 %v513
      %724 = vmatprep.subr.mxu0 %v512
      %725 = vmatpush1.msra.mxu0 %v511
      %726 = vmatprep.subr.mxu0 %v510
      %727 = vmatpush1.msra.mxu0 %v509
      %728 = vmatprep.subr.mxu0 %v508
      %729 = vmatpush1.msra.mxu0 %v507
      %730 = vmatprep.subr.mxu0 0.0
      %731 = vmatpush2.msra.mxu0 0.0
      %732 = vmatprep.subr.mxu0 0.0
      %733 = vmatpush2.msra.mxu0 0.0
      %734 = vmatprep.subr.mxu0 0.0
      %735 = vmatpush2.msra.mxu0 0.0
      %736 = vmatprep.subr.mxu0 0.0
      %737 = vmatpush2.msra.mxu0 0.0
      %738 = vmatprep.subr.mxu0 0.0
      %739 = vmatpush2.msra.mxu0 0.0
      %740 = vmatprep.subr.mxu0 0.0
      %741 = vmatpush2.msra.mxu0 0.0
      %742 = vmatprep.subr.mxu0 0.0
      %743 = vmatpush2.msra.mxu0 0.0
      %744 = vmatprep.subr.mxu0 0.0
      %745 = vmatpush2.msra.mxu0 0.0
      %746 = vmatprep.subr.mxu0 0.0
      %747 = vmatpush2.msra.mxu0 0.0
      %748 = vmatprep.subr.mxu0 0.0
      %749 = vmatpush2.msra.mxu0 0.0
      %750 = vmatprep.subr.mxu0 0.0
      %751 = vmatpush2.msra.mxu0 0.0
      %752 = vmatprep.subr.mxu0 0.0
      %753 = vmatpush2.msra.mxu0 0.0
      %754 = vmatprep.subr.mxu0 0.0
      %755 = vmatpush2.msra.mxu0 0.0
      %756 = vmatprep.subr.mxu0 0.0
      %757 = vmatpush2.msra.mxu0 0.0
      %758 = vmatprep.subr.mxu0 0.0
      %759 = vmatpush2.msra.mxu0 0.0
      %760 = vmatprep.subr.mxu0 0.0
      %761 = vmatpush2.msra.mxu0 0.0
      %762 = vmatprep.mubr.f32.mxu0 0.0
      %763 = vmatmul.mubr.f32.gmra.mxu0 %v554
      %v764 = vpop.f32.mrf.mxu0
      %v765 = vadd.f32 %v694, %v764
      %v766 = vpop.f32.mrf.mxu0
      %v767 = vadd.f32 %v696, %v766
      %768 = vdwg.mxu0
      %v769 = vsel %vm553, %v229, 0
      %771 = vmatprep.subr.mxu0 %v266
      %772 = vmatpush1.msra.mxu0 %v265
      %773 = vmatprep.subr.mxu0 %v264
      %774 = vmatpush1.msra.mxu0 %v263
      %775 = vmatprep.subr.mxu0 %v262
      %776 = vmatpush1.msra.mxu0 %v261
      %777 = vmatprep.subr.mxu0 %v260
      %778 = vmatpush1.msra.mxu0 %v259
      %779 = vmatprep.subr.mxu0 %v258
      %780 = vmatpush1.msra.mxu0 %v257
      %781 = vmatprep.subr.mxu0 %v256
      %782 = vmatpush1.msra.mxu0 %v255
      %783 = vmatprep.subr.mxu0 %v254
      %784 = vmatpush1.msra.mxu0 %v253
      %785 = vmatprep.subr.mxu0 %v252
      %786 = vmatpush1.msra.mxu0 %v251
      %787 = vmatprep.subr.mxu0 %v250
      %788 = vmatpush1.msra.mxu0 %v249
      %789 = vmatprep.subr.mxu0 %v248
      %790 = vmatpush1.msra.mxu0 %v247
      %791 = vmatprep.subr.mxu0 %v246
      %792 = vmatpush1.msra.mxu0 %v245
      %793 = vmatprep.subr.mxu0 %v244
      %794 = vmatpush1.msra.mxu0 %v243
      %795 = vmatprep.subr.mxu0 %v242
      %796 = vmatpush1.msra.mxu0 %v241
      %797 = vmatprep.subr.mxu0 %v240
      %798 = vmatpush1.msra.mxu0 %v239
      %799 = vmatprep.subr.mxu0 %v238
      %800 = vmatpush1.msra.mxu0 %v237
      %801 = vmatprep.subr.mxu0 %v236
      %802 = vmatpush1.msra.mxu0 %v235
      %803 = vmatprep.subr.mxu0 %v298
      %804 = vmatpush2.msra.mxu0 %v297
      %805 = vmatprep.subr.mxu0 %v296
      %806 = vmatpush2.msra.mxu0 %v295
      %807 = vmatprep.subr.mxu0 %v294
      %808 = vmatpush2.msra.mxu0 %v293
      %809 = vmatprep.subr.mxu0 %v292
      %810 = vmatpush2.msra.mxu0 %v291
      %811 = vmatprep.subr.mxu0 %v290
      %812 = vmatpush2.msra.mxu0 %v289
      %813 = vmatprep.subr.mxu0 %v288
      %814 = vmatpush2.msra.mxu0 %v287
      %815 = vmatprep.subr.mxu0 %v286
      %816 = vmatpush2.msra.mxu0 %v285
      %817 = vmatprep.subr.mxu0 %v284
      %818 = vmatpush2.msra.mxu0 %v283
      %819 = vmatprep.subr.mxu0 %v282
      %820 = vmatpush2.msra.mxu0 %v281
      %821 = vmatprep.subr.mxu0 %v280
      %822 = vmatpush2.msra.mxu0 %v279
      %823 = vmatprep.subr.mxu0 %v278
      %824 = vmatpush2.msra.mxu0 %v277
      %825 = vmatprep.subr.mxu0 %v276
      %826 = vmatpush2.msra.mxu0 %v275
      %827 = vmatprep.subr.mxu0 %v274
      %828 = vmatpush2.msra.mxu0 %v273
      %829 = vmatprep.subr.mxu0 %v272
      %830 = vmatpush2.msra.mxu0 %v271
      %831 = vmatprep.subr.mxu0 %v270
      %832 = vmatpush2.msra.mxu0 %v269
      %833 = vmatprep.subr.mxu0 %v268
      %834 = vmatpush2.msra.mxu0 %v267
      %835 = vmatprep.mubr.f32.mxu0 %v226
      %836 = vmatmul.mubr.f32.gmra.mxu0 %v225
      %v837 = vpop.f32.mrf.mxu0
      %v838 = vadd.f32 %v765, %v837
      %v839 = vpop.f32.mrf.mxu0
      %v840 = vadd.f32 %v767, %v839
      %841 = vdwg.mxu0
      %842 = vmatprep.subr.mxu0 %v330
      %843 = vmatpush1.msra.mxu0 %v329
      %844 = vmatprep.subr.mxu0 %v328
      %845 = vmatpush1.msra.mxu0 %v327
      %846 = vmatprep.subr.mxu0 %v326
      %847 = vmatpush1.msra.mxu0 %v325
      %848 = vmatprep.subr.mxu0 %v324
      %849 = vmatpush1.msra.mxu0 %v323
      %850 = vmatprep.subr.mxu0 %v322
      %851 = vmatpush1.msra.mxu0 %v321
      %852 = vmatprep.subr.mxu0 %v320
      %853 = vmatpush1.msra.mxu0 %v319
      %854 = vmatprep.subr.mxu0 %v318
      %855 = vmatpush1.msra.mxu0 %v317
      %856 = vmatprep.subr.mxu0 %v316
      %857 = vmatpush1.msra.mxu0 %v315
      %858 = vmatprep.subr.mxu0 %v314
      %859 = vmatpush1.msra.mxu0 %v313
      %860 = vmatprep.subr.mxu0 %v312
      %861 = vmatpush1.msra.mxu0 %v311
      %862 = vmatprep.subr.mxu0 %v310
      %863 = vmatpush1.msra.mxu0 %v309
      %864 = vmatprep.subr.mxu0 %v308
      %865 = vmatpush1.msra.mxu0 %v307
      %866 = vmatprep.subr.mxu0 %v306
      %867 = vmatpush1.msra.mxu0 %v305
      %868 = vmatprep.subr.mxu0 %v304
      %869 = vmatpush1.msra.mxu0 %v303
      %870 = vmatprep.subr.mxu0 %v302
      %871 = vmatpush1.msra.mxu0 %v301
      %872 = vmatprep.subr.mxu0 %v300
      %873 = vmatpush1.msra.mxu0 %v299
      %874 = vmatprep.subr.mxu0 %v362
      %875 = vmatpush2.msra.mxu0 %v361
      %876 = vmatprep.subr.mxu0 %v360
      %877 = vmatpush2.msra.mxu0 %v359
      %878 = vmatprep.subr.mxu0 %v358
      %879 = vmatpush2.msra.mxu0 %v357
      %880 = vmatprep.subr.mxu0 %v356
      %881 = vmatpush2.msra.mxu0 %v355
      %882 = vmatprep.subr.mxu0 %v354
      %883 = vmatpush2.msra.mxu0 %v353
      %884 = vmatprep.subr.mxu0 %v352
      %885 = vmatpush2.msra.mxu0 %v351
      %886 = vmatprep.subr.mxu0 %v350
      %887 = vmatpush2.msra.mxu0 %v349
      %888 = vmatprep.subr.mxu0 %v348
      %889 = vmatpush2.msra.mxu0 %v347
      %890 = vmatprep.subr.mxu0 %v346
      %891 = vmatpush2.msra.mxu0 %v345
      %892 = vmatprep.subr.mxu0 %v344
      %893 = vmatpush2.msra.mxu0 %v343
      %894 = vmatprep.subr.mxu0 %v342
      %895 = vmatpush2.msra.mxu0 %v341
      %896 = vmatprep.subr.mxu0 %v340
      %897 = vmatpush2.msra.mxu0 %v339
      %898 = vmatprep.subr.mxu0 %v338
      %899 = vmatpush2.msra.mxu0 %v337
      %900 = vmatprep.subr.mxu0 %v336
      %901 = vmatpush2.msra.mxu0 %v335
      %902 = vmatprep.subr.mxu0 %v334
      %903 = vmatpush2.msra.mxu0 %v333
      %904 = vmatprep.subr.mxu0 %v332
      %905 = vmatpush2.msra.mxu0 %v331
      %906 = vmatprep.mubr.f32.mxu0 %v228
      %907 = vmatmul.mubr.f32.gmra.mxu0 %v227
      %v908 = vpop.f32.mrf.mxu0
      %v909 = vadd.f32 %v838, %v908
      %v910 = vpop.f32.mrf.mxu0
      %v911 = vadd.f32 %v840, %v910
      %912 = vdwg.mxu0
      %913 = vmatprep.subr.mxu0 0.0
      %914 = vmatpush1.msra.mxu0 0.0
      %915 = vmatprep.subr.mxu0 0.0
      %916 = vmatpush1.msra.mxu0 0.0
      %917 = vmatprep.subr.mxu0 0.0
      %918 = vmatpush1.msra.mxu0 0.0
      %919 = vmatprep.subr.mxu0 0.0
      %920 = vmatpush1.msra.mxu0 0.0
      %921 = vmatprep.subr.mxu0 0.0
      %922 = vmatpush1.msra.mxu0 0.0
      %923 = vmatprep.subr.mxu0 0.0
      %924 = vmatpush1.msra.mxu0 0.0
      %925 = vmatprep.subr.mxu0 0.0
      %926 = vmatpush1.msra.mxu0 0.0
      %927 = vmatprep.subr.mxu0 0.0
      %928 = vmatpush1.msra.mxu0 0.0
      %929 = vmatprep.subr.mxu0 %v378
      %930 = vmatpush1.msra.mxu0 %v377
      %931 = vmatprep.subr.mxu0 %v376
      %932 = vmatpush1.msra.mxu0 %v375
      %933 = vmatprep.subr.mxu0 %v374
      %934 = vmatpush1.msra.mxu0 %v373
      %935 = vmatprep.subr.mxu0 %v372
      %936 = vmatpush1.msra.mxu0 %v371
      %937 = vmatprep.subr.mxu0 %v370
      %938 = vmatpush1.msra.mxu0 %v369
      %939 = vmatprep.subr.mxu0 %v368
      %940 = vmatpush1.msra.mxu0 %v367
      %941 = vmatprep.subr.mxu0 %v366
      %942 = vmatpush1.msra.mxu0 %v365
      %943 = vmatprep.subr.mxu0 %v364
      %944 = vmatpush1.msra.mxu0 %v363
      %945 = vmatprep.subr.mxu0 0.0
      %946 = vmatpush2.msra.mxu0 0.0
      %947 = vmatprep.subr.mxu0 0.0
      %948 = vmatpush2.msra.mxu0 0.0
      %949 = vmatprep.subr.mxu0 0.0
      %950 = vmatpush2.msra.mxu0 0.0
      %951 = vmatprep.subr.mxu0 0.0
      %952 = vmatpush2.msra.mxu0 0.0
      %953 = vmatprep.subr.mxu0 0.0
      %954 = vmatpush2.msra.mxu0 0.0
      %955 = vmatprep.subr.mxu0 0.0
      %956 = vmatpush2.msra.mxu0 0.0
      %957 = vmatprep.subr.mxu0 0.0
      %958 = vmatpush2.msra.mxu0 0.0
      %959 = vmatprep.subr.mxu0 0.0
      %960 = vmatpush2.msra.mxu0 0.0
      %961 = vmatprep.subr.mxu0 0.0
      %962 = vmatpush2.msra.mxu0 0.0
      %963 = vmatprep.subr.mxu0 0.0
      %964 = vmatpush2.msra.mxu0 0.0
      %965 = vmatprep.subr.mxu0 0.0
      %966 = vmatpush2.msra.mxu0 0.0
      %967 = vmatprep.subr.mxu0 0.0
      %968 = vmatpush2.msra.mxu0 0.0
      %969 = vmatprep.subr.mxu0 0.0
      %970 = vmatpush2.msra.mxu0 0.0
      %971 = vmatprep.subr.mxu0 0.0
      %972 = vmatpush2.msra.mxu0 0.0
      %973 = vmatprep.subr.mxu0 0.0
      %974 = vmatpush2.msra.mxu0 0.0
      %975 = vmatprep.subr.mxu0 0.0
      %976 = vmatpush2.msra.mxu0 0.0
      %977 = vmatprep.mubr.f32.mxu0 0.0
      %978 = vmatmul.mubr.f32.gmra.mxu0 %v769
      %v979 = vpop.f32.mrf.mxu0
      %v980 = vadd.f32 %v909, %v979
      %v981 = vpop.f32.mrf.mxu0
      %v982 = vadd.f32 %v911, %v981
      %983 = vdwg.mxu0
      %v984 = vld [vmem:[%s3] sm:$0x3]
      %v986 = vlaneseq
      %v987 = vshrl.u32 %v986, 7
      %v988 = vsub.s32 0, %v987
      %v989 = vrot.slane %v984, %v988
      %v990 = vlaneseq
      %v991 = vshrl.u32 %v990, 7
      %v992 = vsub.s32 1, %v991
      %v993 = vrot.slane %v984, %v992
      %v996 = vmul.f32 %v980, %v989
      %v997 = vmul.f32 %v982, %v993
      %v998 = vld [vmem:[%s4] sm:$0x3]
      %v1000 = vlaneseq
      %v1001 = vshrl.u32 %v1000, 7
      %v1002 = vsub.s32 0, %v1001
      %v1003 = vrot.slane %v998, %v1002
      %v1004 = vlaneseq
      %v1005 = vshrl.u32 %v1004, 7
      %v1006 = vsub.s32 1, %v1005
      %v1007 = vrot.slane %v998, %v1006
      %v1010 = vadd.f32 %v996, %v1003
      %v1011 = vadd.f32 %v997, %v1007
      %v1012 = vmax.f32 %v1010, 0.0
      %v1013 = vmax.f32 %v1011, 0.0
      %1014 = vst [vmem:[%s224] sm:$0xff] %v1012
      %1015 = vst [vmem:[%s224 + $0x8] sm:$0xff] %v1013
      %p1016 = scmp.lt.s32.totalorder %s16, 1
      %s1017 = scalar_select %p1016, %s16, 1
      %s1018 = smul.addr %s1017, 2
      %s1019 = smul.addr %s1018, 8
      %s1020 = scalar_lea.vmem %s5, %s1019
      // Predicated region
      $region41: #{attention_net_forward.5} parent=39 // pred_check
        %p1021 = pneg %p144
      $region42: #{attention_net_forward.5} parent=39 // pred_check_branch
        %1023 = sbr.rel (%p1021) target = $region44
      $region43: #{attention_net_forward.5} parent=39 // pred_region
        _
      $region44: #{attention_net_forward.5} parent=39 // pred_fallthru
        _
    $region40: #{attention_net_forward.5} parent=5 // pred_fallthru
      _
    %p1024 = scmp.le.s32.totalorder 2, %s11
    // Predicated region
    $region45: #{attention_net_forward.5} parent=5 // pred_check
      %p1025 = pneg %p1024
    $region46: #{attention_net_forward.5} parent=5 // pred_check_branch
      %1027 = sbr.rel (%p1025) target = $region48
    $region47: #{attention_net_forward.5} parent=5 // pred_region
      %s1028 = ssub.s32 %s11, 2
      // Predicated region
      $region49: #{attention_net_forward.5} parent=47 // pred_check
        %p1029 = pneg %p150
      $region50: #{attention_net_forward.5} parent=47 // pred_check_branch
        %1031 = sbr.rel (%p1029) target = $region52
      $region51: #{attention_net_forward.5} parent=47 // pred_region
        %p1032 = scmp.lt.s32.totalorder %s17, 1
        %s1033 = scalar_select %p1032, %s17, 1
        %s1034 = smul.addr %s1033, 2
        %s1035 = smul.addr %s1034, 8
        %s1036 = scalar_lea.vmem %s5, %s1035
      $region52: #{attention_net_forward.5} parent=47 // pred_fallthru
        _
    $region48: #{attention_net_forward.5} parent=5 // pred_fallthru
      _
  $region6: #{attention_net_forward.5} parent=0 // loop_footer
    %s15 = sadd.s32 1, %s11
  $region7: #{attention_net_forward.5} parent=0 // loop_footer_branch
    %10 = sbr.rel target = $region3
  $region8: #{attention_net_forward.5} parent=0 // loop_exit
    _

// kernel: attention_net_forward.6
$region0: #{attention_net_forward.6}
  #allocation0 [shape = 'u32[]', space=smem, size = 0x4, offset = 0x4, fixed_abs, tag = 'smem constant byte address 0x4 - core index']
  #allocation1 [shape = 'u32[144,128]{1,0:T(1,128)}', space=vmem, size = 0x12000, scoped, tag = 'internal scratch']
  %s0 = inlined_call_operand.vmem [shape: f32[2,5,640], index: 0, kind: input, shape index: {}]
  %s1 = inlined_call_operand.vmem [shape: f32[640,192], index: 1, kind: input, shape index: {}]
  %s2 = inlined_call_operand.vmem [shape: f32[640,192], index: 2, kind: input, shape index: {}]
  %s3 = inlined_call_operand.vmem [shape: f32[1,192], index: 3, kind: input, shape index: {}]
  %s4 = inlined_call_operand.vmem [shape: f32[1,192], index: 4, kind: input, shape index: {}]
  %s5 = inlined_call_operand.vmem [shape: f32[192,48], index: 5, kind: input, shape index: {}]
  %s6 = inlined_call_operand.vmem [shape: f32[2,1,48], index: 6, kind: output, shape index: {}]
  %s7 = sld [smem:[#allocation0]]
  $region57: #{attention_net_forward.6} parent=0
    _
  %s9 = ssub.s32 1, %s7
  %s10 = scalar_select 0, %s9, %s7
  loop: start=0, step=1, limit=4
  $region2: #{attention_net_forward.6} parent=0 // loop_pre_header
    _
  $region3: #{attention_net_forward.6} parent=0 // loop_header
    %s12 = sphi 0, %s16
    %p13 = scmp.ge.s32.totalorder %s12, 4
    %s22 = sphi 0, %s24
    %s25 = sphi 0, %s22
    %s26 = sphi 0, %s25
    %s42 = sphi 0, %s26
    %s46 = sphi 0, %s46
    %s48 = sphi 0, %s46
    %s49 = sphi 0, %s48
    %s63 = sphi 0, %s49
    %s67 = sphi 0, %s67
    %s69 = sphi 0, %s67
    %s70 = sphi 0, %s69
    %s84 = sphi 0, %s70
    %s88 = sphi 0, %s88
    %s90 = sphi 0, %s88
    %s91 = sphi 0, %s90
    %s105 = sphi 0, %s91
    %s109 = sphi 0, %s109
    %s111 = sphi 0, %s109
    %s112 = sphi 0, %s111
    %s126 = sphi 0, %s112
    %s130 = sphi 0, %s130
    %s132 = sphi 0, %s130
    %s133 = sphi 0, %s132
    %s147 = sphi 0, %s133
    %s153 = sphi 0, %s155
    %s156 = sphi 0, %s153
    %s157 = sphi 0, %s156
    %s173 = sphi 0, %s157
  $region4: #{attention_net_forward.6} parent=0 // loop_header_branch
    %15 = sbr.rel (%p13) target = $region8
  $region5: #{attention_net_forward.6} parent=0 // loop_body
    %s17 = ssub.s32 %s12, 1
    %s18 = ssub.s32 %s12, 2
    %s19 = sadd.s32 %s12, 1
    %s20 = ssub.s32 %s12, %s19
    %p21 = scmp.eq.s32.totalorder %s20, 0
    %s23 = sadd.s32 %s22, 1
    %s24 = scalar_select %p21, %s22, %s23
    %p27 = pneg %p21
    %p28 = scmp.eq.s32.totalorder %s12, 1
    %p29 = por %p27, %p28
    %p30 = scmp.ne.s32.totalorder %s22, %s25
    %p31 = scmp.eq.s32.totalorder %s12, 0
    %p32 = por %p30, %p31
    %p33 = scmp.ne.s32.totalorder %s22, %s25
    %p34 = scmp.eq.s32.totalorder %s17, 1
    %p35 = por %p33, %p34
    %p36 = scmp.ne.s32.totalorder %s25, %s26
    %p37 = scmp.eq.s32.totalorder %s17, 0
    %p38 = por %p36, %p37
    %p39 = scmp.ne.s32.totalorder %s25, %s26
    %p40 = scmp.eq.s32.totalorder %s18, 1
    %p41 = por %p39, %p40
    %p43 = scmp.ne.s32.totalorder %s26, %s42
    %p44 = scmp.eq.s32.totalorder %s18, 0
    %p45 = por %p43, %p44
    %s47 = sadd.s32 %s46, 1
    %p50 = scmp.eq.s32.totalorder %s12, 1
    %p51 = scmp.ne.s32.totalorder %s46, %s48
    %p52 = scmp.eq.s32.totalorder %s12, 0
    %p53 = por %p51, %p52
    %p54 = scmp.ne.s32.totalorder %s46, %s48
    %p55 = scmp.eq.s32.totalorder %s17, 1
    %p56 = por %p54, %p55
    %p57 = scmp.ne.s32.totalorder %s48, %s49
    %p58 = scmp.eq.s32.totalorder %s17, 0
    %p59 = por %p57, %p58
    %p60 = scmp.ne.s32.totalorder %s48, %s49
    %p61 = scmp.eq.s32.totalorder %s18, 1
    %p62 = por %p60, %p61
    %p64 = scmp.ne.s32.totalorder %s49, %s63
    %p65 = scmp.eq.s32.totalorder %s18, 0
    %p66 = por %p64, %p65
    %s68 = sadd.s32 %s67, 1
    %p71 = scmp.eq.s32.totalorder %s12, 1
    %p72 = scmp.ne.s32.totalorder %s67, %s69
    %p73 = scmp.eq.s32.totalorder %s12, 0
    %p74 = por %p72, %p73
    %p75 = scmp.ne.s32.totalorder %s67, %s69
    %p76 = scmp.eq.s32.totalorder %s17, 1
    %p77 = por %p75, %p76
    %p78 = scmp.ne.s32.totalorder %s69, %s70
    %p79 = scmp.eq.s32.totalorder %s17, 0
    %p80 = por %p78, %p79
    %p81 = scmp.ne.s32.totalorder %s69, %s70
    %p82 = scmp.eq.s32.totalorder %s18, 1
    %p83 = por %p81, %p82
    %p85 = scmp.ne.s32.totalorder %s70, %s84
    %p86 = scmp.eq.s32.totalorder %s18, 0
    %p87 = por %p85, %p86
    %s89 = sadd.s32 %s88, 1
    %p92 = scmp.eq.s32.totalorder %s12, 1
    %p93 = scmp.ne.s32.totalorder %s88, %s90
    %p94 = scmp.eq.s32.totalorder %s12, 0
    %p95 = por %p93, %p94
    %p96 = scmp.ne.s32.totalorder %s88, %s90
    %p97 = scmp.eq.s32.totalorder %s17, 1
    %p98 = por %p96, %p97
    %p99 = scmp.ne.s32.totalorder %s90, %s91
    %p100 = scmp.eq.s32.totalorder %s17, 0
    %p101 = por %p99, %p100
    %p102 = scmp.ne.s32.totalorder %s90, %s91
    %p103 = scmp.eq.s32.totalorder %s18, 1
    %p104 = por %p102, %p103
    %p106 = scmp.ne.s32.totalorder %s91, %s105
    %p107 = scmp.eq.s32.totalorder %s18, 0
    %p108 = por %p106, %p107
    %s110 = sadd.s32 %s109, 1
    %p113 = scmp.eq.s32.totalorder %s12, 1
    %p114 = scmp.ne.s32.totalorder %s109, %s111
    %p115 = scmp.eq.s32.totalorder %s12, 0
    %p116 = por %p114, %p115
    %p117 = scmp.ne.s32.totalorder %s109, %s111
    %p118 = scmp.eq.s32.totalorder %s17, 1
    %p119 = por %p117, %p118
    %p120 = scmp.ne.s32.totalorder %s111, %s112
    %p121 = scmp.eq.s32.totalorder %s17, 0
    %p122 = por %p120, %p121
    %p123 = scmp.ne.s32.totalorder %s111, %s112
    %p124 = scmp.eq.s32.totalorder %s18, 1
    %p125 = por %p123, %p124
    %p127 = scmp.ne.s32.totalorder %s112, %s126
    %p128 = scmp.eq.s32.totalorder %s18, 0
    %p129 = por %p127, %p128
    %s131 = sadd.s32 %s130, 1
    %p134 = scmp.eq.s32.totalorder %s12, 1
    %p135 = scmp.ne.s32.totalorder %s130, %s132
    %p136 = scmp.eq.s32.totalorder %s12, 0
    %p137 = por %p135, %p136
    %p138 = scmp.ne.s32.totalorder %s130, %s132
    %p139 = scmp.eq.s32.totalorder %s17, 1
    %p140 = por %p138, %p139
    %p141 = scmp.ne.s32.totalorder %s132, %s133
    %p142 = scmp.eq.s32.totalorder %s17, 0
    %p143 = por %p141, %p142
    %p144 = scmp.ne.s32.totalorder %s132, %s133
    %p145 = scmp.eq.s32.totalorder %s18, 1
    %p146 = por %p144, %p145
    %p148 = scmp.ne.s32.totalorder %s133, %s147
    %p149 = scmp.eq.s32.totalorder %s18, 0
    %p150 = por %p148, %p149
    %s151 = ssub.s32 %s12, %s19
    %p152 = scmp.eq.s32.totalorder %s151, 0
    %s154 = sadd.s32 %s153, 1
    %s155 = scalar_select %p152, %s153, %s154
    %p158 = pneg %p152
    %p159 = scmp.eq.s32.totalorder %s12, 1
    %p160 = por %p158, %p159
    %p161 = scmp.ne.s32.totalorder %s153, %s156
    %p162 = scmp.eq.s32.totalorder %s12, 0
    %p163 = por %p161, %p162
    %p164 = scmp.ne.s32.totalorder %s153, %s156
    %p165 = scmp.eq.s32.totalorder %s17, 1
    %p166 = por %p164, %p165
    %p167 = scmp.ne.s32.totalorder %s156, %s157
    %p168 = scmp.eq.s32.totalorder %s17, 0
    %p169 = por %p167, %p168
    %p170 = scmp.ne.s32.totalorder %s156, %s157
    %p171 = scmp.eq.s32.totalorder %s18, 1
    %p172 = por %p170, %p171
    %p174 = scmp.ne.s32.totalorder %s157, %s173
    %p175 = scmp.eq.s32.totalorder %s18, 0
    %p176 = por %p174, %p175
    %p177 = scmp.le.s32.totalorder 1, %s12
    %p178 = scmp.lt.s32.totalorder %s12, 3
    %p179 = pnand %p177, %p178
    %p180 = pneg %p179
    // Predicated region
    $region9: #{attention_net_forward.6} parent=5 // pred_check
      _
    $region10: #{attention_net_forward.6} parent=5 // pred_check_branch
      %182 = sbr.rel (%p179) target = $region12
    $region11: #{attention_net_forward.6} parent=5 // pred_region
      %s183 = ssub.s32 %s12, 1
      // Predicated region
      $region13: #{attention_net_forward.6} parent=11 // pred_check
        %p184 = pneg %p59
      $region14: #{attention_net_forward.6} parent=11 // pred_check_branch
        %186 = sbr.rel (%p184) target = $region16
      $region15: #{attention_net_forward.6} parent=11 // pred_region
        _
      $region16: #{attention_net_forward.6} parent=11 // pred_fallthru
        _
      // Predicated region
      $region17: #{attention_net_forward.6} parent=11 // pred_check
        %p187 = pneg %p80
      $region18: #{attention_net_forward.6} parent=11 // pred_check_branch
        %189 = sbr.rel (%p187) target = $region20
      $region19: #{attention_net_forward.6} parent=11 // pred_region
        _
      $region20: #{attention_net_forward.6} parent=11 // pred_fallthru
        _
      // Predicated region
      $region21: #{attention_net_forward.6} parent=11 // pred_check
        %p190 = pneg %p101
      $region22: #{attention_net_forward.6} parent=11 // pred_check_branch
        %192 = sbr.rel (%p190) target = $region24
      $region23: #{attention_net_forward.6} parent=11 // pred_region
        _
      $region24: #{attention_net_forward.6} parent=11 // pred_fallthru
        _
      // Predicated region
      $region25: #{attention_net_forward.6} parent=11 // pred_check
        %p193 = pneg %p122
      $region26: #{attention_net_forward.6} parent=11 // pred_check_branch
        %195 = sbr.rel (%p193) target = $region28
      $region27: #{attention_net_forward.6} parent=11 // pred_region
        _
      $region28: #{attention_net_forward.6} parent=11 // pred_fallthru
        _
      // Predicated region
      $region29: #{attention_net_forward.6} parent=11 // pred_check
        %p196 = pneg %p143
      $region30: #{attention_net_forward.6} parent=11 // pred_check_branch
        %198 = sbr.rel (%p196) target = $region32
      $region31: #{attention_net_forward.6} parent=11 // pred_region
        _
      $region32: #{attention_net_forward.6} parent=11 // pred_fallthru
        _
    $region12: #{attention_net_forward.6} parent=5 // pred_fallthru
      _
    %p199 = scmp.lt.s32.totalorder %s12, 2
    // Predicated region
    $region33: #{attention_net_forward.6} parent=5 // pred_check
      %p200 = pneg %p199
    $region34: #{attention_net_forward.6} parent=5 // pred_check_branch
      %202 = sbr.rel (%p200) target = $region36
    $region35: #{attention_net_forward.6} parent=5 // pred_region
      // Predicated region
      $region37: #{attention_net_forward.6} parent=35 // pred_check
        %p203 = pneg %p32
      $region38: #{attention_net_forward.6} parent=35 // pred_check_branch
        %205 = sbr.rel (%p203) target = $region40
      $region39: #{attention_net_forward.6} parent=35 // pred_region
        %p206 = scmp.lt.s32.totalorder %s12, 1
        %s207 = scalar_select %p206, %s12, 1
        %s208 = smul.addr %s207, 5
        %s209 = smul.addr %s208, 8
        %s210 = scalar_lea.vmem %s0, %s209
      $region40: #{attention_net_forward.6} parent=35 // pred_fallthru
        _
    $region36: #{attention_net_forward.6} parent=5 // pred_fallthru
      _
    %p211 = scmp.le.s32.totalorder 1, %s12
    %p212 = scmp.lt.s32.totalorder %s12, 3
    %p213 = pnand %p211, %p212
    %p214 = pneg %p213
    // Predicated region
    $region41: #{attention_net_forward.6} parent=5 // pred_check
      _
    $region42: #{attention_net_forward.6} parent=5 // pred_check_branch
      %216 = sbr.rel (%p213) target = $region44
    $region43: #{attention_net_forward.6} parent=5 // pred_region
      %s217 = ssub.s32 %s12, 1
      %p218 = scmp.lt.s32.totalorder %s17, 1
      %s219 = scalar_select %p218, %s17, 1
      %s220 = smul.addr %s219, 5
      %s221 = smul.addr %s220, 8
      %s222 = scalar_lea.vmem %s0, %s221
      %p223 = pneg %p38
      %p224 = pneg %p35
      %p225 = pneg %p59
      %p226 = pneg %p56
      %p227 = pneg %p80
      %p228 = pneg %p77
      %p229 = pneg %p101
      %p230 = pneg %p98
      %p231 = pneg %p122
      %p232 = pneg %p119
      %p233 = pneg %p143
      %p234 = pneg %p140
      %p235 = pneg %p169
      %p236 = pneg %p166
      %p237 = scmp.lt.s32.totalorder %s17, 1
      %s238 = scalar_select %p237, %s17, 1
      %s239 = scalar_lea.vmem %s6, %s238
      %p240 = scmp.lt.s32.totalorder %s17, 1
      %s241 = scalar_select %p240, %s17, 1
      %s242 = smul.addr %s241, 5
      %s243 = smul.addr %s242, 8
      %s244 = scalar_lea.vmem %s0, %s243
      %p245 = scmp.lt.s32.totalorder %s17, 1
      %s246 = scalar_select %p245, %s17, 1
      %s247 = scalar_lea.vmem %s6, %s246
      %v248 = vld [vmem:[%s244] sm:$0x1f]
      %v249 = vld [vmem:[%s244 + $0x8] sm:$0x1f]
      %v250 = vld [vmem:[%s244 + $0x10] sm:$0x1f]
      %v251 = vld [vmem:[%s244 + $0x18] sm:$0x1f]
      %v252 = vld [vmem:[%s244 + $0x20] sm:$0x1f]
      %v253 = vld [vmem:[%s1] sm:$0xff]
      %v254 = vld [vmem:[%s1 + $0x8] sm:$0xff]
      %v255 = vld [vmem:[%s1 + $0x10] sm:$0xff]
      %v256 = vld [vmem:[%s1 + $0x18] sm:$0xff]
      %v257 = vld [vmem:[%s1 + $0x20] sm:$0xff]
      %v258 = vld [vmem:[%s1 + $0x28] sm:$0xff]
      %v259 = vld [vmem:[%s1 + $0x30] sm:$0xff]
      %v260 = vld [vmem:[%s1 + $0x38] sm:$0xff]
      %v261 = vld [vmem:[%s1 + $0x40] sm:$0xff]
      %v262 = vld [vmem:[%s1 + $0x48] sm:$0xff]
      %v263 = vld [vmem:[%s1 + $0x50] sm:$0xff]
      %v264 = vld [vmem:[%s1 + $0x58] sm:$0xff]
      %v265 = vld [vmem:[%s1 + $0x60] sm:$0xff]
      %v266 = vld [vmem:[%s1 + $0x68] sm:$0xff]
      %v267 = vld [vmem:[%s1 + $0x70] sm:$0xff]
      %v268 = vld [vmem:[%s1 + $0x78] sm:$0xff]
      %v269 = vld [vmem:[%s1 + $0x80] sm:$0xff]
      %v270 = vld [vmem:[%s1 + $0x88] sm:$0xff]
      %v271 = vld [vmem:[%s1 + $0x90] sm:$0xff]
      %v272 = vld [vmem:[%s1 + $0x98] sm:$0xff]
      %v273 = vld [vmem:[%s1 + $0xa0] sm:$0xff]
      %v274 = vld [vmem:[%s1 + $0xa8] sm:$0xff]
      %v275 = vld [vmem:[%s1 + $0xb0] sm:$0xff]
      %v276 = vld [vmem:[%s1 + $0xb8] sm:$0xff]
      %v277 = vld [vmem:[%s1 + $0xc0] sm:$0xff]
      %v278 = vld [vmem:[%s1 + $0xc8] sm:$0xff]
      %v279 = vld [vmem:[%s1 + $0xd0] sm:$0xff]
      %v280 = vld [vmem:[%s1 + $0xd8] sm:$0xff]
      %v281 = vld [vmem:[%s1 + $0xe0] sm:$0xff]
      %v282 = vld [vmem:[%s1 + $0xe8] sm:$0xff]
      %v283 = vld [vmem:[%s1 + $0xf0] sm:$0xff]
      %v284 = vld [vmem:[%s1 + $0xf8] sm:$0xff]
      %v285 = vld [vmem:[%s1 + $0x100] sm:$0xff]
      %v286 = vld [vmem:[%s1 + $0x108] sm:$0xff]
      %v287 = vld [vmem:[%s1 + $0x110] sm:$0xff]
      %v288 = vld [vmem:[%s1 + $0x118] sm:$0xff]
      %v289 = vld [vmem:[%s1 + $0x120] sm:$0xff]
      %v290 = vld [vmem:[%s1 + $0x128] sm:$0xff]
      %v291 = vld [vmem:[%s1 + $0x130] sm:$0xff]
      %v292 = vld [vmem:[%s1 + $0x138] sm:$0xff]
      %v293 = vld [vmem:[%s1 + $0x140] sm:$0xff]
      %v294 = vld [vmem:[%s1 + $0x148] sm:$0xff]
      %v295 = vld [vmem:[%s1 + $0x150] sm:$0xff]
      %v296 = vld [vmem:[%s1 + $0x158] sm:$0xff]
      %v297 = vld [vmem:[%s1 + $0x160] sm:$0xff]
      %v298 = vld [vmem:[%s1 + $0x168] sm:$0xff]
      %v299 = vld [vmem:[%s1 + $0x170] sm:$0xff]
      %v300 = vld [vmem:[%s1 + $0x178] sm:$0xff]
      %v301 = vld [vmem:[%s1 + $0x180] sm:$0xff]
      %v302 = vld [vmem:[%s1 + $0x188] sm:$0xff]
      %v303 = vld [vmem:[%s1 + $0x190] sm:$0xff]
      %v304 = vld [vmem:[%s1 + $0x198] sm:$0xff]
      %v305 = vld [vmem:[%s1 + $0x1a0] sm:$0xff]
      %v306 = vld [vmem:[%s1 + $0x1a8] sm:$0xff]
      %v307 = vld [vmem:[%s1 + $0x1b0] sm:$0xff]
      %v308 = vld [vmem:[%s1 + $0x1b8] sm:$0xff]
      %v309 = vld [vmem:[%s1 + $0x1c0] sm:$0xff]
      %v310 = vld [vmem:[%s1 + $0x1c8] sm:$0xff]
      %v311 = vld [vmem:[%s1 + $0x1d0] sm:$0xff]
      %v312 = vld [vmem:[%s1 + $0x1d8] sm:$0xff]
      %v313 = vld [vmem:[%s1 + $0x1e0] sm:$0xff]
      %v314 = vld [vmem:[%s1 + $0x1e8] sm:$0xff]
      %v315 = vld [vmem:[%s1 + $0x1f0] sm:$0xff]
      %v316 = vld [vmem:[%s1 + $0x1f8] sm:$0xff]
      %v317 = vld [vmem:[%s1 + $0x200] sm:$0xff]
      %v318 = vld [vmem:[%s1 + $0x208] sm:$0xff]
      %v319 = vld [vmem:[%s1 + $0x210] sm:$0xff]
      %v320 = vld [vmem:[%s1 + $0x218] sm:$0xff]
      %v321 = vld [vmem:[%s1 + $0x220] sm:$0xff]
      %v322 = vld [vmem:[%s1 + $0x228] sm:$0xff]
      %v323 = vld [vmem:[%s1 + $0x230] sm:$0xff]
      %v324 = vld [vmem:[%s1 + $0x238] sm:$0xff]
      %v325 = vld [vmem:[%s1 + $0x240] sm:$0xff]
      %v326 = vld [vmem:[%s1 + $0x248] sm:$0xff]
      %v327 = vld [vmem:[%s1 + $0x250] sm:$0xff]
      %v328 = vld [vmem:[%s1 + $0x258] sm:$0xff]
      %v329 = vld [vmem:[%s1 + $0x260] sm:$0xff]
      %v330 = vld [vmem:[%s1 + $0x268] sm:$0xff]
      %v331 = vld [vmem:[%s1 + $0x270] sm:$0xff]
      %v332 = vld [vmem:[%s1 + $0x278] sm:$0xff]
      %v333 = vld [vmem:[%s1 + $0x280] sm:$0xff]
      %v334 = vld [vmem:[%s1 + $0x288] sm:$0xff]
      %v335 = vld [vmem:[%s1 + $0x290] sm:$0xff]
      %v336 = vld [vmem:[%s1 + $0x298] sm:$0xff]
      %v337 = vld [vmem:[%s1 + $0x2a0] sm:$0xff]
      %v338 = vld [vmem:[%s1 + $0x2a8] sm:$0xff]
      %v339 = vld [vmem:[%s1 + $0x2b0] sm:$0xff]
      %v340 = vld [vmem:[%s1 + $0x2b8] sm:$0xff]
      %v341 = vld [vmem:[%s1 + $0x2c0] sm:$0xff]
      %v342 = vld [vmem:[%s1 + $0x2c8] sm:$0xff]
      %v343 = vld [vmem:[%s1 + $0x2d0] sm:$0xff]
      %v344 = vld [vmem:[%s1 + $0x2d8] sm:$0xff]
      %v345 = vld [vmem:[%s1 + $0x2e0] sm:$0xff]
      %v346 = vld [vmem:[%s1 + $0x2e8] sm:$0xff]
      %v347 = vld [vmem:[%s1 + $0x2f0] sm:$0xff]
      %v348 = vld [vmem:[%s1 + $0x2f8] sm:$0xff]
      %v349 = vld [vmem:[%s1 + $0x300] sm:$0xff]
      %v350 = vld [vmem:[%s1 + $0x308] sm:$0xff]
      %v351 = vld [vmem:[%s1 + $0x310] sm:$0xff]
      %v352 = vld [vmem:[%s1 + $0x318] sm:$0xff]
      %v353 = vld [vmem:[%s1 + $0x320] sm:$0xff]
      %v354 = vld [vmem:[%s1 + $0x328] sm:$0xff]
      %v355 = vld [vmem:[%s1 + $0x330] sm:$0xff]
      %v356 = vld [vmem:[%s1 + $0x338] sm:$0xff]
      %v357 = vld [vmem:[%s1 + $0x340] sm:$0xff]
      %v358 = vld [vmem:[%s1 + $0x348] sm:$0xff]
      %v359 = vld [vmem:[%s1 + $0x350] sm:$0xff]
      %v360 = vld [vmem:[%s1 + $0x358] sm:$0xff]
      %v361 = vld [vmem:[%s1 + $0x360] sm:$0xff]
      %v362 = vld [vmem:[%s1 + $0x368] sm:$0xff]
      %v363 = vld [vmem:[%s1 + $0x370] sm:$0xff]
      %v364 = vld [vmem:[%s1 + $0x378] sm:$0xff]
      %v365 = vld [vmem:[%s1 + $0x380] sm:$0xff]
      %v366 = vld [vmem:[%s1 + $0x388] sm:$0xff]
      %v367 = vld [vmem:[%s1 + $0x390] sm:$0xff]
      %v368 = vld [vmem:[%s1 + $0x398] sm:$0xff]
      %v369 = vld [vmem:[%s1 + $0x3a0] sm:$0xff]
      %v370 = vld [vmem:[%s1 + $0x3a8] sm:$0xff]
      %v371 = vld [vmem:[%s1 + $0x3b0] sm:$0xff]
      %v372 = vld [vmem:[%s1 + $0x3b8] sm:$0xff]
      %v373 = vld [vmem:[%s1 + $0x3c0] sm:$0xff]
      %v374 = vld [vmem:[%s1 + $0x3c8] sm:$0xff]
      %v375 = vld [vmem:[%s1 + $0x3d0] sm:$0xff]
      %v376 = vld [vmem:[%s1 + $0x3d8] sm:$0xff]
      %v377 = vld [vmem:[%s1 + $0x3e0] sm:$0xff]
      %v378 = vld [vmem:[%s1 + $0x3e8] sm:$0xff]
      %v379 = vld [vmem:[%s1 + $0x3f0] sm:$0xff]
      %v380 = vld [vmem:[%s1 + $0x3f8] sm:$0xff]
      %v381 = vld [vmem:[%s1 + $0x400] sm:$0xff]
      %v382 = vld [vmem:[%s1 + $0x408] sm:$0xff]
      %v383 = vld [vmem:[%s1 + $0x410] sm:$0xff]
      %v384 = vld [vmem:[%s1 + $0x418] sm:$0xff]
      %v385 = vld [vmem:[%s1 + $0x420] sm:$0xff]
      %v386 = vld [vmem:[%s1 + $0x428] sm:$0xff]
      %v387 = vld [vmem:[%s1 + $0x430] sm:$0xff]
      %v388 = vld [vmem:[%s1 + $0x438] sm:$0xff]
      %v389 = vld [vmem:[%s1 + $0x440] sm:$0xff]
      %v390 = vld [vmem:[%s1 + $0x448] sm:$0xff]
      %v391 = vld [vmem:[%s1 + $0x450] sm:$0xff]
      %v392 = vld [vmem:[%s1 + $0x458] sm:$0xff]
      %v393 = vld [vmem:[%s1 + $0x460] sm:$0xff]
      %v394 = vld [vmem:[%s1 + $0x468] sm:$0xff]
      %v395 = vld [vmem:[%s1 + $0x470] sm:$0xff]
      %v396 = vld [vmem:[%s1 + $0x478] sm:$0xff]
      %v397 = vld [vmem:[%s1 + $0x480] sm:$0xff]
      %v398 = vld [vmem:[%s1 + $0x488] sm:$0xff]
      %v399 = vld [vmem:[%s1 + $0x490] sm:$0xff]
      %v400 = vld [vmem:[%s1 + $0x498] sm:$0xff]
      %v401 = vld [vmem:[%s1 + $0x4a0] sm:$0xff]
      %v402 = vld [vmem:[%s1 + $0x4a8] sm:$0xff]
      %v403 = vld [vmem:[%s1 + $0x4b0] sm:$0xff]
      %v404 = vld [vmem:[%s1 + $0x4b8] sm:$0xff]
      %v405 = vld [vmem:[%s1 + $0x4c0] sm:$0xff]
      %v406 = vld [vmem:[%s1 + $0x4c8] sm:$0xff]
      %v407 = vld [vmem:[%s1 + $0x4d0] sm:$0xff]
      %v408 = vld [vmem:[%s1 + $0x4d8] sm:$0xff]
      %v409 = vld [vmem:[%s1 + $0x4e0] sm:$0xff]
      %v410 = vld [vmem:[%s1 + $0x4e8] sm:$0xff]
      %v411 = vld [vmem:[%s1 + $0x4f0] sm:$0xff]
      %v412 = vld [vmem:[%s1 + $0x4f8] sm:$0xff]
      %v413 = vld [vmem:[%s2] sm:$0xff]
      %v414 = vld [vmem:[%s2 + $0x8] sm:$0xff]
      %v415 = vld [vmem:[%s2 + $0x10] sm:$0xff]
      %v416 = vld [vmem:[%s2 + $0x18] sm:$0xff]
      %v417 = vld [vmem:[%s2 + $0x20] sm:$0xff]
      %v418 = vld [vmem:[%s2 + $0x28] sm:$0xff]
      %v419 = vld [vmem:[%s2 + $0x30] sm:$0xff]
      %v420 = vld [vmem:[%s2 + $0x38] sm:$0xff]
      %v421 = vld [vmem:[%s2 + $0x40] sm:$0xff]
      %v422 = vld [vmem:[%s2 + $0x48] sm:$0xff]
      %v423 = vld [vmem:[%s2 + $0x50] sm:$0xff]
      %v424 = vld [vmem:[%s2 + $0x58] sm:$0xff]
      %v425 = vld [vmem:[%s2 + $0x60] sm:$0xff]
      %v426 = vld [vmem:[%s2 + $0x68] sm:$0xff]
      %v427 = vld [vmem:[%s2 + $0x70] sm:$0xff]
      %v428 = vld [vmem:[%s2 + $0x78] sm:$0xff]
      %v429 = vld [vmem:[%s2 + $0x80] sm:$0xff]
      %v430 = vld [vmem:[%s2 + $0x88] sm:$0xff]
      %v431 = vld [vmem:[%s2 + $0x90] sm:$0xff]
      %v432 = vld [vmem:[%s2 + $0x98] sm:$0xff]
      %v433 = vld [vmem:[%s2 + $0xa0] sm:$0xff]
      %v434 = vld [vmem:[%s2 + $0xa8] sm:$0xff]
      %v435 = vld [vmem:[%s2 + $0xb0] sm:$0xff]
      %v436 = vld [vmem:[%s2 + $0xb8] sm:$0xff]
      %v437 = vld [vmem:[%s2 + $0xc0] sm:$0xff]
      %v438 = vld [vmem:[%s2 + $0xc8] sm:$0xff]
      %v439 = vld [vmem:[%s2 + $0xd0] sm:$0xff]
      %v440 = vld [vmem:[%s2 + $0xd8] sm:$0xff]
      %v441 = vld [vmem:[%s2 + $0xe0] sm:$0xff]
      %v442 = vld [vmem:[%s2 + $0xe8] sm:$0xff]
      %v443 = vld [vmem:[%s2 + $0xf0] sm:$0xff]
      %v444 = vld [vmem:[%s2 + $0xf8] sm:$0xff]
      %v445 = vld [vmem:[%s2 + $0x100] sm:$0xff]
      %v446 = vld [vmem:[%s2 + $0x108] sm:$0xff]
      %v447 = vld [vmem:[%s2 + $0x110] sm:$0xff]
      %v448 = vld [vmem:[%s2 + $0x118] sm:$0xff]
      %v449 = vld [vmem:[%s2 + $0x120] sm:$0xff]
      %v450 = vld [vmem:[%s2 + $0x128] sm:$0xff]
      %v451 = vld [vmem:[%s2 + $0x130] sm:$0xff]
      %v452 = vld [vmem:[%s2 + $0x138] sm:$0xff]
      %v453 = vld [vmem:[%s2 + $0x140] sm:$0xff]
      %v454 = vld [vmem:[%s2 + $0x148] sm:$0xff]
      %v455 = vld [vmem:[%s2 + $0x150] sm:$0xff]
      %v456 = vld [vmem:[%s2 + $0x158] sm:$0xff]
      %v457 = vld [vmem:[%s2 + $0x160] sm:$0xff]
      %v458 = vld [vmem:[%s2 + $0x168] sm:$0xff]
      %v459 = vld [vmem:[%s2 + $0x170] sm:$0xff]
      %v460 = vld [vmem:[%s2 + $0x178] sm:$0xff]
      %v461 = vld [vmem:[%s2 + $0x180] sm:$0xff]
      %v462 = vld [vmem:[%s2 + $0x188] sm:$0xff]
      %v463 = vld [vmem:[%s2 + $0x190] sm:$0xff]
      %v464 = vld [vmem:[%s2 + $0x198] sm:$0xff]
      %v465 = vld [vmem:[%s2 + $0x1a0] sm:$0xff]
      %v466 = vld [vmem:[%s2 + $0x1a8] sm:$0xff]
      %v467 = vld [vmem:[%s2 + $0x1b0] sm:$0xff]
      %v468 = vld [vmem:[%s2 + $0x1b8] sm:$0xff]
      %v469 = vld [vmem:[%s2 + $0x1c0] sm:$0xff]
      %v470 = vld [vmem:[%s2 + $0x1c8] sm:$0xff]
      %v471 = vld [vmem:[%s2 + $0x1d0] sm:$0xff]
      %v472 = vld [vmem:[%s2 + $0x1d8] sm:$0xff]
      %v473 = vld [vmem:[%s2 + $0x1e0] sm:$0xff]
      %v474 = vld [vmem:[%s2 + $0x1e8] sm:$0xff]
      %v475 = vld [vmem:[%s2 + $0x1f0] sm:$0xff]
      %v476 = vld [vmem:[%s2 + $0x1f8] sm:$0xff]
      %v477 = vld [vmem:[%s2 + $0x200] sm:$0xff]
      %v478 = vld [vmem:[%s2 + $0x208] sm:$0xff]
      %v479 = vld [vmem:[%s2 + $0x210] sm:$0xff]
      %v480 = vld [vmem:[%s2 + $0x218] sm:$0xff]
      %v481 = vld [vmem:[%s2 + $0x220] sm:$0xff]
      %v482 = vld [vmem:[%s2 + $0x228] sm:$0xff]
      %v483 = vld [vmem:[%s2 + $0x230] sm:$0xff]
      %v484 = vld [vmem:[%s2 + $0x238] sm:$0xff]
      %v485 = vld [vmem:[%s2 + $0x240] sm:$0xff]
      %v486 = vld [vmem:[%s2 + $0x248] sm:$0xff]
      %v487 = vld [vmem:[%s2 + $0x250] sm:$0xff]
      %v488 = vld [vmem:[%s2 + $0x258] sm:$0xff]
      %v489 = vld [vmem:[%s2 + $0x260] sm:$0xff]
      %v490 = vld [vmem:[%s2 + $0x268] sm:$0xff]
      %v491 = vld [vmem:[%s2 + $0x270] sm:$0xff]
      %v492 = vld [vmem:[%s2 + $0x278] sm:$0xff]
      %v493 = vld [vmem:[%s2 + $0x280] sm:$0xff]
      %v494 = vld [vmem:[%s2 + $0x288] sm:$0xff]
      %v495 = vld [vmem:[%s2 + $0x290] sm:$0xff]
      %v496 = vld [vmem:[%s2 + $0x298] sm:$0xff]
      %v497 = vld [vmem:[%s2 + $0x2a0] sm:$0xff]
      %v498 = vld [vmem:[%s2 + $0x2a8] sm:$0xff]
      %v499 = vld [vmem:[%s2 + $0x2b0] sm:$0xff]
      %v500 = vld [vmem:[%s2 + $0x2b8] sm:$0xff]
      %v501 = vld [vmem:[%s2 + $0x2c0] sm:$0xff]
      %v502 = vld [vmem:[%s2 + $0x2c8] sm:$0xff]
      %v503 = vld [vmem:[%s2 + $0x2d0] sm:$0xff]
      %v504 = vld [vmem:[%s2 + $0x2d8] sm:$0xff]
      %v505 = vld [vmem:[%s2 + $0x2e0] sm:$0xff]
      %v506 = vld [vmem:[%s2 + $0x2e8] sm:$0xff]
      %v507 = vld [vmem:[%s2 + $0x2f0] sm:$0xff]
      %v508 = vld [vmem:[%s2 + $0x2f8] sm:$0xff]
      %v509 = vld [vmem:[%s2 + $0x300] sm:$0xff]
      %v510 = vld [vmem:[%s2 + $0x308] sm:$0xff]
      %v511 = vld [vmem:[%s2 + $0x310] sm:$0xff]
      %v512 = vld [vmem:[%s2 + $0x318] sm:$0xff]
      %v513 = vld [vmem:[%s2 + $0x320] sm:$0xff]
      %v514 = vld [vmem:[%s2 + $0x328] sm:$0xff]
      %v515 = vld [vmem:[%s2 + $0x330] sm:$0xff]
      %v516 = vld [vmem:[%s2 + $0x338] sm:$0xff]
      %v517 = vld [vmem:[%s2 + $0x340] sm:$0xff]
      %v518 = vld [vmem:[%s2 + $0x348] sm:$0xff]
      %v519 = vld [vmem:[%s2 + $0x350] sm:$0xff]
      %v520 = vld [vmem:[%s2 + $0x358] sm:$0xff]
      %v521 = vld [vmem:[%s2 + $0x360] sm:$0xff]
      %v522 = vld [vmem:[%s2 + $0x368] sm:$0xff]
      %v523 = vld [vmem:[%s2 + $0x370] sm:$0xff]
      %v524 = vld [vmem:[%s2 + $0x378] sm:$0xff]
      %v525 = vld [vmem:[%s2 + $0x380] sm:$0xff]
      %v526 = vld [vmem:[%s2 + $0x388] sm:$0xff]
      %v527 = vld [vmem:[%s2 + $0x390] sm:$0xff]
      %v528 = vld [vmem:[%s2 + $0x398] sm:$0xff]
      %v529 = vld [vmem:[%s2 + $0x3a0] sm:$0xff]
      %v530 = vld [vmem:[%s2 + $0x3a8] sm:$0xff]
      %v531 = vld [vmem:[%s2 + $0x3b0] sm:$0xff]
      %v532 = vld [vmem:[%s2 + $0x3b8] sm:$0xff]
      %v533 = vld [vmem:[%s2 + $0x3c0] sm:$0xff]
      %v534 = vld [vmem:[%s2 + $0x3c8] sm:$0xff]
      %v535 = vld [vmem:[%s2 + $0x3d0] sm:$0xff]
      %v536 = vld [vmem:[%s2 + $0x3d8] sm:$0xff]
      %v537 = vld [vmem:[%s2 + $0x3e0] sm:$0xff]
      %v538 = vld [vmem:[%s2 + $0x3e8] sm:$0xff]
      %v539 = vld [vmem:[%s2 + $0x3f0] sm:$0xff]
      %v540 = vld [vmem:[%s2 + $0x3f8] sm:$0xff]
      %v541 = vld [vmem:[%s2 + $0x400] sm:$0xff]
      %v542 = vld [vmem:[%s2 + $0x408] sm:$0xff]
      %v543 = vld [vmem:[%s2 + $0x410] sm:$0xff]
      %v544 = vld [vmem:[%s2 + $0x418] sm:$0xff]
      %v545 = vld [vmem:[%s2 + $0x420] sm:$0xff]
      %v546 = vld [vmem:[%s2 + $0x428] sm:$0xff]
      %v547 = vld [vmem:[%s2 + $0x430] sm:$0xff]
      %v548 = vld [vmem:[%s2 + $0x438] sm:$0xff]
      %v549 = vld [vmem:[%s2 + $0x440] sm:$0xff]
      %v550 = vld [vmem:[%s2 + $0x448] sm:$0xff]
      %v551 = vld [vmem:[%s2 + $0x450] sm:$0xff]
      %v552 = vld [vmem:[%s2 + $0x458] sm:$0xff]
      %v553 = vld [vmem:[%s2 + $0x460] sm:$0xff]
      %v554 = vld [vmem:[%s2 + $0x468] sm:$0xff]
      %v555 = vld [vmem:[%s2 + $0x470] sm:$0xff]
      %v556 = vld [vmem:[%s2 + $0x478] sm:$0xff]
      %v557 = vld [vmem:[%s2 + $0x480] sm:$0xff]
      %v558 = vld [vmem:[%s2 + $0x488] sm:$0xff]
      %v559 = vld [vmem:[%s2 + $0x490] sm:$0xff]
      %v560 = vld [vmem:[%s2 + $0x498] sm:$0xff]
      %v561 = vld [vmem:[%s2 + $0x4a0] sm:$0xff]
      %v562 = vld [vmem:[%s2 + $0x4a8] sm:$0xff]
      %v563 = vld [vmem:[%s2 + $0x4b0] sm:$0xff]
      %v564 = vld [vmem:[%s2 + $0x4b8] sm:$0xff]
      %v565 = vld [vmem:[%s2 + $0x4c0] sm:$0xff]
      %v566 = vld [vmem:[%s2 + $0x4c8] sm:$0xff]
      %v567 = vld [vmem:[%s2 + $0x4d0] sm:$0xff]
      %v568 = vld [vmem:[%s2 + $0x4d8] sm:$0xff]
      %v569 = vld [vmem:[%s2 + $0x4e0] sm:$0xff]
      %v570 = vld [vmem:[%s2 + $0x4e8] sm:$0xff]
      %v571 = vld [vmem:[%s2 + $0x4f0] sm:$0xff]
      %v572 = vld [vmem:[%s2 + $0x4f8] sm:$0xff]
      %v578 = vrot.slane %v248, 1
      %v579 = vrot.slane %v249, 1
      %v580 = vrot.slane %v250, 1
      %v581 = vrot.slane %v251, 1
      %v582 = vrot.slane %v252, 1
      %588 = vmatprep.subr.mxu0 %v444
      %589 = vmatpush1.msra.mxu0 %v443
      %590 = vmatprep.subr.mxu0 %v442
      %591 = vmatpush1.msra.mxu0 %v441
      %592 = vmatprep.subr.mxu0 %v440
      %593 = vmatpush1.msra.mxu0 %v439
      %594 = vmatprep.subr.mxu0 %v438
      %595 = vmatpush1.msra.mxu0 %v437
      %596 = vmatprep.subr.mxu0 %v436
      %597 = vmatpush1.msra.mxu0 %v435
      %598 = vmatprep.subr.mxu0 %v434
      %599 = vmatpush1.msra.mxu0 %v433
      %600 = vmatprep.subr.mxu0 %v432
      %601 = vmatpush1.msra.mxu0 %v431
      %602 = vmatprep.subr.mxu0 %v430
      %603 = vmatpush1.msra.mxu0 %v429
      %604 = vmatprep.subr.mxu0 %v428
      %605 = vmatpush1.msra.mxu0 %v427
      %606 = vmatprep.subr.mxu0 %v426
      %607 = vmatpush1.msra.mxu0 %v425
      %608 = vmatprep.subr.mxu0 %v424
      %609 = vmatpush1.msra.mxu0 %v423
      %610 = vmatprep.subr.mxu0 %v422
      %611 = vmatpush1.msra.mxu0 %v421
      %612 = vmatprep.subr.mxu0 %v420
      %613 = vmatpush1.msra.mxu0 %v419
      %614 = vmatprep.subr.mxu0 %v418
      %615 = vmatpush1.msra.mxu0 %v417
      %616 = vmatprep.subr.mxu0 %v416
      %617 = vmatpush1.msra.mxu0 %v415
      %618 = vmatprep.subr.mxu0 %v414
      %619 = vmatpush1.msra.mxu0 %v413
      %620 = vmatprep.subr.mxu0 %v476
      %621 = vmatpush2.msra.mxu0 %v475
      %622 = vmatprep.subr.mxu0 %v474
      %623 = vmatpush2.msra.mxu0 %v473
      %624 = vmatprep.subr.mxu0 %v472
      %625 = vmatpush2.msra.mxu0 %v471
      %626 = vmatprep.subr.mxu0 %v470
      %627 = vmatpush2.msra.mxu0 %v469
      %628 = vmatprep.subr.mxu0 %v468
      %629 = vmatpush2.msra.mxu0 %v467
      %630 = vmatprep.subr.mxu0 %v466
      %631 = vmatpush2.msra.mxu0 %v465
      %632 = vmatprep.subr.mxu0 %v464
      %633 = vmatpush2.msra.mxu0 %v463
      %634 = vmatprep.subr.mxu0 %v462
      %635 = vmatpush2.msra.mxu0 %v461
      %636 = vmatprep.subr.mxu0 %v460
      %637 = vmatpush2.msra.mxu0 %v459
      %638 = vmatprep.subr.mxu0 %v458
      %639 = vmatpush2.msra.mxu0 %v457
      %640 = vmatprep.subr.mxu0 %v456
      %641 = vmatpush2.msra.mxu0 %v455
      %642 = vmatprep.subr.mxu0 %v454
      %643 = vmatpush2.msra.mxu0 %v453
      %644 = vmatprep.subr.mxu0 %v452
      %645 = vmatpush2.msra.mxu0 %v451
      %646 = vmatprep.subr.mxu0 %v450
      %647 = vmatpush2.msra.mxu0 %v449
      %648 = vmatprep.subr.mxu0 %v448
      %649 = vmatpush2.msra.mxu0 %v447
      %650 = vmatprep.subr.mxu0 %v446
      %651 = vmatpush2.msra.mxu0 %v445
      %652 = vmatprep.mubr.f32.mxu0 %v579
      %653 = vmatmul.mubr.f32.gmra.mxu0 %v578
      %v654 = vpop.f32.mrf.mxu0
      %v655 = vadd.f32 0.0, %v654
      %v656 = vpop.f32.mrf.mxu0
      %v657 = vadd.f32 0.0, %v656
      %658 = vdwg.mxu0
      %659 = vmatprep.subr.mxu0 %v508
      %660 = vmatpush1.msra.mxu0 %v507
      %661 = vmatprep.subr.mxu0 %v506
      %662 = vmatpush1.msra.mxu0 %v505
      %663 = vmatprep.subr.mxu0 %v504
      %664 = vmatpush1.msra.mxu0 %v503
      %665 = vmatprep.subr.mxu0 %v502
      %666 = vmatpush1.msra.mxu0 %v501
      %667 = vmatprep.subr.mxu0 %v500
      %668 = vmatpush1.msra.mxu0 %v499
      %669 = vmatprep.subr.mxu0 %v498
      %670 = vmatpush1.msra.mxu0 %v497
      %671 = vmatprep.subr.mxu0 %v496
      %672 = vmatpush1.msra.mxu0 %v495
      %673 = vmatprep.subr.mxu0 %v494
      %674 = vmatpush1.msra.mxu0 %v493
      %675 = vmatprep.subr.mxu0 %v492
      %676 = vmatpush1.msra.mxu0 %v491
      %677 = vmatprep.subr.mxu0 %v490
      %678 = vmatpush1.msra.mxu0 %v489
      %679 = vmatprep.subr.mxu0 %v488
      %680 = vmatpush1.msra.mxu0 %v487
      %681 = vmatprep.subr.mxu0 %v486
      %682 = vmatpush1.msra.mxu0 %v485
      %683 = vmatprep.subr.mxu0 %v484
      %684 = vmatpush1.msra.mxu0 %v483
      %685 = vmatprep.subr.mxu0 %v482
      %686 = vmatpush1.msra.mxu0 %v481
      %687 = vmatprep.subr.mxu0 %v480
      %688 = vmatpush1.msra.mxu0 %v479
      %689 = vmatprep.subr.mxu0 %v478
      %690 = vmatpush1.msra.mxu0 %v477
      %691 = vmatprep.subr.mxu0 %v540
      %692 = vmatpush2.msra.mxu0 %v539
      %693 = vmatprep.subr.mxu0 %v538
      %694 = vmatpush2.msra.mxu0 %v537
      %695 = vmatprep.subr.mxu0 %v536
      %696 = vmatpush2.msra.mxu0 %v535
      %697 = vmatprep.subr.mxu0 %v534
      %698 = vmatpush2.msra.mxu0 %v533
      %699 = vmatprep.subr.mxu0 %v532
      %700 = vmatpush2.msra.mxu0 %v531
      %701 = vmatprep.subr.mxu0 %v530
      %702 = vmatpush2.msra.mxu0 %v529
      %703 = vmatprep.subr.mxu0 %v528
      %704 = vmatpush2.msra.mxu0 %v527
      %705 = vmatprep.subr.mxu0 %v526
      %706 = vmatpush2.msra.mxu0 %v525
      %707 = vmatprep.subr.mxu0 %v524
      %708 = vmatpush2.msra.mxu0 %v523
      %709 = vmatprep.subr.mxu0 %v522
      %710 = vmatpush2.msra.mxu0 %v521
      %711 = vmatprep.subr.mxu0 %v520
      %712 = vmatpush2.msra.mxu0 %v519
      %713 = vmatprep.subr.mxu0 %v518
      %714 = vmatpush2.msra.mxu0 %v517
      %715 = vmatprep.subr.mxu0 %v516
      %716 = vmatpush2.msra.mxu0 %v515
      %717 = vmatprep.subr.mxu0 %v514
      %718 = vmatpush2.msra.mxu0 %v513
      %719 = vmatprep.subr.mxu0 %v512
      %720 = vmatpush2.msra.mxu0 %v511
      %721 = vmatprep.subr.mxu0 %v510
      %722 = vmatpush2.msra.mxu0 %v509
      %723 = vmatprep.mubr.f32.mxu0 %v581
      %724 = vmatmul.mubr.f32.gmra.mxu0 %v580
      %v725 = vpop.f32.mrf.mxu0
      %v726 = vadd.f32 %v655, %v725
      %v727 = vpop.f32.mrf.mxu0
      %v728 = vadd.f32 %v657, %v727
      %729 = vdwg.mxu0
      %730 = vmatprep.subr.mxu0 %v572
      %731 = vmatpush1.msra.mxu0 %v571
      %732 = vmatprep.subr.mxu0 %v570
      %733 = vmatpush1.msra.mxu0 %v569
      %734 = vmatprep.subr.mxu0 %v568
      %735 = vmatpush1.msra.mxu0 %v567
      %736 = vmatprep.subr.mxu0 %v566
      %737 = vmatpush1.msra.mxu0 %v565
      %738 = vmatprep.subr.mxu0 %v564
      %739 = vmatpush1.msra.mxu0 %v563
      %740 = vmatprep.subr.mxu0 %v562
      %741 = vmatpush1.msra.mxu0 %v561
      %742 = vmatprep.subr.mxu0 %v560
      %743 = vmatpush1.msra.mxu0 %v559
      %744 = vmatprep.subr.mxu0 %v558
      %745 = vmatpush1.msra.mxu0 %v557
      %746 = vmatprep.subr.mxu0 %v556
      %747 = vmatpush1.msra.mxu0 %v555
      %748 = vmatprep.subr.mxu0 %v554
      %749 = vmatpush1.msra.mxu0 %v553
      %750 = vmatprep.subr.mxu0 %v552
      %751 = vmatpush1.msra.mxu0 %v551
      %752 = vmatprep.subr.mxu0 %v550
      %753 = vmatpush1.msra.mxu0 %v549
      %754 = vmatprep.subr.mxu0 %v548
      %755 = vmatpush1.msra.mxu0 %v547
      %756 = vmatprep.subr.mxu0 %v546
      %757 = vmatpush1.msra.mxu0 %v545
      %758 = vmatprep.subr.mxu0 %v544
      %759 = vmatpush1.msra.mxu0 %v543
      %760 = vmatprep.subr.mxu0 %v542
      %761 = vmatpush1.msra.mxu0 %v541
      %762 = vmatprep.subr.mxu0 0.0
      %763 = vmatpush2.msra.mxu0 0.0
      %764 = vmatprep.subr.mxu0 0.0
      %765 = vmatpush2.msra.mxu0 0.0
      %766 = vmatprep.subr.mxu0 0.0
      %767 = vmatpush2.msra.mxu0 0.0
      %768 = vmatprep.subr.mxu0 0.0
      %769 = vmatpush2.msra.mxu0 0.0
      %770 = vmatprep.subr.mxu0 0.0
      %771 = vmatpush2.msra.mxu0 0.0
      %772 = vmatprep.subr.mxu0 0.0
      %773 = vmatpush2.msra.mxu0 0.0
      %774 = vmatprep.subr.mxu0 0.0
      %775 = vmatpush2.msra.mxu0 0.0
      %776 = vmatprep.subr.mxu0 0.0
      %777 = vmatpush2.msra.mxu0 0.0
      %778 = vmatprep.subr.mxu0 0.0
      %779 = vmatpush2.msra.mxu0 0.0
      %780 = vmatprep.subr.mxu0 0.0
      %781 = vmatpush2.msra.mxu0 0.0
      %782 = vmatprep.subr.mxu0 0.0
      %783 = vmatpush2.msra.mxu0 0.0
      %784 = vmatprep.subr.mxu0 0.0
      %785 = vmatpush2.msra.mxu0 0.0
      %786 = vmatprep.subr.mxu0 0.0
      %787 = vmatpush2.msra.mxu0 0.0
      %788 = vmatprep.subr.mxu0 0.0
      %789 = vmatpush2.msra.mxu0 0.0
      %790 = vmatprep.subr.mxu0 0.0
      %791 = vmatpush2.msra.mxu0 0.0
      %792 = vmatprep.subr.mxu0 0.0
      %793 = vmatpush2.msra.mxu0 0.0
      %794 = vmatprep.mubr.f32.mxu0 0.0
      %795 = vmatmul.mubr.f32.gmra.mxu0 %v582
      %v796 = vpop.f32.mrf.mxu0
      %v797 = vadd.f32 %v726, %v796
      %v798 = vpop.f32.mrf.mxu0
      %v799 = vadd.f32 %v728, %v798
      %800 = vdwg.mxu0
      %801 = vmatprep.subr.mxu0 %v284
      %802 = vmatpush1.msra.mxu0 %v283
      %803 = vmatprep.subr.mxu0 %v282
      %804 = vmatpush1.msra.mxu0 %v281
      %805 = vmatprep.subr.mxu0 %v280
      %806 = vmatpush1.msra.mxu0 %v279
      %807 = vmatprep.subr.mxu0 %v278
      %808 = vmatpush1.msra.mxu0 %v277
      %809 = vmatprep.subr.mxu0 %v276
      %810 = vmatpush1.msra.mxu0 %v275
      %811 = vmatprep.subr.mxu0 %v274
      %812 = vmatpush1.msra.mxu0 %v273
      %813 = vmatprep.subr.mxu0 %v272
      %814 = vmatpush1.msra.mxu0 %v271
      %815 = vmatprep.subr.mxu0 %v270
      %816 = vmatpush1.msra.mxu0 %v269
      %817 = vmatprep.subr.mxu0 %v268
      %818 = vmatpush1.msra.mxu0 %v267
      %819 = vmatprep.subr.mxu0 %v266
      %820 = vmatpush1.msra.mxu0 %v265
      %821 = vmatprep.subr.mxu0 %v264
      %822 = vmatpush1.msra.mxu0 %v263
      %823 = vmatprep.subr.mxu0 %v262
      %824 = vmatpush1.msra.mxu0 %v261
      %825 = vmatprep.subr.mxu0 %v260
      %826 = vmatpush1.msra.mxu0 %v259
      %827 = vmatprep.subr.mxu0 %v258
      %828 = vmatpush1.msra.mxu0 %v257
      %829 = vmatprep.subr.mxu0 %v256
      %830 = vmatpush1.msra.mxu0 %v255
      %831 = vmatprep.subr.mxu0 %v254
      %832 = vmatpush1.msra.mxu0 %v253
      %833 = vmatprep.subr.mxu0 %v316
      %834 = vmatpush2.msra.mxu0 %v315
      %835 = vmatprep.subr.mxu0 %v314
      %836 = vmatpush2.msra.mxu0 %v313
      %837 = vmatprep.subr.mxu0 %v312
      %838 = vmatpush2.msra.mxu0 %v311
      %839 = vmatprep.subr.mxu0 %v310
      %840 = vmatpush2.msra.mxu0 %v309
      %841 = vmatprep.subr.mxu0 %v308
      %842 = vmatpush2.msra.mxu0 %v307
      %843 = vmatprep.subr.mxu0 %v306
      %844 = vmatpush2.msra.mxu0 %v305
      %845 = vmatprep.subr.mxu0 %v304
      %846 = vmatpush2.msra.mxu0 %v303
      %847 = vmatprep.subr.mxu0 %v302
      %848 = vmatpush2.msra.mxu0 %v301
      %849 = vmatprep.subr.mxu0 %v300
      %850 = vmatpush2.msra.mxu0 %v299
      %851 = vmatprep.subr.mxu0 %v298
      %852 = vmatpush2.msra.mxu0 %v297
      %853 = vmatprep.subr.mxu0 %v296
      %854 = vmatpush2.msra.mxu0 %v295
      %855 = vmatprep.subr.mxu0 %v294
      %856 = vmatpush2.msra.mxu0 %v293
      %857 = vmatprep.subr.mxu0 %v292
      %858 = vmatpush2.msra.mxu0 %v291
      %859 = vmatprep.subr.mxu0 %v290
      %860 = vmatpush2.msra.mxu0 %v289
      %861 = vmatprep.subr.mxu0 %v288
      %862 = vmatpush2.msra.mxu0 %v287
      %863 = vmatprep.subr.mxu0 %v286
      %864 = vmatpush2.msra.mxu0 %v285
      %865 = vmatprep.mubr.f32.mxu0 %v249
      %866 = vmatmul.mubr.f32.gmra.mxu0 %v248
      %v867 = vpop.f32.mrf.mxu0
      %v868 = vadd.f32 %v797, %v867
      %v869 = vpop.f32.mrf.mxu0
      %v870 = vadd.f32 %v799, %v869
      %871 = vdwg.mxu0
      %872 = vmatprep.subr.mxu0 %v348
      %873 = vmatpush1.msra.mxu0 %v347
      %874 = vmatprep.subr.mxu0 %v346
      %875 = vmatpush1.msra.mxu0 %v345
      %876 = vmatprep.subr.mxu0 %v344
      %877 = vmatpush1.msra.mxu0 %v343
      %878 = vmatprep.subr.mxu0 %v342
      %879 = vmatpush1.msra.mxu0 %v341
      %880 = vmatprep.subr.mxu0 %v340
      %881 = vmatpush1.msra.mxu0 %v339
      %882 = vmatprep.subr.mxu0 %v338
      %883 = vmatpush1.msra.mxu0 %v337
      %884 = vmatprep.subr.mxu0 %v336
      %885 = vmatpush1.msra.mxu0 %v335
      %886 = vmatprep.subr.mxu0 %v334
      %887 = vmatpush1.msra.mxu0 %v333
      %888 = vmatprep.subr.mxu0 %v332
      %889 = vmatpush1.msra.mxu0 %v331
      %890 = vmatprep.subr.mxu0 %v330
      %891 = vmatpush1.msra.mxu0 %v329
      %892 = vmatprep.subr.mxu0 %v328
      %893 = vmatpush1.msra.mxu0 %v327
      %894 = vmatprep.subr.mxu0 %v326
      %895 = vmatpush1.msra.mxu0 %v325
      %896 = vmatprep.subr.mxu0 %v324
      %897 = vmatpush1.msra.mxu0 %v323
      %898 = vmatprep.subr.mxu0 %v322
      %899 = vmatpush1.msra.mxu0 %v321
      %900 = vmatprep.subr.mxu0 %v320
      %901 = vmatpush1.msra.mxu0 %v319
      %902 = vmatprep.subr.mxu0 %v318
      %903 = vmatpush1.msra.mxu0 %v317
      %904 = vmatprep.subr.mxu0 %v380
      %905 = vmatpush2.msra.mxu0 %v379
      %906 = vmatprep.subr.mxu0 %v378
      %907 = vmatpush2.msra.mxu0 %v377
      %908 = vmatprep.subr.mxu0 %v376
      %909 = vmatpush2.msra.mxu0 %v375
      %910 = vmatprep.subr.mxu0 %v374
      %911 = vmatpush2.msra.mxu0 %v373
      %912 = vmatprep.subr.mxu0 %v372
      %913 = vmatpush2.msra.mxu0 %v371
      %914 = vmatprep.subr.mxu0 %v370
      %915 = vmatpush2.msra.mxu0 %v369
      %916 = vmatprep.subr.mxu0 %v368
      %917 = vmatpush2.msra.mxu0 %v367
      %918 = vmatprep.subr.mxu0 %v366
      %919 = vmatpush2.msra.mxu0 %v365
      %920 = vmatprep.subr.mxu0 %v364
      %921 = vmatpush2.msra.mxu0 %v363
      %922 = vmatprep.subr.mxu0 %v362
      %923 = vmatpush2.msra.mxu0 %v361
      %924 = vmatprep.subr.mxu0 %v360
      %925 = vmatpush2.msra.mxu0 %v359
      %926 = vmatprep.subr.mxu0 %v358
      %927 = vmatpush2.msra.mxu0 %v357
      %928 = vmatprep.subr.mxu0 %v356
      %929 = vmatpush2.msra.mxu0 %v355
      %930 = vmatprep.subr.mxu0 %v354
      %931 = vmatpush2.msra.mxu0 %v353
      %932 = vmatprep.subr.mxu0 %v352
      %933 = vmatpush2.msra.mxu0 %v351
      %934 = vmatprep.subr.mxu0 %v350
      %935 = vmatpush2.msra.mxu0 %v349
      %936 = vmatprep.mubr.f32.mxu0 %v251
      %937 = vmatmul.mubr.f32.gmra.mxu0 %v250
      %v938 = vpop.f32.mrf.mxu0
      %v939 = vadd.f32 %v868, %v938
      %v940 = vpop.f32.mrf.mxu0
      %v941 = vadd.f32 %v870, %v940
      %942 = vdwg.mxu0
      %943 = vmatprep.subr.mxu0 %v412
      %944 = vmatpush1.msra.mxu0 %v411
      %945 = vmatprep.subr.mxu0 %v410
      %946 = vmatpush1.msra.mxu0 %v409
      %947 = vmatprep.subr.mxu0 %v408
      %948 = vmatpush1.msra.mxu0 %v407
      %949 = vmatprep.subr.mxu0 %v406
      %950 = vmatpush1.msra.mxu0 %v405
      %951 = vmatprep.subr.mxu0 %v404
      %952 = vmatpush1.msra.mxu0 %v403
      %953 = vmatprep.subr.mxu0 %v402
      %954 = vmatpush1.msra.mxu0 %v401
      %955 = vmatprep.subr.mxu0 %v400
      %956 = vmatpush1.msra.mxu0 %v399
      %957 = vmatprep.subr.mxu0 %v398
      %958 = vmatpush1.msra.mxu0 %v397
      %959 = vmatprep.subr.mxu0 %v396
      %960 = vmatpush1.msra.mxu0 %v395
      %961 = vmatprep.subr.mxu0 %v394
      %962 = vmatpush1.msra.mxu0 %v393
      %963 = vmatprep.subr.mxu0 %v392
      %964 = vmatpush1.msra.mxu0 %v391
      %965 = vmatprep.subr.mxu0 %v390
      %966 = vmatpush1.msra.mxu0 %v389
      %967 = vmatprep.subr.mxu0 %v388
      %968 = vmatpush1.msra.mxu0 %v387
      %969 = vmatprep.subr.mxu0 %v386
      %970 = vmatpush1.msra.mxu0 %v385
      %971 = vmatprep.subr.mxu0 %v384
      %972 = vmatpush1.msra.mxu0 %v383
      %973 = vmatprep.subr.mxu0 %v382
      %974 = vmatpush1.msra.mxu0 %v381
      %975 = vmatprep.subr.mxu0 0.0
      %976 = vmatpush2.msra.mxu0 0.0
      %977 = vmatprep.subr.mxu0 0.0
      %978 = vmatpush2.msra.mxu0 0.0
      %979 = vmatprep.subr.mxu0 0.0
      %980 = vmatpush2.msra.mxu0 0.0
      %981 = vmatprep.subr.mxu0 0.0
      %982 = vmatpush2.msra.mxu0 0.0
      %983 = vmatprep.subr.mxu0 0.0
      %984 = vmatpush2.msra.mxu0 0.0
      %985 = vmatprep.subr.mxu0 0.0
      %986 = vmatpush2.msra.mxu0 0.0
      %987 = vmatprep.subr.mxu0 0.0
      %988 = vmatpush2.msra.mxu0 0.0
      %989 = vmatprep.subr.mxu0 0.0
      %990 = vmatpush2.msra.mxu0 0.0
      %991 = vmatprep.subr.mxu0 0.0
      %992 = vmatpush2.msra.mxu0 0.0
      %993 = vmatprep.subr.mxu0 0.0
      %994 = vmatpush2.msra.mxu0 0.0
      %995 = vmatprep.subr.mxu0 0.0
      %996 = vmatpush2.msra.mxu0 0.0
      %997 = vmatprep.subr.mxu0 0.0
      %998 = vmatpush2.msra.mxu0 0.0
      %999 = vmatprep.subr.mxu0 0.0
      %1000 = vmatpush2.msra.mxu0 0.0
      %1001 = vmatprep.subr.mxu0 0.0
      %1002 = vmatpush2.msra.mxu0 0.0
      %1003 = vmatprep.subr.mxu0 0.0
      %1004 = vmatpush2.msra.mxu0 0.0
      %1005 = vmatprep.subr.mxu0 0.0
      %1006 = vmatpush2.msra.mxu0 0.0
      %1007 = vmatprep.mubr.f32.mxu0 0.0
      %1008 = vmatmul.mubr.f32.gmra.mxu0 %v252
      %v1009 = vpop.f32.mrf.mxu0
      %v1010 = vadd.f32 %v939, %v1009
      %v1011 = vpop.f32.mrf.mxu0
      %v1012 = vadd.f32 %v941, %v1011
      %1013 = vdwg.mxu0
      %v1014 = vld [vmem:[%s3] sm:$0x3]
      %v1016 = vlaneseq
      %v1017 = vshrl.u32 %v1016, 7
      %v1018 = vsub.s32 0, %v1017
      %v1019 = vrot.slane %v1014, %v1018
      %v1020 = vlaneseq
      %v1021 = vshrl.u32 %v1020, 7
      %v1022 = vsub.s32 1, %v1021
      %v1023 = vrot.slane %v1014, %v1022
      %v1026 = vmul.f32 %v1010, %v1019
      %v1027 = vmul.f32 %v1012, %v1023
      %v1028 = vld [vmem:[%s4] sm:$0x3]
      %v1030 = vlaneseq
      %v1031 = vshrl.u32 %v1030, 7
      %v1032 = vsub.s32 0, %v1031
      %v1033 = vrot.slane %v1028, %v1032
      %v1034 = vlaneseq
      %v1035 = vshrl.u32 %v1034, 7
      %v1036 = vsub.s32 1, %v1035
      %v1037 = vrot.slane %v1028, %v1036
      %v1040 = vadd.f32 %v1026, %v1033
      %v1041 = vadd.f32 %v1027, %v1037
      %v1042 = vmax.f32 %v1040, 0.0
      %v1043 = vmax.f32 %v1041, 0.0
      %vm1044 = vcmask 1043456
      %v1045 = vsel %vm1044, %v1042, 0.0
      %v1046 = vrot.slane %v1045, 4
      %v1047 = vadd.f32 %v1045, %v1046
      %v1048 = vrot.slane %v1047, 2
      %v1049 = vadd.f32 %v1047, %v1048
      %v1050 = vrot.slane %v1049, 1
      %v1051 = vadd.f32 %v1049, %v1050
      %vm1052 = vcmask 519168
      %v1053 = vsel %vm1052, %v1043, 0.0
      %v1054 = vrot.slane %v1053, 4
      %v1055 = vadd.f32 %v1053, %v1054
      %v1056 = vrot.slane %v1055, 2
      %v1057 = vadd.f32 %v1055, %v1056
      %v1058 = vrot.slane %v1057, 1
      %v1059 = vadd.f32 %v1057, %v1058
      %v1060 = vld [vmem:[%s5] sm:$0xff]
      %v1061 = vld [vmem:[%s5 + $0x8] sm:$0xff]
      %v1062 = vld [vmem:[%s5 + $0x10] sm:$0xff]
      %v1063 = vld [vmem:[%s5 + $0x18] sm:$0xff]
      %v1064 = vld [vmem:[%s5 + $0x20] sm:$0xff]
      %v1065 = vld [vmem:[%s5 + $0x28] sm:$0xff]
      %v1066 = vld [vmem:[%s5 + $0x30] sm:$0xff]
      %v1067 = vld [vmem:[%s5 + $0x38] sm:$0xff]
      %v1068 = vld [vmem:[%s5 + $0x40] sm:$0xff]
      %v1069 = vld [vmem:[%s5 + $0x48] sm:$0xff]
      %v1070 = vld [vmem:[%s5 + $0x50] sm:$0xff]
      %v1071 = vld [vmem:[%s5 + $0x58] sm:$0xff]
      %v1072 = vld [vmem:[%s5 + $0x60] sm:$0xff]
      %v1073 = vld [vmem:[%s5 + $0x68] sm:$0xff]
      %v1074 = vld [vmem:[%s5 + $0x70] sm:$0xff]
      %v1075 = vld [vmem:[%s5 + $0x78] sm:$0xff]
      %v1076 = vld [vmem:[%s5 + $0x80] sm:$0xff]
      %v1077 = vld [vmem:[%s5 + $0x88] sm:$0xff]
      %v1078 = vld [vmem:[%s5 + $0x90] sm:$0xff]
      %v1079 = vld [vmem:[%s5 + $0x98] sm:$0xff]
      %v1080 = vld [vmem:[%s5 + $0xa0] sm:$0xff]
      %v1081 = vld [vmem:[%s5 + $0xa8] sm:$0xff]
      %v1082 = vld [vmem:[%s5 + $0xb0] sm:$0xff]
      %v1083 = vld [vmem:[%s5 + $0xb8] sm:$0xff]
      %vm1084 = vcmask 523264
      %v1086 = vsel %vm1084, %v1059, 0
      %1088 = vmatprep.subr.mxu0 0.0
      %1089 = vmatpush1.msra.mxu0 %v1075
      %1090 = vmatprep.subr.mxu0 0.0
      %1091 = vmatpush1.msra.mxu0 %v1074
      %1092 = vmatprep.subr.mxu0 0.0
      %1093 = vmatpush1.msra.mxu0 %v1073
      %1094 = vmatprep.subr.mxu0 0.0
      %1095 = vmatpush1.msra.mxu0 %v1072
      %1096 = vmatprep.subr.mxu0 0.0
      %1097 = vmatpush1.msra.mxu0 %v1071
      %1098 = vmatprep.subr.mxu0 0.0
      %1099 = vmatpush1.msra.mxu0 %v1070
      %1100 = vmatprep.subr.mxu0 0.0
      %1101 = vmatpush1.msra.mxu0 %v1069
      %1102 = vmatprep.subr.mxu0 0.0
      %1103 = vmatpush1.msra.mxu0 %v1068
      %1104 = vmatprep.subr.mxu0 0.0
      %1105 = vmatpush1.msra.mxu0 %v1067
      %1106 = vmatprep.subr.mxu0 0.0
      %1107 = vmatpush1.msra.mxu0 %v1066
      %1108 = vmatprep.subr.mxu0 0.0
      %1109 = vmatpush1.msra.mxu0 %v1065
      %1110 = vmatprep.subr.mxu0 0.0
      %1111 = vmatpush1.msra.mxu0 %v1064
      %1112 = vmatprep.subr.mxu0 0.0
      %1113 = vmatpush1.msra.mxu0 %v1063
      %1114 = vmatprep.subr.mxu0 0.0
      %1115 = vmatpush1.msra.mxu0 %v1062
      %1116 = vmatprep.subr.mxu0 0.0
      %1117 = vmatpush1.msra.mxu0 %v1061
      %1118 = vmatprep.subr.mxu0 0.0
      %1119 = vmatpush1.msra.mxu0 %v1060
      %1120 = vmatprep.subr.mxu0 0.0
      %1121 = vmatpush2.msra.mxu0 0.0
      %1122 = vmatprep.subr.mxu0 0.0
      %1123 = vmatpush2.msra.mxu0 0.0
      %1124 = vmatprep.subr.mxu0 0.0
      %1125 = vmatpush2.msra.mxu0 0.0
      %1126 = vmatprep.subr.mxu0 0.0
      %1127 = vmatpush2.msra.mxu0 0.0
      %1128 = vmatprep.subr.mxu0 0.0
      %1129 = vmatpush2.msra.mxu0 0.0
      %1130 = vmatprep.subr.mxu0 0.0
      %1131 = vmatpush2.msra.mxu0 0.0
      %1132 = vmatprep.subr.mxu0 0.0
      %1133 = vmatpush2.msra.mxu0 0.0
      %1134 = vmatprep.subr.mxu0 0.0
      %1135 = vmatpush2.msra.mxu0 0.0
      %1136 = vmatprep.subr.mxu0 0.0
      %1137 = vmatpush2.msra.mxu0 %v1083
      %1138 = vmatprep.subr.mxu0 0.0
      %1139 = vmatpush2.msra.mxu0 %v1082
      %1140 = vmatprep.subr.mxu0 0.0
      %1141 = vmatpush2.msra.mxu0 %v1081
      %1142 = vmatprep.subr.mxu0 0.0
      %1143 = vmatpush2.msra.mxu0 %v1080
      %1144 = vmatprep.subr.mxu0 0.0
      %1145 = vmatpush2.msra.mxu0 %v1079
      %1146 = vmatprep.subr.mxu0 0.0
      %1147 = vmatpush2.msra.mxu0 %v1078
      %1148 = vmatprep.subr.mxu0 0.0
      %1149 = vmatpush2.msra.mxu0 %v1077
      %1150 = vmatprep.subr.mxu0 0.0
      %1151 = vmatpush2.msra.mxu0 %v1076
      %1152 = vmatprep.mubr.f32.mxu0 %v1086
      %1153 = vmatmul.mubr.f32.gmra.mxu0 %v1051
      %v1154 = vpop.f32.mrf.mxu0
      %v1155 = vadd.f32 0.0, %v1154
      %v1156 = vpop.f32.mrf.mxu0
      %1157 = vdwg.mxu0
      %vm1158 = vcmask 385024
      %1159 = vst.msk [vmem:[%s247] sm:$0x1] %vm1158, %v1155
      %p1160 = scmp.lt.s32.totalorder %s17, 1
      %s1161 = scalar_select %p1160, %s17, 1
      %s1162 = scalar_lea.vmem %s6, %s1161
      // Predicated region
      $region45: #{attention_net_forward.6} parent=43 // pred_check
        %p1163 = pneg %p166
      $region46: #{attention_net_forward.6} parent=43 // pred_check_branch
        %1165 = sbr.rel (%p1163) target = $region48
      $region47: #{attention_net_forward.6} parent=43 // pred_region
        _
      $region48: #{attention_net_forward.6} parent=43 // pred_fallthru
        _
    $region44: #{attention_net_forward.6} parent=5 // pred_fallthru
      _
    %p1166 = scmp.le.s32.totalorder 2, %s12
    // Predicated region
    $region49: #{attention_net_forward.6} parent=5 // pred_check
      %p1167 = pneg %p1166
    $region50: #{attention_net_forward.6} parent=5 // pred_check_branch
      %1169 = sbr.rel (%p1167) target = $region52
    $region51: #{attention_net_forward.6} parent=5 // pred_region
      %s1170 = ssub.s32 %s12, 2
      // Predicated region
      $region53: #{attention_net_forward.6} parent=51 // pred_check
        %p1171 = pneg %p172
      $region54: #{attention_net_forward.6} parent=51 // pred_check_branch
        %1173 = sbr.rel (%p1171) target = $region56
      $region55: #{attention_net_forward.6} parent=51 // pred_region
        %p1174 = scmp.lt.s32.totalorder %s18, 1
        %s1175 = scalar_select %p1174, %s18, 1
        %s1176 = scalar_lea.vmem %s6, %s1175
      $region56: #{attention_net_forward.6} parent=51 // pred_fallthru
        _
    $region52: #{attention_net_forward.6} parent=5 // pred_fallthru
      _
  $region6: #{attention_net_forward.6} parent=0 // loop_footer
    %s16 = sadd.s32 1, %s12
  $region7: #{attention_net_forward.6} parent=0 // loop_footer_branch
    %11 = sbr.rel target = $region3
  $region8: #{attention_net_forward.6} parent=0 // loop_exit
    _

// kernel: attention_net_forward.7
$region0: #{attention_net_forward.7}
  #allocation0 [shape = 'u32[]', space=smem, size = 0x4, offset = 0x4, fixed_abs, tag = 'smem constant byte address 0x4 - core index']
  #allocation1 [shape = 'u32[144,128]{1,0:T(1,128)}', space=vmem, size = 0x12000, scoped, tag = 'internal scratch']
  %s0 = inlined_call_operand.vmem [shape: f32[2,48], index: 0, kind: input, shape index: {}]
  %s1 = inlined_call_operand.vmem [shape: f32[4,48,24], index: 1, kind: input, shape index: {}]
  %s2 = inlined_call_operand.vmem [shape: f32[4,1,24], index: 2, kind: input, shape index: {}]
  %s3 = inlined_call_operand.vmem [shape: f32[4,8,48], index: 3, kind: input, shape index: {}]
  %s4 = inlined_call_operand.vmem [shape: f32[4,1,48], index: 4, kind: input, shape index: {}]
  %s5 = inlined_call_operand.vmem [shape: f32[48,10], index: 5, kind: input, shape index: {}]
  %s6 = inlined_call_operand.vmem [shape: f32[1,10], index: 6, kind: input, shape index: {}]
  %s7 = inlined_call_operand.hbm [shape: f32[2,10], index: 7, kind: output, shape index: {}]
  %s8 = sld [smem:[#allocation0]]
  $region38: #{attention_net_forward.7} parent=0
    _
  %s10 = ssub.s32 1, %s8
  %s11 = scalar_select 0, %s10, %s8
  $region1: #{attention_net_forward.7} parent=0
    #allocation2 [shape = 'u8[1024]{0}', space=vmem, size = 0x400, scoped, tag = 'output window, operand 0, single buffered']
    #allocation3 [shape = 's32[1]{0}', space=sflag, size = 0x4, scoped, tag = 'scoped memory for attention_net_forward.7']
    %12 = vsyncpa [#allocation3], 0
    // Predicated region
    $region2: #{attention_net_forward.7} parent=1 // pred_check
      _
    $region3: #{attention_net_forward.7} parent=1 // pred_check_branch
      %14 = sbr.rel (0) target = $region5
    $region4: #{attention_net_forward.7} parent=1 // pred_region
      _
    $region5: #{attention_net_forward.7} parent=1 // pred_fallthru
      _
    // Predicated region
    $region6: #{attention_net_forward.7} parent=1 // pred_check
      _
    $region7: #{attention_net_forward.7} parent=1 // pred_check_branch
      %16 = sbr.rel (0) target = $region9
    $region8: #{attention_net_forward.7} parent=1 // pred_region
      _
    $region9: #{attention_net_forward.7} parent=1 // pred_fallthru
      _
    // Predicated region
    $region10: #{attention_net_forward.7} parent=1 // pred_check
      _
    $region11: #{attention_net_forward.7} parent=1 // pred_check_branch
      %18 = sbr.rel (0) target = $region13
    $region12: #{attention_net_forward.7} parent=1 // pred_region
      _
    $region13: #{attention_net_forward.7} parent=1 // pred_fallthru
      _
    // Predicated region
    $region14: #{attention_net_forward.7} parent=1 // pred_check
      _
    $region15: #{attention_net_forward.7} parent=1 // pred_check_branch
      %20 = sbr.rel (0) target = $region17
    $region16: #{attention_net_forward.7} parent=1 // pred_region
      _
    $region17: #{attention_net_forward.7} parent=1 // pred_fallthru
      _
    // Predicated region
    $region18: #{attention_net_forward.7} parent=1 // pred_check
      _
    $region19: #{attention_net_forward.7} parent=1 // pred_check_branch
      %22 = sbr.rel (0) target = $region21
    $region20: #{attention_net_forward.7} parent=1 // pred_region
      _
    $region21: #{attention_net_forward.7} parent=1 // pred_fallthru
      _
    // Predicated region
    $region22: #{attention_net_forward.7} parent=1 // pred_check
      _
    $region23: #{attention_net_forward.7} parent=1 // pred_check_branch
      %24 = sbr.rel (0) target = $region25
    $region24: #{attention_net_forward.7} parent=1 // pred_region
      _
    $region25: #{attention_net_forward.7} parent=1 // pred_fallthru
      _
    // Predicated region
    $region26: #{attention_net_forward.7} parent=1 // pred_check
      _
    $region27: #{attention_net_forward.7} parent=1 // pred_check_branch
      %26 = sbr.rel (0) target = $region29
    $region28: #{attention_net_forward.7} parent=1 // pred_region
      _
    $region29: #{attention_net_forward.7} parent=1 // pred_fallthru
      _
    %v27 = vld [vmem:[%s0] sm:$0x3]
    %v28 = vld [vmem:[%s1] sm:$0xff]
    %v29 = vld [vmem:[%s1 + $0x8] sm:$0xff]
    %v30 = vld [vmem:[%s1 + $0x10] sm:$0xff]
    %v31 = vld [vmem:[%s1 + $0x18] sm:$0xff]
    %v32 = vld [vmem:[%s1 + $0x20] sm:$0xff]
    %v33 = vld [vmem:[%s1 + $0x28] sm:$0xff]
    %v34 = vld [vmem:[%s2] sm:$0x1]
    %v36 = vlaneseq
    %v37 = vshrl.u32 %v36, 7
    %v38 = vsub.s32 0, %v37
    %v39 = vrot.slane %v34, %v38
    %vm41 = vcmask 392192
    %v43 = vsel %vm41, %v27, 0
    %45 = vmatprep.subr.mxu0 0.0
    %46 = vmatpush1.msra.mxu0 0.0
    %47 = vmatprep.subr.mxu0 0.0
    %48 = vmatpush1.msra.mxu0 0.0
    %49 = vmatprep.subr.mxu0 0.0
    %50 = vmatpush1.msra.mxu0 0.0
    %51 = vmatprep.subr.mxu0 0.0
    %52 = vmatpush1.msra.mxu0 0.0
    %53 = vmatprep.subr.mxu0 0.0
    %54 = vmatpush1.msra.mxu0 0.0
    %55 = vmatprep.subr.mxu0 0.0
    %56 = vmatpush1.msra.mxu0 0.0
    %57 = vmatprep.subr.mxu0 0.0
    %58 = vmatpush1.msra.mxu0 0.0
    %59 = vmatprep.subr.mxu0 0.0
    %60 = vmatpush1.msra.mxu0 0.0
    %61 = vmatprep.subr.mxu0 0.0
    %62 = vmatpush1.msra.mxu0 0.0
    %63 = vmatprep.subr.mxu0 0.0
    %64 = vmatpush1.msra.mxu0 0.0
    %65 = vmatprep.subr.mxu0 0.0
    %66 = vmatpush1.msra.mxu0 %v33
    %67 = vmatprep.subr.mxu0 0.0
    %68 = vmatpush1.msra.mxu0 %v32
    %69 = vmatprep.subr.mxu0 0.0
    %70 = vmatpush1.msra.mxu0 %v31
    %71 = vmatprep.subr.mxu0 0.0
    %72 = vmatpush1.msra.mxu0 %v30
    %73 = vmatprep.subr.mxu0 0.0
    %74 = vmatpush1.msra.mxu0 %v29
    %75 = vmatprep.subr.mxu0 0.0
    %76 = vmatpush1.msra.mxu0 %v28
    %77 = vmatprep.subr.mxu0 0.0
    %78 = vmatpush2.msra.mxu0 0.0
    %79 = vmatprep.subr.mxu0 0.0
    %80 = vmatpush2.msra.mxu0 0.0
    %81 = vmatprep.subr.mxu0 0.0
    %82 = vmatpush2.msra.mxu0 0.0
    %83 = vmatprep.subr.mxu0 0.0
    %84 = vmatpush2.msra.mxu0 0.0
    %85 = vmatprep.subr.mxu0 0.0
    %86 = vmatpush2.msra.mxu0 0.0
    %87 = vmatprep.subr.mxu0 0.0
    %88 = vmatpush2.msra.mxu0 0.0
    %89 = vmatprep.subr.mxu0 0.0
    %90 = vmatpush2.msra.mxu0 0.0
    %91 = vmatprep.subr.mxu0 0.0
    %92 = vmatpush2.msra.mxu0 0.0
    %93 = vmatprep.subr.mxu0 0.0
    %94 = vmatpush2.msra.mxu0 0.0
    %95 = vmatprep.subr.mxu0 0.0
    %96 = vmatpush2.msra.mxu0 0.0
    %97 = vmatprep.subr.mxu0 0.0
    %98 = vmatpush2.msra.mxu0 0.0
    %99 = vmatprep.subr.mxu0 0.0
    %100 = vmatpush2.msra.mxu0 0.0
    %101 = vmatprep.subr.mxu0 0.0
    %102 = vmatpush2.msra.mxu0 0.0
    %103 = vmatprep.subr.mxu0 0.0
    %104 = vmatpush2.msra.mxu0 0.0
    %105 = vmatprep.subr.mxu0 0.0
    %106 = vmatpush2.msra.mxu0 0.0
    %107 = vmatprep.subr.mxu0 0.0
    %108 = vmatpush2.msra.mxu0 0.0
    %109 = vmatprep.mubr.f32.mxu0 0.0
    %110 = vmatmul.mubr.f32.gmra.mxu0 %v43
    %v111 = vpop.f32.mrf.mxu0
    %v112 = vadd.f32 %v39, %v111
    %v113 = vpop.f32.mrf.mxu0
    %114 = vdwg.mxu0
    %v115 = vmax.f32 %v112, 0.0
    %116 = vxpose.xlu0.b32.start [1/16] %v115, 128
    %117 = vxpose.xlu0.b32.cont [2/16] 0.0, 128
    %118 = vxpose.xlu0.b32.cont [3/16] 0.0, 128
    %119 = vxpose.xlu0.b32.cont [4/16] 0.0, 128
    %120 = vxpose.xlu0.b32.cont [5/16] 0.0, 128
    %121 = vxpose.xlu0.b32.cont [6/16] 0.0, 128
    %122 = vxpose.xlu0.b32.cont [7/16] 0.0, 128
    %123 = vxpose.xlu0.b32.cont [8/16] 0.0, 128
    %124 = vxpose.xlu0.b32.cont [9/16] 0.0, 128
    %125 = vxpose.xlu0.b32.cont [10/16] 0.0, 128
    %126 = vxpose.xlu0.b32.cont [11/16] 0.0, 128
    %127 = vxpose.xlu0.b32.cont [12/16] 0.0, 128
    %128 = vxpose.xlu0.b32.cont [13/16] 0.0, 128
    %129 = vxpose.xlu0.b32.cont [14/16] 0.0, 128
    %130 = vxpose.xlu0.b32.cont [15/16] 0.0, 128
    %131 = vxpose.xlu0.b32.end [16/16] 0.0, 128
    %v132 = vpop.trf.xlu0
    %v133 = vpop.trf.xlu0
    %v134 = vpop.trf.xlu0
    %v135 = vpop.trf.xlu0
    %v136 = vpop.trf.xlu0
    %v137 = vpop.trf.xlu0
    %v138 = vpop.trf.xlu0
    %v139 = vpop.trf.xlu0
    %v140 = vpop.trf.xlu0
    %v141 = vpop.trf.xlu0
    %v142 = vpop.trf.xlu0
    %v143 = vpop.trf.xlu0
    %v144 = vpop.trf.xlu0
    %v145 = vpop.trf.xlu0
    %v146 = vpop.trf.xlu0
    %v147 = vpop.trf.xlu0
    %149 = vrot.lane.b32.xlu0 %v115, 120
    %v150 = vpop.permute.xlu0 %149
    %vm151 = vcmask 15360
    %v153 = vsel %vm151, %v132, 0
    %vm155 = vcmask 1041408
    %v156 = vsel %vm155, %v150, 0
    %158 = vmatprep.subr.mxu0 0.0
    %159 = vmatpush1.msra.mxu0 0.0
    %160 = vmatprep.subr.mxu0 0.0
    %161 = vmatpush1.msra.mxu0 0.0
    %162 = vmatprep.subr.mxu0 0.0
    %163 = vmatpush1.msra.mxu0 0.0
    %164 = vmatprep.subr.mxu0 0.0
    %165 = vmatpush1.msra.mxu0 0.0
    %166 = vmatprep.subr.mxu0 0.0
    %167 = vmatpush1.msra.mxu0 0.0
    %168 = vmatprep.subr.mxu0 0.0
    %169 = vmatpush1.msra.mxu0 0.0
    %170 = vmatprep.subr.mxu0 0.0
    %171 = vmatpush1.msra.mxu0 0.0
    %172 = vmatprep.subr.mxu0 0.0
    %173 = vmatpush1.msra.mxu0 0.0
    %174 = vmatprep.subr.mxu0 0.0
    %175 = vmatpush1.msra.mxu0 0.0
    %176 = vmatprep.subr.mxu0 0.0
    %177 = vmatpush1.msra.mxu0 0.0
    %178 = vmatprep.subr.mxu0 0.0
    %179 = vmatpush1.msra.mxu0 0.0
    %180 = vmatprep.subr.mxu0 0.0
    %181 = vmatpush1.msra.mxu0 0.0
    %182 = vmatprep.subr.mxu0 0.0
    %183 = vmatpush1.msra.mxu0 0.0
    %184 = vmatprep.subr.mxu0 0.0
    %185 = vmatpush1.msra.mxu0 0.0
    %186 = vmatprep.subr.mxu0 0.0
    %187 = vmatpush1.msra.mxu0 0.0
    %188 = vmatprep.subr.mxu0 0.0
    %189 = vmatpush1.msra.mxu0 %v156
    %190 = vmatprep.subr.mxu0 0.0
    %191 = vmatpush2.msra.mxu0 0.0
    %192 = vmatprep.subr.mxu0 0.0
    %193 = vmatpush2.msra.mxu0 0.0
    %194 = vmatprep.subr.mxu0 0.0
    %195 = vmatpush2.msra.mxu0 0.0
    %196 = vmatprep.subr.mxu0 0.0
    %197 = vmatpush2.msra.mxu0 0.0
    %198 = vmatprep.subr.mxu0 0.0
    %199 = vmatpush2.msra.mxu0 0.0
    %200 = vmatprep.subr.mxu0 0.0
    %201 = vmatpush2.msra.mxu0 0.0
    %202 = vmatprep.subr.mxu0 0.0
    %203 = vmatpush2.msra.mxu0 0.0
    %204 = vmatprep.subr.mxu0 0.0
    %205 = vmatpush2.msra.mxu0 0.0
    %206 = vmatprep.subr.mxu0 0.0
    %207 = vmatpush2.msra.mxu0 0.0
    %208 = vmatprep.subr.mxu0 0.0
    %209 = vmatpush2.msra.mxu0 0.0
    %210 = vmatprep.subr.mxu0 0.0
    %211 = vmatpush2.msra.mxu0 0.0
    %212 = vmatprep.subr.mxu0 0.0
    %213 = vmatpush2.msra.mxu0 0.0
    %214 = vmatprep.subr.mxu0 0.0
    %215 = vmatpush2.msra.mxu0 0.0
    %216 = vmatprep.subr.mxu0 0.0
    %217 = vmatpush2.msra.mxu0 0.0
    %218 = vmatprep.subr.mxu0 0.0
    %219 = vmatpush2.msra.mxu0 0.0
    %220 = vmatprep.subr.mxu0 0.0
    %221 = vmatpush2.msra.mxu0 0.0
    %222 = vmatprep.mubr.f32.mxu0 0.0
    %223 = vmatmul.mubr.f32.gmra.mxu0 %v153
    %v224 = vpop.f32.mrf.mxu0
    %v225 = vadd.f32 0.0, %v224
    %v226 = vpop.f32.mrf.mxu0
    %227 = vdwg.mxu0
    %vm228 = vcmask 64512
    %v229 = vsel %vm228, %v225, -inf
    %v230 = vrot.slane %v229, 4
    %v231 = vmax.f32 %v229, %v230
    %v232 = vrot.slane %v231, 2
    %v233 = vmax.f32 %v231, %v232
    %v234 = vrot.slane %v233, 1
    %v235 = vmax.f32 %v233, %v234
    %v236 = vsub.f32 %v225, %v235
    %v237 = vmul.f32 %v236, 1.442695
    %v238 = vpow.pop %v237
    %v239 = vsel %vm228, %v238, 0.0
    %v240 = vrot.slane %v239, 4
    %v241 = vadd.f32 %v239, %v240
    %v242 = vrot.slane %v241, 2
    %v243 = vadd.f32 %v241, %v242
    %v244 = vrot.slane %v243, 1
    %v245 = vadd.f32 %v243, %v244
    %v246 = vrcp.pop %v245
    %v247 = vmul.f32 %v246, 0.35355338
    %v248 = vmul.f32 %v238, %v247
    %249 = vrot.lane.b32.xlu0 %v115, 112
    %v250 = vpop.permute.xlu0 %249
    %v251 = vsel %vm228, %v250, 0
    %253 = vmatprep.subr.mxu0 0.0
    %254 = vmatpush1.msra.mxu0 0.0
    %255 = vmatprep.subr.mxu0 0.0
    %256 = vmatpush1.msra.mxu0 0.0
    %257 = vmatprep.subr.mxu0 0.0
    %258 = vmatpush1.msra.mxu0 0.0
    %259 = vmatprep.subr.mxu0 0.0
    %260 = vmatpush1.msra.mxu0 0.0
    %261 = vmatprep.subr.mxu0 0.0
    %262 = vmatpush1.msra.mxu0 0.0
    %263 = vmatprep.subr.mxu0 0.0
    %264 = vmatpush1.msra.mxu0 0.0
    %265 = vmatprep.subr.mxu0 0.0
    %266 = vmatpush1.msra.mxu0 0.0
    %267 = vmatprep.subr.mxu0 0.0
    %268 = vmatpush1.msra.mxu0 0.0
    %269 = vmatprep.subr.mxu0 0.0
    %270 = vmatpush1.msra.mxu0 0.0
    %271 = vmatprep.subr.mxu0 0.0
    %272 = vmatpush1.msra.mxu0 0.0
    %273 = vmatprep.subr.mxu0 0.0
    %274 = vmatpush1.msra.mxu0 0.0
    %275 = vmatprep.subr.mxu0 0.0
    %276 = vmatpush1.msra.mxu0 0.0
    %277 = vmatprep.subr.mxu0 0.0
    %278 = vmatpush1.msra.mxu0 0.0
    %279 = vmatprep.subr.mxu0 0.0
    %280 = vmatpush1.msra.mxu0 0.0
    %281 = vmatprep.subr.mxu0 0.0
    %282 = vmatpush1.msra.mxu0 0.0
    %283 = vmatprep.subr.mxu0 0.0
    %284 = vmatpush1.msra.mxu0 %v248
    %285 = vmatprep.subr.mxu0 0.0
    %286 = vmatpush2.msra.mxu0 0.0
    %287 = vmatprep.subr.mxu0 0.0
    %288 = vmatpush2.msra.mxu0 0.0
    %289 = vmatprep.subr.mxu0 0.0
    %290 = vmatpush2.msra.mxu0 0.0
    %291 = vmatprep.subr.mxu0 0.0
    %292 = vmatpush2.msra.mxu0 0.0
    %293 = vmatprep.subr.mxu0 0.0
    %294 = vmatpush2.msra.mxu0 0.0
    %295 = vmatprep.subr.mxu0 0.0
    %296 = vmatpush2.msra.mxu0 0.0
    %297 = vmatprep.subr.mxu0 0.0
    %298 = vmatpush2.msra.mxu0 0.0
    %299 = vmatprep.subr.mxu0 0.0
    %300 = vmatpush2.msra.mxu0 0.0
    %301 = vmatprep.subr.mxu0 0.0
    %302 = vmatpush2.msra.mxu0 0.0
    %303 = vmatprep.subr.mxu0 0.0
    %304 = vmatpush2.msra.mxu0 0.0
    %305 = vmatprep.subr.mxu0 0.0
    %306 = vmatpush2.msra.mxu0 0.0
    %307 = vmatprep.subr.mxu0 0.0
    %308 = vmatpush2.msra.mxu0 0.0
    %309 = vmatprep.subr.mxu0 0.0
    %310 = vmatpush2.msra.mxu0 0.0
    %311 = vmatprep.subr.mxu0 0.0
    %312 = vmatpush2.msra.mxu0 0.0
    %313 = vmatprep.subr.mxu0 0.0
    %314 = vmatpush2.msra.mxu0 0.0
    %315 = vmatprep.subr.mxu0 0.0
    %316 = vmatpush2.msra.mxu0 0.0
    %317 = vmatprep.mubr.f32.mxu0 0.0
    %318 = vmatmul.mubr.f32.gmra.mxu0 %v251
    %v319 = vpop.f32.mrf.mxu0
    %v320 = vadd.f32 0.0, %v319
    %v321 = vpop.f32.mrf.mxu0
    %322 = vdwg.mxu0
    %v323 = vld [vmem:[%s3] sm:$0xff]
    %v324 = vld [vmem:[%s4] sm:$0x1]
    %v326 = vlaneseq
    %v327 = vshrl.u32 %v326, 7
    %v328 = vsub.s32 0, %v327
    %v329 = vrot.slane %v324, %v328
    %v332 = vsel %vm228, %v320, 0
    %334 = vmatprep.subr.mxu0 0.0
    %335 = vmatpush1.msra.mxu0 0.0
    %336 = vmatprep.subr.mxu0 0.0
    %337 = vmatpush1.msra.mxu0 0.0
    %338 = vmatprep.subr.mxu0 0.0
    %339 = vmatpush1.msra.mxu0 0.0
    %340 = vmatprep.subr.mxu0 0.0
    %341 = vmatpush1.msra.mxu0 0.0
    %342 = vmatprep.subr.mxu0 0.0
    %343 = vmatpush1.msra.mxu0 0.0
    %344 = vmatprep.subr.mxu0 0.0
    %345 = vmatpush1.msra.mxu0 0.0
    %346 = vmatprep.subr.mxu0 0.0
    %347 = vmatpush1.msra.mxu0 0.0
    %348 = vmatprep.subr.mxu0 0.0
    %349 = vmatpush1.msra.mxu0 0.0
    %350 = vmatprep.subr.mxu0 0.0
    %351 = vmatpush1.msra.mxu0 0.0
    %352 = vmatprep.subr.mxu0 0.0
    %353 = vmatpush1.msra.mxu0 0.0
    %354 = vmatprep.subr.mxu0 0.0
    %355 = vmatpush1.msra.mxu0 0.0
    %356 = vmatprep.subr.mxu0 0.0
    %357 = vmatpush1.msra.mxu0 0.0
    %358 = vmatprep.subr.mxu0 0.0
    %359 = vmatpush1.msra.mxu0 0.0
    %360 = vmatprep.subr.mxu0 0.0
    %361 = vmatpush1.msra.mxu0 0.0
    %362 = vmatprep.subr.mxu0 0.0
    %363 = vmatpush1.msra.mxu0 0.0
    %364 = vmatprep.subr.mxu0 0.0
    %365 = vmatpush1.msra.mxu0 %v323
    %366 = vmatprep.subr.mxu0 0.0
    %367 = vmatpush2.msra.mxu0 0.0
    %368 = vmatprep.subr.mxu0 0.0
    %369 = vmatpush2.msra.mxu0 0.0
    %370 = vmatprep.subr.mxu0 0.0
    %371 = vmatpush2.msra.mxu0 0.0
    %372 = vmatprep.subr.mxu0 0.0
    %373 = vmatpush2.msra.mxu0 0.0
    %374 = vmatprep.subr.mxu0 0.0
    %375 = vmatpush2.msra.mxu0 0.0
    %376 = vmatprep.subr.mxu0 0.0
    %377 = vmatpush2.msra.mxu0 0.0
    %378 = vmatprep.subr.mxu0 0.0
    %379 = vmatpush2.msra.mxu0 0.0
    %380 = vmatprep.subr.mxu0 0.0
    %381 = vmatpush2.msra.mxu0 0.0
    %382 = vmatprep.subr.mxu0 0.0
    %383 = vmatpush2.msra.mxu0 0.0
    %384 = vmatprep.subr.mxu0 0.0
    %385 = vmatpush2.msra.mxu0 0.0
    %386 = vmatprep.subr.mxu0 0.0
    %387 = vmatpush2.msra.mxu0 0.0
    %388 = vmatprep.subr.mxu0 0.0
    %389 = vmatpush2.msra.mxu0 0.0
    %390 = vmatprep.subr.mxu0 0.0
    %391 = vmatpush2.msra.mxu0 0.0
    %392 = vmatprep.subr.mxu0 0.0
    %393 = vmatpush2.msra.mxu0 0.0
    %394 = vmatprep.subr.mxu0 0.0
    %395 = vmatpush2.msra.mxu0 0.0
    %396 = vmatprep.subr.mxu0 0.0
    %397 = vmatpush2.msra.mxu0 0.0
    %398 = vmatprep.mubr.f32.mxu0 0.0
    %399 = vmatmul.mubr.f32.gmra.mxu0 %v332
    %v400 = vpop.f32.mrf.mxu0
    %v401 = vadd.f32 %v329, %v400
    %v402 = vpop.f32.mrf.mxu0
    %403 = vdwg.mxu0
    %v404 = vmax.f32 %v401, 0.0
    %s405 = scalar_lea.vmem %s1, 48
    %v406 = vld [vmem:[%s405] sm:$0xff]
    %v407 = vld [vmem:[%s405 + $0x8] sm:$0xff]
    %v408 = vld [vmem:[%s405 + $0x10] sm:$0xff]
    %v409 = vld [vmem:[%s405 + $0x18] sm:$0xff]
    %v410 = vld [vmem:[%s405 + $0x20] sm:$0xff]
    %v411 = vld [vmem:[%s405 + $0x28] sm:$0xff]
    %s412 = scalar_lea.vmem %s2, 1
    %v413 = vld [vmem:[%s412] sm:$0x1]
    %v415 = vlaneseq
    %v416 = vshrl.u32 %v415, 7
    %v417 = vsub.s32 0, %v416
    %v418 = vrot.slane %v413, %v417
    %v421 = vsel %vm41, %v404, 0
    %423 = vmatprep.subr.mxu0 0.0
    %424 = vmatpush1.msra.mxu0 0.0
    %425 = vmatprep.subr.mxu0 0.0
    %426 = vmatpush1.msra.mxu0 0.0
    %427 = vmatprep.subr.mxu0 0.0
    %428 = vmatpush1.msra.mxu0 0.0
    %429 = vmatprep.subr.mxu0 0.0
    %430 = vmatpush1.msra.mxu0 0.0
    %431 = vmatprep.subr.mxu0 0.0
    %432 = vmatpush1.msra.mxu0 0.0
    %433 = vmatprep.subr.mxu0 0.0
    %434 = vmatpush1.msra.mxu0 0.0
    %435 = vmatprep.subr.mxu0 0.0
    %436 = vmatpush1.msra.mxu0 0.0
    %437 = vmatprep.subr.mxu0 0.0
    %438 = vmatpush1.msra.mxu0 0.0
    %439 = vmatprep.subr.mxu0 0.0
    %440 = vmatpush1.msra.mxu0 0.0
    %441 = vmatprep.subr.mxu0 0.0
    %442 = vmatpush1.msra.mxu0 0.0
    %443 = vmatprep.subr.mxu0 0.0
    %444 = vmatpush1.msra.mxu0 %v411
    %445 = vmatprep.subr.mxu0 0.0
    %446 = vmatpush1.msra.mxu0 %v410
    %447 = vmatprep.subr.mxu0 0.0
    %448 = vmatpush1.msra.mxu0 %v409
    %449 = vmatprep.subr.mxu0 0.0
    %450 = vmatpush1.msra.mxu0 %v408
    %451 = vmatprep.subr.mxu0 0.0
    %452 = vmatpush1.msra.mxu0 %v407
    %453 = vmatprep.subr.mxu0 0.0
    %454 = vmatpush1.msra.mxu0 %v406
    %455 = vmatprep.subr.mxu0 0.0
    %456 = vmatpush2.msra.mxu0 0.0
    %457 = vmatprep.subr.mxu0 0.0
    %458 = vmatpush2.msra.mxu0 0.0
    %459 = vmatprep.subr.mxu0 0.0
    %460 = vmatpush2.msra.mxu0 0.0
    %461 = vmatprep.subr.mxu0 0.0
    %462 = vmatpush2.msra.mxu0 0.0
    %463 = vmatprep.subr.mxu0 0.0
    %464 = vmatpush2.msra.mxu0 0.0
    %465 = vmatprep.subr.mxu0 0.0
    %466 = vmatpush2.msra.mxu0 0.0
    %467 = vmatprep.subr.mxu0 0.0
    %468 = vmatpush2.msra.mxu0 0.0
    %469 = vmatprep.subr.mxu0 0.0
    %470 = vmatpush2.msra.mxu0 0.0
    %471 = vmatprep.subr.mxu0 0.0
    %472 = vmatpush2.msra.mxu0 0.0
    %473 = vmatprep.subr.mxu0 0.0
    %474 = vmatpush2.msra.mxu0 0.0
    %475 = vmatprep.subr.mxu0 0.0
    %476 = vmatpush2.msra.mxu0 0.0
    %477 = vmatprep.subr.mxu0 0.0
    %478 = vmatpush2.msra.mxu0 0.0
    %479 = vmatprep.subr.mxu0 0.0
    %480 = vmatpush2.msra.mxu0 0.0
    %481 = vmatprep.subr.mxu0 0.0
    %482 = vmatpush2.msra.mxu0 0.0
    %483 = vmatprep.subr.mxu0 0.0
    %484 = vmatpush2.msra.mxu0 0.0
    %485 = vmatprep.subr.mxu0 0.0
    %486 = vmatpush2.msra.mxu0 0.0
    %487 = vmatprep.mubr.f32.mxu0 0.0
    %488 = vmatmul.mubr.f32.gmra.mxu0 %v421
    %v489 = vpop.f32.mrf.mxu0
    %v490 = vadd.f32 %v418, %v489
    %v491 = vpop.f32.mrf.mxu0
    %492 = vdwg.mxu0
    %v493 = vmax.f32 %v490, 0.0
    %494 = vxpose.xlu0.b32.start [1/16] %v493, 128
    %495 = vxpose.xlu0.b32.cont [2/16] 0.0, 128
    %496 = vxpose.xlu0.b32.cont [3/16] 0.0, 128
    %497 = vxpose.xlu0.b32.cont [4/16] 0.0, 128
    %498 = vxpose.xlu0.b32.cont [5/16] 0.0, 128
    %499 = vxpose.xlu0.b32.cont [6/16] 0.0, 128
    %500 = vxpose.xlu0.b32.cont [7/16] 0.0, 128
    %501 = vxpose.xlu0.b32.cont [8/16] 0.0, 128
    %502 = vxpose.xlu0.b32.cont [9/16] 0.0, 128
    %503 = vxpose.xlu0.b32.cont [10/16] 0.0, 128
    %504 = vxpose.xlu0.b32.cont [11/16] 0.0, 128
    %505 = vxpose.xlu0.b32.cont [12/16] 0.0, 128
    %506 = vxpose.xlu0.b32.cont [13/16] 0.0, 128
    %507 = vxpose.xlu0.b32.cont [14/16] 0.0, 128
    %508 = vxpose.xlu0.b32.cont [15/16] 0.0, 128
    %509 = vxpose.xlu0.b32.end [16/16] 0.0, 128
    %v510 = vpop.trf.xlu0
    %v511 = vpop.trf.xlu0
    %v512 = vpop.trf.xlu0
    %v513 = vpop.trf.xlu0
    %v514 = vpop.trf.xlu0
    %v515 = vpop.trf.xlu0
    %v516 = vpop.trf.xlu0
    %v517 = vpop.trf.xlu0
    %v518 = vpop.trf.xlu0
    %v519 = vpop.trf.xlu0
    %v520 = vpop.trf.xlu0
    %v521 = vpop.trf.xlu0
    %v522 = vpop.trf.xlu0
    %v523 = vpop.trf.xlu0
    %v524 = vpop.trf.xlu0
    %v525 = vpop.trf.xlu0
    %527 = vrot.lane.b32.xlu0 %v493, 120
    %v528 = vpop.permute.xlu0 %527
    %v530 = vsel %vm151, %v510, 0
    %v532 = vsel %vm155, %v528, 0
    %534 = vmatprep.subr.mxu0 0.0
    %535 = vmatpush1.msra.mxu0 0.0
    %536 = vmatprep.subr.mxu0 0.0
    %537 = vmatpush1.msra.mxu0 0.0
    %538 = vmatprep.subr.mxu0 0.0
    %539 = vmatpush1.msra.mxu0 0.0
    %540 = vmatprep.subr.mxu0 0.0
    %541 = vmatpush1.msra.mxu0 0.0
    %542 = vmatprep.subr.mxu0 0.0
    %543 = vmatpush1.msra.mxu0 0.0
    %544 = vmatprep.subr.mxu0 0.0
    %545 = vmatpush1.msra.mxu0 0.0
    %546 = vmatprep.subr.mxu0 0.0
    %547 = vmatpush1.msra.mxu0 0.0
    %548 = vmatprep.subr.mxu0 0.0
    %549 = vmatpush1.msra.mxu0 0.0
    %550 = vmatprep.subr.mxu0 0.0
    %551 = vmatpush1.msra.mxu0 0.0
    %552 = vmatprep.subr.mxu0 0.0
    %553 = vmatpush1.msra.mxu0 0.0
    %554 = vmatprep.subr.mxu0 0.0
    %555 = vmatpush1.msra.mxu0 0.0
    %556 = vmatprep.subr.mxu0 0.0
    %557 = vmatpush1.msra.mxu0 0.0
    %558 = vmatprep.subr.mxu0 0.0
    %559 = vmatpush1.msra.mxu0 0.0
    %560 = vmatprep.subr.mxu0 0.0
    %561 = vmatpush1.msra.mxu0 0.0
    %562 = vmatprep.subr.mxu0 0.0
    %563 = vmatpush1.msra.mxu0 0.0
    %564 = vmatprep.subr.mxu0 0.0
    %565 = vmatpush1.msra.mxu0 %v532
    %566 = vmatprep.subr.mxu0 0.0
    %567 = vmatpush2.msra.mxu0 0.0
    %568 = vmatprep.subr.mxu0 0.0
    %569 = vmatpush2.msra.mxu0 0.0
    %570 = vmatprep.subr.mxu0 0.0
    %571 = vmatpush2.msra.mxu0 0.0
    %572 = vmatprep.subr.mxu0 0.0
    %573 = vmatpush2.msra.mxu0 0.0
    %574 = vmatprep.subr.mxu0 0.0
    %575 = vmatpush2.msra.mxu0 0.0
    %576 = vmatprep.subr.mxu0 0.0
    %577 = vmatpush2.msra.mxu0 0.0
    %578 = vmatprep.subr.mxu0 0.0
    %579 = vmatpush2.msra.mxu0 0.0
    %580 = vmatprep.subr.mxu0 0.0
    %581 = vmatpush2.msra.mxu0 0.0
    %582 = vmatprep.subr.mxu0 0.0
    %583 = vmatpush2.msra.mxu0 0.0
    %584 = vmatprep.subr.mxu0 0.0
    %585 = vmatpush2.msra.mxu0 0.0
    %586 = vmatprep.subr.mxu0 0.0
    %587 = vmatpush2.msra.mxu0 0.0
    %588 = vmatprep.subr.mxu0 0.0
    %589 = vmatpush2.msra.mxu0 0.0
    %590 = vmatprep.subr.mxu0 0.0
    %591 = vmatpush2.msra.mxu0 0.0
    %592 = vmatprep.subr.mxu0 0.0
    %593 = vmatpush2.msra.mxu0 0.0
    %594 = vmatprep.subr.mxu0 0.0
    %595 = vmatpush2.msra.mxu0 0.0
    %596 = vmatprep.subr.mxu0 0.0
    %597 = vmatpush2.msra.mxu0 0.0
    %598 = vmatprep.mubr.f32.mxu0 0.0
    %599 = vmatmul.mubr.f32.gmra.mxu0 %v530
    %v600 = vpop.f32.mrf.mxu0
    %v601 = vadd.f32 0.0, %v600
    %v602 = vpop.f32.mrf.mxu0
    %603 = vdwg.mxu0
    %v604 = vsel %vm228, %v601, -inf
    %v605 = vrot.slane %v604, 4
    %v606 = vmax.f32 %v604, %v605
    %v607 = vrot.slane %v606, 2
    %v608 = vmax.f32 %v606, %v607
    %v609 = vrot.slane %v608, 1
    %v610 = vmax.f32 %v608, %v609
    %v611 = vsub.f32 %v601, %v610
    %v612 = vmul.f32 %v611, 1.442695
    %v613 = vpow.pop %v612
    %v614 = vsel %vm228, %v613, 0.0
    %v615 = vrot.slane %v614, 4
    %v616 = vadd.f32 %v614, %v615
    %v617 = vrot.slane %v616, 2
    %v618 = vadd.f32 %v616, %v617
    %v619 = vrot.slane %v618, 1
    %v620 = vadd.f32 %v618, %v619
    %v621 = vrcp.pop %v620
    %v622 = vmul.f32 %v621, 0.35355338
    %v623 = vmul.f32 %v613, %v622
    %624 = vrot.lane.b32.xlu0 %v493, 112
    %v625 = vpop.permute.xlu0 %624
    %v626 = vsel %vm228, %v625, 0
    %628 = vmatprep.subr.mxu0 0.0
    %629 = vmatpush1.msra.mxu0 0.0
    %630 = vmatprep.subr.mxu0 0.0
    %631 = vmatpush1.msra.mxu0 0.0
    %632 = vmatprep.subr.mxu0 0.0
    %633 = vmatpush1.msra.mxu0 0.0
    %634 = vmatprep.subr.mxu0 0.0
    %635 = vmatpush1.msra.mxu0 0.0
    %636 = vmatprep.subr.mxu0 0.0
    %637 = vmatpush1.msra.mxu0 0.0
    %638 = vmatprep.subr.mxu0 0.0
    %639 = vmatpush1.msra.mxu0 0.0
    %640 = vmatprep.subr.mxu0 0.0
    %641 = vmatpush1.msra.mxu0 0.0
    %642 = vmatprep.subr.mxu0 0.0
    %643 = vmatpush1.msra.mxu0 0.0
    %644 = vmatprep.subr.mxu0 0.0
    %645 = vmatpush1.msra.mxu0 0.0
    %646 = vmatprep.subr.mxu0 0.0
    %647 = vmatpush1.msra.mxu0 0.0
    %648 = vmatprep.subr.mxu0 0.0
    %649 = vmatpush1.msra.mxu0 0.0
    %650 = vmatprep.subr.mxu0 0.0
    %651 = vmatpush1.msra.mxu0 0.0
    %652 = vmatprep.subr.mxu0 0.0
    %653 = vmatpush1.msra.mxu0 0.0
    %654 = vmatprep.subr.mxu0 0.0
    %655 = vmatpush1.msra.mxu0 0.0
    %656 = vmatprep.subr.mxu0 0.0
    %657 = vmatpush1.msra.mxu0 0.0
    %658 = vmatprep.subr.mxu0 0.0
    %659 = vmatpush1.msra.mxu0 %v623
    %660 = vmatprep.subr.mxu0 0.0
    %661 = vmatpush2.msra.mxu0 0.0
    %662 = vmatprep.subr.mxu0 0.0
    %663 = vmatpush2.msra.mxu0 0.0
    %664 = vmatprep.subr.mxu0 0.0
    %665 = vmatpush2.msra.mxu0 0.0
    %666 = vmatprep.subr.mxu0 0.0
    %667 = vmatpush2.msra.mxu0 0.0
    %668 = vmatprep.subr.mxu0 0.0
    %669 = vmatpush2.msra.mxu0 0.0
    %670 = vmatprep.subr.mxu0 0.0
    %671 = vmatpush2.msra.mxu0 0.0
    %672 = vmatprep.subr.mxu0 0.0
    %673 = vmatpush2.msra.mxu0 0.0
    %674 = vmatprep.subr.mxu0 0.0
    %675 = vmatpush2.msra.mxu0 0.0
    %676 = vmatprep.subr.mxu0 0.0
    %677 = vmatpush2.msra.mxu0 0.0
    %678 = vmatprep.subr.mxu0 0.0
    %679 = vmatpush2.msra.mxu0 0.0
    %680 = vmatprep.subr.mxu0 0.0
    %681 = vmatpush2.msra.mxu0 0.0
    %682 = vmatprep.subr.mxu0 0.0
    %683 = vmatpush2.msra.mxu0 0.0
    %684 = vmatprep.subr.mxu0 0.0
    %685 = vmatpush2.msra.mxu0 0.0
    %686 = vmatprep.subr.mxu0 0.0
    %687 = vmatpush2.msra.mxu0 0.0
    %688 = vmatprep.subr.mxu0 0.0
    %689 = vmatpush2.msra.mxu0 0.0
    %690 = vmatprep.subr.mxu0 0.0
    %691 = vmatpush2.msra.mxu0 0.0
    %692 = vmatprep.mubr.f32.mxu0 0.0
    %693 = vmatmul.mubr.f32.gmra.mxu0 %v626
    %v694 = vpop.f32.mrf.mxu0
    %v695 = vadd.f32 0.0, %v694
    %v696 = vpop.f32.mrf.mxu0
    %697 = vdwg.mxu0
    %s698 = scalar_lea.vmem %s3, 8
    %v699 = vld [vmem:[%s698] sm:$0xff]
    %s700 = scalar_lea.vmem %s4, 1
    %v701 = vld [vmem:[%s700] sm:$0x1]
    %v703 = vlaneseq
    %v704 = vshrl.u32 %v703, 7
    %v705 = vsub.s32 0, %v704
    %v706 = vrot.slane %v701, %v705
    %v709 = vsel %vm228, %v695, 0
    %711 = vmatprep.subr.mxu0 0.0
    %712 = vmatpush1.msra.mxu0 0.0
    %713 = vmatprep.subr.mxu0 0.0
    %714 = vmatpush1.msra.mxu0 0.0
    %715 = vmatprep.subr.mxu0 0.0
    %716 = vmatpush1.msra.mxu0 0.0
    %717 = vmatprep.subr.mxu0 0.0
    %718 = vmatpush1.msra.mxu0 0.0
    %719 = vmatprep.subr.mxu0 0.0
    %720 = vmatpush1.msra.mxu0 0.0
    %721 = vmatprep.subr.mxu0 0.0
    %722 = vmatpush1.msra.mxu0 0.0
    %723 = vmatprep.subr.mxu0 0.0
    %724 = vmatpush1.msra.mxu0 0.0
    %725 = vmatprep.subr.mxu0 0.0
    %726 = vmatpush1.msra.mxu0 0.0
    %727 = vmatprep.subr.mxu0 0.0
    %728 = vmatpush1.msra.mxu0 0.0
    %729 = vmatprep.subr.mxu0 0.0
    %730 = vmatpush1.msra.mxu0 0.0
    %731 = vmatprep.subr.mxu0 0.0
    %732 = vmatpush1.msra.mxu0 0.0
    %733 = vmatprep.subr.mxu0 0.0
    %734 = vmatpush1.msra.mxu0 0.0
    %735 = vmatprep.subr.mxu0 0.0
    %736 = vmatpush1.msra.mxu0 0.0
    %737 = vmatprep.subr.mxu0 0.0
    %738 = vmatpush1.msra.mxu0 0.0
    %739 = vmatprep.subr.mxu0 0.0
    %740 = vmatpush1.msra.mxu0 0.0
    %741 = vmatprep.subr.mxu0 0.0
    %742 = vmatpush1.msra.mxu0 %v699
    %743 = vmatprep.subr.mxu0 0.0
    %744 = vmatpush2.msra.mxu0 0.0
    %745 = vmatprep.subr.mxu0 0.0
    %746 = vmatpush2.msra.mxu0 0.0
    %747 = vmatprep.subr.mxu0 0.0
    %748 = vmatpush2.msra.mxu0 0.0
    %749 = vmatprep.subr.mxu0 0.0
    %750 = vmatpush2.msra.mxu0 0.0
    %751 = vmatprep.subr.mxu0 0.0
    %752 = vmatpush2.msra.mxu0 0.0
    %753 = vmatprep.subr.mxu0 0.0
    %754 = vmatpush2.msra.mxu0 0.0
    %755 = vmatprep.subr.mxu0 0.0
    %756 = vmatpush2.msra.mxu0 0.0
    %757 = vmatprep.subr.mxu0 0.0
    %758 = vmatpush2.msra.mxu0 0.0
    %759 = vmatprep.subr.mxu0 0.0
    %760 = vmatpush2.msra.mxu0 0.0
    %761 = vmatprep.subr.mxu0 0.0
    %762 = vmatpush2.msra.mxu0 0.0
    %763 = vmatprep.subr.mxu0 0.0
    %764 = vmatpush2.msra.mxu0 0.0
    %765 = vmatprep.subr.mxu0 0.0
    %766 = vmatpush2.msra.mxu0 0.0
    %767 = vmatprep.subr.mxu0 0.0
    %768 = vmatpush2.msra.mxu0 0.0
    %769 = vmatprep.subr.mxu0 0.0
    %770 = vmatpush2.msra.mxu0 0.0
    %771 = vmatprep.subr.mxu0 0.0
    %772 = vmatpush2.msra.mxu0 0.0
    %773 = vmatprep.subr.mxu0 0.0
    %774 = vmatpush2.msra.mxu0 0.0
    %775 = vmatprep.mubr.f32.mxu0 0.0
    %776 = vmatmul.mubr.f32.gmra.mxu0 %v709
    %v777 = vpop.f32.mrf.mxu0
    %v778 = vadd.f32 %v706, %v777
    %v779 = vpop.f32.mrf.mxu0
    %780 = vdwg.mxu0
    %v781 = vmax.f32 %v778, 0.0
    %s782 = scalar_lea.vmem %s1, 96
    %v783 = vld [vmem:[%s782] sm:$0xff]
    %v784 = vld [vmem:[%s782 + $0x8] sm:$0xff]
    %v785 = vld [vmem:[%s782 + $0x10] sm:$0xff]
    %v786 = vld [vmem:[%s782 + $0x18] sm:$0xff]
    %v787 = vld [vmem:[%s782 + $0x20] sm:$0xff]
    %v788 = vld [vmem:[%s782 + $0x28] sm:$0xff]
    %s789 = scalar_lea.vmem %s2, 2
    %v790 = vld [vmem:[%s789] sm:$0x1]
    %v792 = vlaneseq
    %v793 = vshrl.u32 %v792, 7
    %v794 = vsub.s32 0, %v793
    %v795 = vrot.slane %v790, %v794
    %v798 = vsel %vm41, %v781, 0
    %800 = vmatprep.subr.mxu0 0.0
    %801 = vmatpush1.msra.mxu0 0.0
    %802 = vmatprep.subr.mxu0 0.0
    %803 = vmatpush1.msra.mxu0 0.0
    %804 = vmatprep.subr.mxu0 0.0
    %805 = vmatpush1.msra.mxu0 0.0
    %806 = vmatprep.subr.mxu0 0.0
    %807 = vmatpush1.msra.mxu0 0.0
    %808 = vmatprep.subr.mxu0 0.0
    %809 = vmatpush1.msra.mxu0 0.0
    %810 = vmatprep.subr.mxu0 0.0
    %811 = vmatpush1.msra.mxu0 0.0
    %812 = vmatprep.subr.mxu0 0.0
    %813 = vmatpush1.msra.mxu0 0.0
    %814 = vmatprep.subr.mxu0 0.0
    %815 = vmatpush1.msra.mxu0 0.0
    %816 = vmatprep.subr.mxu0 0.0
    %817 = vmatpush1.msra.mxu0 0.0
    %818 = vmatprep.subr.mxu0 0.0
    %819 = vmatpush1.msra.mxu0 0.0
    %820 = vmatprep.subr.mxu0 0.0
    %821 = vmatpush1.msra.mxu0 %v788
    %822 = vmatprep.subr.mxu0 0.0
    %823 = vmatpush1.msra.mxu0 %v787
    %824 = vmatprep.subr.mxu0 0.0
    %825 = vmatpush1.msra.mxu0 %v786
    %826 = vmatprep.subr.mxu0 0.0
    %827 = vmatpush1.msra.mxu0 %v785
    %828 = vmatprep.subr.mxu0 0.0
    %829 = vmatpush1.msra.mxu0 %v784
    %830 = vmatprep.subr.mxu0 0.0
    %831 = vmatpush1.msra.mxu0 %v783
    %832 = vmatprep.subr.mxu0 0.0
    %833 = vmatpush2.msra.mxu0 0.0
    %834 = vmatprep.subr.mxu0 0.0
    %835 = vmatpush2.msra.mxu0 0.0
    %836 = vmatprep.subr.mxu0 0.0
    %837 = vmatpush2.msra.mxu0 0.0
    %838 = vmatprep.subr.mxu0 0.0
    %839 = vmatpush2.msra.mxu0 0.0
    %840 = vmatprep.subr.mxu0 0.0
    %841 = vmatpush2.msra.mxu0 0.0
    %842 = vmatprep.subr.mxu0 0.0
    %843 = vmatpush2.msra.mxu0 0.0
    %844 = vmatprep.subr.mxu0 0.0
    %845 = vmatpush2.msra.mxu0 0.0
    %846 = vmatprep.subr.mxu0 0.0
    %847 = vmatpush2.msra.mxu0 0.0
    %848 = vmatprep.subr.mxu0 0.0
    %849 = vmatpush2.msra.mxu0 0.0
    %850 = vmatprep.subr.mxu0 0.0
    %851 = vmatpush2.msra.mxu0 0.0
    %852 = vmatprep.subr.mxu0 0.0
    %853 = vmatpush2.msra.mxu0 0.0
    %854 = vmatprep.subr.mxu0 0.0
    %855 = vmatpush2.msra.mxu0 0.0
    %856 = vmatprep.subr.mxu0 0.0
    %857 = vmatpush2.msra.mxu0 0.0
    %858 = vmatprep.subr.mxu0 0.0
    %859 = vmatpush2.msra.mxu0 0.0
    %860 = vmatprep.subr.mxu0 0.0
    %861 = vmatpush2.msra.mxu0 0.0
    %862 = vmatprep.subr.mxu0 0.0
    %863 = vmatpush2.msra.mxu0 0.0
    %864 = vmatprep.mubr.f32.mxu0 0.0
    %865 = vmatmul.mubr.f32.gmra.mxu0 %v798
    %v866 = vpop.f32.mrf.mxu0
    %v867 = vadd.f32 %v795, %v866
    %v868 = vpop.f32.mrf.mxu0
    %869 = vdwg.mxu0
    %v870 = vmax.f32 %v867, 0.0
    %871 = vxpose.xlu0.b32.start [1/16] %v870, 128
    %872 = vxpose.xlu0.b32.cont [2/16] 0.0, 128
    %873 = vxpose.xlu0.b32.cont [3/16] 0.0, 128
    %874 = vxpose.xlu0.b32.cont [4/16] 0.0, 128
    %875 = vxpose.xlu0.b32.cont [5/16] 0.0, 128
    %876 = vxpose.xlu0.b32.cont [6/16] 0.0, 128
    %877 = vxpose.xlu0.b32.cont [7/16] 0.0, 128
    %878 = vxpose.xlu0.b32.cont [8/16] 0.0, 128
    %879 = vxpose.xlu0.b32.cont [9/16] 0.0, 128
    %880 = vxpose.xlu0.b32.cont [10/16] 0.0, 128
    %881 = vxpose.xlu0.b32.cont [11/16] 0.0, 128
    %882 = vxpose.xlu0.b32.cont [12/16] 0.0, 128
    %883 = vxpose.xlu0.b32.cont [13/16] 0.0, 128
    %884 = vxpose.xlu0.b32.cont [14/16] 0.0, 128
    %885 = vxpose.xlu0.b32.cont [15/16] 0.0, 128
    %886 = vxpose.xlu0.b32.end [16/16] 0.0, 128
    %v887 = vpop.trf.xlu0
    %v888 = vpop.trf.xlu0
    %v889 = vpop.trf.xlu0
    %v890 = vpop.trf.xlu0
    %v891 = vpop.trf.xlu0
    %v892 = vpop.trf.xlu0
    %v893 = vpop.trf.xlu0
    %v894 = vpop.trf.xlu0
    %v895 = vpop.trf.xlu0
    %v896 = vpop.trf.xlu0
    %v897 = vpop.trf.xlu0
    %v898 = vpop.trf.xlu0
    %v899 = vpop.trf.xlu0
    %v900 = vpop.trf.xlu0
    %v901 = vpop.trf.xlu0
    %v902 = vpop.trf.xlu0
    %904 = vrot.lane.b32.xlu0 %v870, 120
    %v905 = vpop.permute.xlu0 %904
    %v907 = vsel %vm151, %v887, 0
    %v909 = vsel %vm155, %v905, 0
    %911 = vmatprep.subr.mxu0 0.0
    %912 = vmatpush1.msra.mxu0 0.0
    %913 = vmatprep.subr.mxu0 0.0
    %914 = vmatpush1.msra.mxu0 0.0
    %915 = vmatprep.subr.mxu0 0.0
    %916 = vmatpush1.msra.mxu0 0.0
    %917 = vmatprep.subr.mxu0 0.0
    %918 = vmatpush1.msra.mxu0 0.0
    %919 = vmatprep.subr.mxu0 0.0
    %920 = vmatpush1.msra.mxu0 0.0
    %921 = vmatprep.subr.mxu0 0.0
    %922 = vmatpush1.msra.mxu0 0.0
    %923 = vmatprep.subr.mxu0 0.0
    %924 = vmatpush1.msra.mxu0 0.0
    %925 = vmatprep.subr.mxu0 0.0
    %926 = vmatpush1.msra.mxu0 0.0
    %927 = vmatprep.subr.mxu0 0.0
    %928 = vmatpush1.msra.mxu0 0.0
    %929 = vmatprep.subr.mxu0 0.0
    %930 = vmatpush1.msra.mxu0 0.0
    %931 = vmatprep.subr.mxu0 0.0
    %932 = vmatpush1.msra.mxu0 0.0
    %933 = vmatprep.subr.mxu0 0.0
    %934 = vmatpush1.msra.mxu0 0.0
    %935 = vmatprep.subr.mxu0 0.0
    %936 = vmatpush1.msra.mxu0 0.0
    %937 = vmatprep.subr.mxu0 0.0
    %938 = vmatpush1.msra.mxu0 0.0
    %939 = vmatprep.subr.mxu0 0.0
    %940 = vmatpush1.msra.mxu0 0.0
    %941 = vmatprep.subr.mxu0 0.0
    %942 = vmatpush1.msra.mxu0 %v909
    %943 = vmatprep.subr.mxu0 0.0
    %944 = vmatpush2.msra.mxu0 0.0
    %945 = vmatprep.subr.mxu0 0.0
    %946 = vmatpush2.msra.mxu0 0.0
    %947 = vmatprep.subr.mxu0 0.0
    %948 = vmatpush2.msra.mxu0 0.0
    %949 = vmatprep.subr.mxu0 0.0
    %950 = vmatpush2.msra.mxu0 0.0
    %951 = vmatprep.subr.mxu0 0.0
    %952 = vmatpush2.msra.mxu0 0.0
    %953 = vmatprep.subr.mxu0 0.0
    %954 = vmatpush2.msra.mxu0 0.0
    %955 = vmatprep.subr.mxu0 0.0
    %956 = vmatpush2.msra.mxu0 0.0
    %957 = vmatprep.subr.mxu0 0.0
    %958 = vmatpush2.msra.mxu0 0.0
    %959 = vmatprep.subr.mxu0 0.0
    %960 = vmatpush2.msra.mxu0 0.0
    %961 = vmatprep.subr.mxu0 0.0
    %962 = vmatpush2.msra.mxu0 0.0
    %963 = vmatprep.subr.mxu0 0.0
    %964 = vmatpush2.msra.mxu0 0.0
    %965 = vmatprep.subr.mxu0 0.0
    %966 = vmatpush2.msra.mxu0 0.0
    %967 = vmatprep.subr.mxu0 0.0
    %968 = vmatpush2.msra.mxu0 0.0
    %969 = vmatprep.subr.mxu0 0.0
    %970 = vmatpush2.msra.mxu0 0.0
    %971 = vmatprep.subr.mxu0 0.0
    %972 = vmatpush2.msra.mxu0 0.0
    %973 = vmatprep.subr.mxu0 0.0
    %974 = vmatpush2.msra.mxu0 0.0
    %975 = vmatprep.mubr.f32.mxu0 0.0
    %976 = vmatmul.mubr.f32.gmra.mxu0 %v907
    %v977 = vpop.f32.mrf.mxu0
    %v978 = vadd.f32 0.0, %v977
    %v979 = vpop.f32.mrf.mxu0
    %980 = vdwg.mxu0
    %v981 = vsel %vm228, %v978, -inf
    %v982 = vrot.slane %v981, 4
    %v983 = vmax.f32 %v981, %v982
    %v984 = vrot.slane %v983, 2
    %v985 = vmax.f32 %v983, %v984
    %v986 = vrot.slane %v985, 1
    %v987 = vmax.f32 %v985, %v986
    %v988 = vsub.f32 %v978, %v987
    %v989 = vmul.f32 %v988, 1.442695
    %v990 = vpow.pop %v989
    %v991 = vsel %vm228, %v990, 0.0
    %v992 = vrot.slane %v991, 4
    %v993 = vadd.f32 %v991, %v992
    %v994 = vrot.slane %v993, 2
    %v995 = vadd.f32 %v993, %v994
    %v996 = vrot.slane %v995, 1
    %v997 = vadd.f32 %v995, %v996
    %v998 = vrcp.pop %v997
    %v999 = vmul.f32 %v998, 0.35355338
    %v1000 = vmul.f32 %v990, %v999
    %1001 = vrot.lane.b32.xlu0 %v870, 112
    %v1002 = vpop.permute.xlu0 %1001
    %v1003 = vsel %vm228, %v1002, 0
    %1005 = vmatprep.subr.mxu0 0.0
    %1006 = vmatpush1.msra.mxu0 0.0
    %1007 = vmatprep.subr.mxu0 0.0
    %1008 = vmatpush1.msra.mxu0 0.0
    %1009 = vmatprep.subr.mxu0 0.0
    %1010 = vmatpush1.msra.mxu0 0.0
    %1011 = vmatprep.subr.mxu0 0.0
    %1012 = vmatpush1.msra.mxu0 0.0
    %1013 = vmatprep.subr.mxu0 0.0
    %1014 = vmatpush1.msra.mxu0 0.0
    %1015 = vmatprep.subr.mxu0 0.0
    %1016 = vmatpush1.msra.mxu0 0.0
    %1017 = vmatprep.subr.mxu0 0.0
    %1018 = vmatpush1.msra.mxu0 0.0
    %1019 = vmatprep.subr.mxu0 0.0
    %1020 = vmatpush1.msra.mxu0 0.0
    %1021 = vmatprep.subr.mxu0 0.0
    %1022 = vmatpush1.msra.mxu0 0.0
    %1023 = vmatprep.subr.mxu0 0.0
    %1024 = vmatpush1.msra.mxu0 0.0
    %1025 = vmatprep.subr.mxu0 0.0
    %1026 = vmatpush1.msra.mxu0 0.0
    %1027 = vmatprep.subr.mxu0 0.0
    %1028 = vmatpush1.msra.mxu0 0.0
    %1029 = vmatprep.subr.mxu0 0.0
    %1030 = vmatpush1.msra.mxu0 0.0
    %1031 = vmatprep.subr.mxu0 0.0
    %1032 = vmatpush1.msra.mxu0 0.0
    %1033 = vmatprep.subr.mxu0 0.0
    %1034 = vmatpush1.msra.mxu0 0.0
    %1035 = vmatprep.subr.mxu0 0.0
    %1036 = vmatpush1.msra.mxu0 %v1000
    %1037 = vmatprep.subr.mxu0 0.0
    %1038 = vmatpush2.msra.mxu0 0.0
    %1039 = vmatprep.subr.mxu0 0.0
    %1040 = vmatpush2.msra.mxu0 0.0
    %1041 = vmatprep.subr.mxu0 0.0
    %1042 = vmatpush2.msra.mxu0 0.0
    %1043 = vmatprep.subr.mxu0 0.0
    %1044 = vmatpush2.msra.mxu0 0.0
    %1045 = vmatprep.subr.mxu0 0.0
    %1046 = vmatpush2.msra.mxu0 0.0
    %1047 = vmatprep.subr.mxu0 0.0
    %1048 = vmatpush2.msra.mxu0 0.0
    %1049 = vmatprep.subr.mxu0 0.0
    %1050 = vmatpush2.msra.mxu0 0.0
    %1051 = vmatprep.subr.mxu0 0.0
    %1052 = vmatpush2.msra.mxu0 0.0
    %1053 = vmatprep.subr.mxu0 0.0
    %1054 = vmatpush2.msra.mxu0 0.0
    %1055 = vmatprep.subr.mxu0 0.0
    %1056 = vmatpush2.msra.mxu0 0.0
    %1057 = vmatprep.subr.mxu0 0.0
    %1058 = vmatpush2.msra.mxu0 0.0
    %1059 = vmatprep.subr.mxu0 0.0
    %1060 = vmatpush2.msra.mxu0 0.0
    %1061 = vmatprep.subr.mxu0 0.0
    %1062 = vmatpush2.msra.mxu0 0.0
    %1063 = vmatprep.subr.mxu0 0.0
    %1064 = vmatpush2.msra.mxu0 0.0
    %1065 = vmatprep.subr.mxu0 0.0
    %1066 = vmatpush2.msra.mxu0 0.0
    %1067 = vmatprep.subr.mxu0 0.0
    %1068 = vmatpush2.msra.mxu0 0.0
    %1069 = vmatprep.mubr.f32.mxu0 0.0
    %1070 = vmatmul.mubr.f32.gmra.mxu0 %v1003
    %v1071 = vpop.f32.mrf.mxu0
    %v1072 = vadd.f32 0.0, %v1071
    %v1073 = vpop.f32.mrf.mxu0
    %1074 = vdwg.mxu0
    %s1075 = scalar_lea.vmem %s3, 16
    %v1076 = vld [vmem:[%s1075] sm:$0xff]
    %s1077 = scalar_lea.vmem %s4, 2
    %v1078 = vld [vmem:[%s1077] sm:$0x1]
    %v1080 = vlaneseq
    %v1081 = vshrl.u32 %v1080, 7
    %v1082 = vsub.s32 0, %v1081
    %v1083 = vrot.slane %v1078, %v1082
    %v1086 = vsel %vm228, %v1072, 0
    %1088 = vmatprep.subr.mxu0 0.0
    %1089 = vmatpush1.msra.mxu0 0.0
    %1090 = vmatprep.subr.mxu0 0.0
    %1091 = vmatpush1.msra.mxu0 0.0
    %1092 = vmatprep.subr.mxu0 0.0
    %1093 = vmatpush1.msra.mxu0 0.0
    %1094 = vmatprep.subr.mxu0 0.0
    %1095 = vmatpush1.msra.mxu0 0.0
    %1096 = vmatprep.subr.mxu0 0.0
    %1097 = vmatpush1.msra.mxu0 0.0
    %1098 = vmatprep.subr.mxu0 0.0
    %1099 = vmatpush1.msra.mxu0 0.0
    %1100 = vmatprep.subr.mxu0 0.0
    %1101 = vmatpush1.msra.mxu0 0.0
    %1102 = vmatprep.subr.mxu0 0.0
    %1103 = vmatpush1.msra.mxu0 0.0
    %1104 = vmatprep.subr.mxu0 0.0
    %1105 = vmatpush1.msra.mxu0 0.0
    %1106 = vmatprep.subr.mxu0 0.0
    %1107 = vmatpush1.msra.mxu0 0.0
    %1108 = vmatprep.subr.mxu0 0.0
    %1109 = vmatpush1.msra.mxu0 0.0
    %1110 = vmatprep.subr.mxu0 0.0
    %1111 = vmatpush1.msra.mxu0 0.0
    %1112 = vmatprep.subr.mxu0 0.0
    %1113 = vmatpush1.msra.mxu0 0.0
    %1114 = vmatprep.subr.mxu0 0.0
    %1115 = vmatpush1.msra.mxu0 0.0
    %1116 = vmatprep.subr.mxu0 0.0
    %1117 = vmatpush1.msra.mxu0 0.0
    %1118 = vmatprep.subr.mxu0 0.0
    %1119 = vmatpush1.msra.mxu0 %v1076
    %1120 = vmatprep.subr.mxu0 0.0
    %1121 = vmatpush2.msra.mxu0 0.0
    %1122 = vmatprep.subr.mxu0 0.0
    %1123 = vmatpush2.msra.mxu0 0.0
    %1124 = vmatprep.subr.mxu0 0.0
    %1125 = vmatpush2.msra.mxu0 0.0
    %1126 = vmatprep.subr.mxu0 0.0
    %1127 = vmatpush2.msra.mxu0 0.0
    %1128 = vmatprep.subr.mxu0 0.0
    %1129 = vmatpush2.msra.mxu0 0.0
    %1130 = vmatprep.subr.mxu0 0.0
    %1131 = vmatpush2.msra.mxu0 0.0
    %1132 = vmatprep.subr.mxu0 0.0
    %1133 = vmatpush2.msra.mxu0 0.0
    %1134 = vmatprep.subr.mxu0 0.0
    %1135 = vmatpush2.msra.mxu0 0.0
    %1136 = vmatprep.subr.mxu0 0.0
    %1137 = vmatpush2.msra.mxu0 0.0
    %1138 = vmatprep.subr.mxu0 0.0
    %1139 = vmatpush2.msra.mxu0 0.0
    %1140 = vmatprep.subr.mxu0 0.0
    %1141 = vmatpush2.msra.mxu0 0.0
    %1142 = vmatprep.subr.mxu0 0.0
    %1143 = vmatpush2.msra.mxu0 0.0
    %1144 = vmatprep.subr.mxu0 0.0
    %1145 = vmatpush2.msra.mxu0 0.0
    %1146 = vmatprep.subr.mxu0 0.0
    %1147 = vmatpush2.msra.mxu0 0.0
    %1148 = vmatprep.subr.mxu0 0.0
    %1149 = vmatpush2.msra.mxu0 0.0
    %1150 = vmatprep.subr.mxu0 0.0
    %1151 = vmatpush2.msra.mxu0 0.0
    %1152 = vmatprep.mubr.f32.mxu0 0.0
    %1153 = vmatmul.mubr.f32.gmra.mxu0 %v1086
    %v1154 = vpop.f32.mrf.mxu0
    %v1155 = vadd.f32 %v1083, %v1154
    %v1156 = vpop.f32.mrf.mxu0
    %1157 = vdwg.mxu0
    %v1158 = vmax.f32 %v1155, 0.0
    %s1159 = scalar_lea.vmem %s1, 144
    %v1160 = vld [vmem:[%s1159] sm:$0xff]
    %v1161 = vld [vmem:[%s1159 + $0x8] sm:$0xff]
    %v1162 = vld [vmem:[%s1159 + $0x10] sm:$0xff]
    %v1163 = vld [vmem:[%s1159 + $0x18] sm:$0xff]
    %v1164 = vld [vmem:[%s1159 + $0x20] sm:$0xff]
    %v1165 = vld [vmem:[%s1159 + $0x28] sm:$0xff]
    %s1166 = scalar_lea.vmem %s2, 3
    %v1167 = vld [vmem:[%s1166] sm:$0x1]
    %v1169 = vlaneseq
    %v1170 = vshrl.u32 %v1169, 7
    %v1171 = vsub.s32 0, %v1170
    %v1172 = vrot.slane %v1167, %v1171
    %v1175 = vsel %vm41, %v1158, 0
    %1177 = vmatprep.subr.mxu0 0.0
    %1178 = vmatpush1.msra.mxu0 0.0
    %1179 = vmatprep.subr.mxu0 0.0
    %1180 = vmatpush1.msra.mxu0 0.0
    %1181 = vmatprep.subr.mxu0 0.0
    %1182 = vmatpush1.msra.mxu0 0.0
    %1183 = vmatprep.subr.mxu0 0.0
    %1184 = vmatpush1.msra.mxu0 0.0
    %1185 = vmatprep.subr.mxu0 0.0
    %1186 = vmatpush1.msra.mxu0 0.0
    %1187 = vmatprep.subr.mxu0 0.0
    %1188 = vmatpush1.msra.mxu0 0.0
    %1189 = vmatprep.subr.mxu0 0.0
    %1190 = vmatpush1.msra.mxu0 0.0
    %1191 = vmatprep.subr.mxu0 0.0
    %1192 = vmatpush1.msra.mxu0 0.0
    %1193 = vmatprep.subr.mxu0 0.0
    %1194 = vmatpush1.msra.mxu0 0.0
    %1195 = vmatprep.subr.mxu0 0.0
    %1196 = vmatpush1.msra.mxu0 0.0
    %1197 = vmatprep.subr.mxu0 0.0
    %1198 = vmatpush1.msra.mxu0 %v1165
    %1199 = vmatprep.subr.mxu0 0.0
    %1200 = vmatpush1.msra.mxu0 %v1164
    %1201 = vmatprep.subr.mxu0 0.0
    %1202 = vmatpush1.msra.mxu0 %v1163
    %1203 = vmatprep.subr.mxu0 0.0
    %1204 = vmatpush1.msra.mxu0 %v1162
    %1205 = vmatprep.subr.mxu0 0.0
    %1206 = vmatpush1.msra.mxu0 %v1161
    %1207 = vmatprep.subr.mxu0 0.0
    %1208 = vmatpush1.msra.mxu0 %v1160
    %1209 = vmatprep.subr.mxu0 0.0
    %1210 = vmatpush2.msra.mxu0 0.0
    %1211 = vmatprep.subr.mxu0 0.0
    %1212 = vmatpush2.msra.mxu0 0.0
    %1213 = vmatprep.subr.mxu0 0.0
    %1214 = vmatpush2.msra.mxu0 0.0
    %1215 = vmatprep.subr.mxu0 0.0
    %1216 = vmatpush2.msra.mxu0 0.0
    %1217 = vmatprep.subr.mxu0 0.0
    %1218 = vmatpush2.msra.mxu0 0.0
    %1219 = vmatprep.subr.mxu0 0.0
    %1220 = vmatpush2.msra.mxu0 0.0
    %1221 = vmatprep.subr.mxu0 0.0
    %1222 = vmatpush2.msra.mxu0 0.0
    %1223 = vmatprep.subr.mxu0 0.0
    %1224 = vmatpush2.msra.mxu0 0.0
    %1225 = vmatprep.subr.mxu0 0.0
    %1226 = vmatpush2.msra.mxu0 0.0
    %1227 = vmatprep.subr.mxu0 0.0
    %1228 = vmatpush2.msra.mxu0 0.0
    %1229 = vmatprep.subr.mxu0 0.0
    %1230 = vmatpush2.msra.mxu0 0.0
    %1231 = vmatprep.subr.mxu0 0.0
    %1232 = vmatpush2.msra.mxu0 0.0
    %1233 = vmatprep.subr.mxu0 0.0
    %1234 = vmatpush2.msra.mxu0 0.0
    %1235 = vmatprep.subr.mxu0 0.0
    %1236 = vmatpush2.msra.mxu0 0.0
    %1237 = vmatprep.subr.mxu0 0.0
    %1238 = vmatpush2.msra.mxu0 0.0
    %1239 = vmatprep.subr.mxu0 0.0
    %1240 = vmatpush2.msra.mxu0 0.0
    %1241 = vmatprep.mubr.f32.mxu0 0.0
    %1242 = vmatmul.mubr.f32.gmra.mxu0 %v1175
    %v1243 = vpop.f32.mrf.mxu0
    %v1244 = vadd.f32 %v1172, %v1243
    %v1245 = vpop.f32.mrf.mxu0
    %1246 = vdwg.mxu0
    %v1247 = vmax.f32 %v1244, 0.0
    %1248 = vxpose.xlu0.b32.start [1/16] %v1247, 128
    %1249 = vxpose.xlu0.b32.cont [2/16] 0.0, 128
    %1250 = vxpose.xlu0.b32.cont [3/16] 0.0, 128
    %1251 = vxpose.xlu0.b32.cont [4/16] 0.0, 128
    %1252 = vxpose.xlu0.b32.cont [5/16] 0.0, 128
    %1253 = vxpose.xlu0.b32.cont [6/16] 0.0, 128
    %1254 = vxpose.xlu0.b32.cont [7/16] 0.0, 128
    %1255 = vxpose.xlu0.b32.cont [8/16] 0.0, 128
    %1256 = vxpose.xlu0.b32.cont [9/16] 0.0, 128
    %1257 = vxpose.xlu0.b32.cont [10/16] 0.0, 128
    %1258 = vxpose.xlu0.b32.cont [11/16] 0.0, 128
    %1259 = vxpose.xlu0.b32.cont [12/16] 0.0, 128
    %1260 = vxpose.xlu0.b32.cont [13/16] 0.0, 128
    %1261 = vxpose.xlu0.b32.cont [14/16] 0.0, 128
    %1262 = vxpose.xlu0.b32.cont [15/16] 0.0, 128
    %1263 = vxpose.xlu0.b32.end [16/16] 0.0, 128
    %v1264 = vpop.trf.xlu0
    %v1265 = vpop.trf.xlu0
    %v1266 = vpop.trf.xlu0
    %v1267 = vpop.trf.xlu0
    %v1268 = vpop.trf.xlu0
    %v1269 = vpop.trf.xlu0
    %v1270 = vpop.trf.xlu0
    %v1271 = vpop.trf.xlu0
    %v1272 = vpop.trf.xlu0
    %v1273 = vpop.trf.xlu0
    %v1274 = vpop.trf.xlu0
    %v1275 = vpop.trf.xlu0
    %v1276 = vpop.trf.xlu0
    %v1277 = vpop.trf.xlu0
    %v1278 = vpop.trf.xlu0
    %v1279 = vpop.trf.xlu0
    %1281 = vrot.lane.b32.xlu0 %v1247, 120
    %v1282 = vpop.permute.xlu0 %1281
    %v1284 = vsel %vm151, %v1264, 0
    %v1286 = vsel %vm155, %v1282, 0
    %1288 = vmatprep.subr.mxu0 0.0
    %1289 = vmatpush1.msra.mxu0 0.0
    %1290 = vmatprep.subr.mxu0 0.0
    %1291 = vmatpush1.msra.mxu0 0.0
    %1292 = vmatprep.subr.mxu0 0.0
    %1293 = vmatpush1.msra.mxu0 0.0
    %1294 = vmatprep.subr.mxu0 0.0
    %1295 = vmatpush1.msra.mxu0 0.0
    %1296 = vmatprep.subr.mxu0 0.0
    %1297 = vmatpush1.msra.mxu0 0.0
    %1298 = vmatprep.subr.mxu0 0.0
    %1299 = vmatpush1.msra.mxu0 0.0
    %1300 = vmatprep.subr.mxu0 0.0
    %1301 = vmatpush1.msra.mxu0 0.0
    %1302 = vmatprep.subr.mxu0 0.0
    %1303 = vmatpush1.msra.mxu0 0.0
    %1304 = vmatprep.subr.mxu0 0.0
    %1305 = vmatpush1.msra.mxu0 0.0
    %1306 = vmatprep.subr.mxu0 0.0
    %1307 = vmatpush1.msra.mxu0 0.0
    %1308 = vmatprep.subr.mxu0 0.0
    %1309 = vmatpush1.msra.mxu0 0.0
    %1310 = vmatprep.subr.mxu0 0.0
    %1311 = vmatpush1.msra.mxu0 0.0
    %1312 = vmatprep.subr.mxu0 0.0
    %1313 = vmatpush1.msra.mxu0 0.0
    %1314 = vmatprep.subr.mxu0 0.0
    %1315 = vmatpush1.msra.mxu0 0.0
    %1316 = vmatprep.subr.mxu0 0.0
    %1317 = vmatpush1.msra.mxu0 0.0
    %1318 = vmatprep.subr.mxu0 0.0
    %1319 = vmatpush1.msra.mxu0 %v1286
    %1320 = vmatprep.subr.mxu0 0.0
    %1321 = vmatpush2.msra.mxu0 0.0
    %1322 = vmatprep.subr.mxu0 0.0
    %1323 = vmatpush2.msra.mxu0 0.0
    %1324 = vmatprep.subr.mxu0 0.0
    %1325 = vmatpush2.msra.mxu0 0.0
    %1326 = vmatprep.subr.mxu0 0.0
    %1327 = vmatpush2.msra.mxu0 0.0
    %1328 = vmatprep.subr.mxu0 0.0
    %1329 = vmatpush2.msra.mxu0 0.0
    %1330 = vmatprep.subr.mxu0 0.0
    %1331 = vmatpush2.msra.mxu0 0.0
    %1332 = vmatprep.subr.mxu0 0.0
    %1333 = vmatpush2.msra.mxu0 0.0
    %1334 = vmatprep.subr.mxu0 0.0
    %1335 = vmatpush2.msra.mxu0 0.0
    %1336 = vmatprep.subr.mxu0 0.0
    %1337 = vmatpush2.msra.mxu0 0.0
    %1338 = vmatprep.subr.mxu0 0.0
    %1339 = vmatpush2.msra.mxu0 0.0
    %1340 = vmatprep.subr.mxu0 0.0
    %1341 = vmatpush2.msra.mxu0 0.0
    %1342 = vmatprep.subr.mxu0 0.0
    %1343 = vmatpush2.msra.mxu0 0.0
    %1344 = vmatprep.subr.mxu0 0.0
    %1345 = vmatpush2.msra.mxu0 0.0
    %1346 = vmatprep.subr.mxu0 0.0
    %1347 = vmatpush2.msra.mxu0 0.0
    %1348 = vmatprep.subr.mxu0 0.0
    %1349 = vmatpush2.msra.mxu0 0.0
    %1350 = vmatprep.subr.mxu0 0.0
    %1351 = vmatpush2.msra.mxu0 0.0
    %1352 = vmatprep.mubr.f32.mxu0 0.0
    %1353 = vmatmul.mubr.f32.gmra.mxu0 %v1284
    %v1354 = vpop.f32.mrf.mxu0
    %v1355 = vadd.f32 0.0, %v1354
    %v1356 = vpop.f32.mrf.mxu0
    %1357 = vdwg.mxu0
    %v1358 = vsel %vm228, %v1355, -inf
    %v1359 = vrot.slane %v1358, 4
    %v1360 = vmax.f32 %v1358, %v1359
    %v1361 = vrot.slane %v1360, 2
    %v1362 = vmax.f32 %v1360, %v1361
    %v1363 = vrot.slane %v1362, 1
    %v1364 = vmax.f32 %v1362, %v1363
    %v1365 = vsub.f32 %v1355, %v1364
    %v1366 = vmul.f32 %v1365, 1.442695
    %v1367 = vpow.pop %v1366
    %v1368 = vsel %vm228, %v1367, 0.0
    %v1369 = vrot.slane %v1368, 4
    %v1370 = vadd.f32 %v1368, %v1369
    %v1371 = vrot.slane %v1370, 2
    %v1372 = vadd.f32 %v1370, %v1371
    %v1373 = vrot.slane %v1372, 1
    %v1374 = vadd.f32 %v1372, %v1373
    %v1375 = vrcp.pop %v1374
    %v1376 = vmul.f32 %v1375, 0.35355338
    %v1377 = vmul.f32 %v1367, %v1376
    %1378 = vrot.lane.b32.xlu0 %v1247, 112
    %v1379 = vpop.permute.xlu0 %1378
    %v1380 = vsel %vm228, %v1379, 0
    %1382 = vmatprep.subr.mxu0 0.0
    %1383 = vmatpush1.msra.mxu0 0.0
    %1384 = vmatprep.subr.mxu0 0.0
    %1385 = vmatpush1.msra.mxu0 0.0
    %1386 = vmatprep.subr.mxu0 0.0
    %1387 = vmatpush1.msra.mxu0 0.0
    %1388 = vmatprep.subr.mxu0 0.0
    %1389 = vmatpush1.msra.mxu0 0.0
    %1390 = vmatprep.subr.mxu0 0.0
    %1391 = vmatpush1.msra.mxu0 0.0
    %1392 = vmatprep.subr.mxu0 0.0
    %1393 = vmatpush1.msra.mxu0 0.0
    %1394 = vmatprep.subr.mxu0 0.0
    %1395 = vmatpush1.msra.mxu0 0.0
    %1396 = vmatprep.subr.mxu0 0.0
    %1397 = vmatpush1.msra.mxu0 0.0
    %1398 = vmatprep.subr.mxu0 0.0
    %1399 = vmatpush1.msra.mxu0 0.0
    %1400 = vmatprep.subr.mxu0 0.0
    %1401 = vmatpush1.msra.mxu0 0.0
    %1402 = vmatprep.subr.mxu0 0.0
    %1403 = vmatpush1.msra.mxu0 0.0
    %1404 = vmatprep.subr.mxu0 0.0
    %1405 = vmatpush1.msra.mxu0 0.0
    %1406 = vmatprep.subr.mxu0 0.0
    %1407 = vmatpush1.msra.mxu0 0.0
    %1408 = vmatprep.subr.mxu0 0.0
    %1409 = vmatpush1.msra.mxu0 0.0
    %1410 = vmatprep.subr.mxu0 0.0
    %1411 = vmatpush1.msra.mxu0 0.0
    %1412 = vmatprep.subr.mxu0 0.0
    %1413 = vmatpush1.msra.mxu0 %v1377
    %1414 = vmatprep.subr.mxu0 0.0
    %1415 = vmatpush2.msra.mxu0 0.0
    %1416 = vmatprep.subr.mxu0 0.0
    %1417 = vmatpush2.msra.mxu0 0.0
    %1418 = vmatprep.subr.mxu0 0.0
    %1419 = vmatpush2.msra.mxu0 0.0
    %1420 = vmatprep.subr.mxu0 0.0
    %1421 = vmatpush2.msra.mxu0 0.0
    %1422 = vmatprep.subr.mxu0 0.0
    %1423 = vmatpush2.msra.mxu0 0.0
    %1424 = vmatprep.subr.mxu0 0.0
    %1425 = vmatpush2.msra.mxu0 0.0
    %1426 = vmatprep.subr.mxu0 0.0
    %1427 = vmatpush2.msra.mxu0 0.0
    %1428 = vmatprep.subr.mxu0 0.0
    %1429 = vmatpush2.msra.mxu0 0.0
    %1430 = vmatprep.subr.mxu0 0.0
    %1431 = vmatpush2.msra.mxu0 0.0
    %1432 = vmatprep.subr.mxu0 0.0
    %1433 = vmatpush2.msra.mxu0 0.0
    %1434 = vmatprep.subr.mxu0 0.0
    %1435 = vmatpush2.msra.mxu0 0.0
    %1436 = vmatprep.subr.mxu0 0.0
    %1437 = vmatpush2.msra.mxu0 0.0
    %1438 = vmatprep.subr.mxu0 0.0
    %1439 = vmatpush2.msra.mxu0 0.0
    %1440 = vmatprep.subr.mxu0 0.0
    %1441 = vmatpush2.msra.mxu0 0.0
    %1442 = vmatprep.subr.mxu0 0.0
    %1443 = vmatpush2.msra.mxu0 0.0
    %1444 = vmatprep.subr.mxu0 0.0
    %1445 = vmatpush2.msra.mxu0 0.0
    %1446 = vmatprep.mubr.f32.mxu0 0.0
    %1447 = vmatmul.mubr.f32.gmra.mxu0 %v1380
    %v1448 = vpop.f32.mrf.mxu0
    %v1449 = vadd.f32 0.0, %v1448
    %v1450 = vpop.f32.mrf.mxu0
    %1451 = vdwg.mxu0
    %s1452 = scalar_lea.vmem %s3, 24
    %v1453 = vld [vmem:[%s1452] sm:$0xff]
    %s1454 = scalar_lea.vmem %s4, 3
    %v1455 = vld [vmem:[%s1454] sm:$0x1]
    %v1457 = vlaneseq
    %v1458 = vshrl.u32 %v1457, 7
    %v1459 = vsub.s32 0, %v1458
    %v1460 = vrot.slane %v1455, %v1459
    %v1463 = vsel %vm228, %v1449, 0
    %1465 = vmatprep.subr.mxu0 0.0
    %1466 = vmatpush1.msra.mxu0 0.0
    %1467 = vmatprep.subr.mxu0 0.0
    %1468 = vmatpush1.msra.mxu0 0.0
    %1469 = vmatprep.subr.mxu0 0.0
    %1470 = vmatpush1.msra.mxu0 0.0
    %1471 = vmatprep.subr.mxu0 0.0
    %1472 = vmatpush1.msra.mxu0 0.0
    %1473 = vmatprep.subr.mxu0 0.0
    %1474 = vmatpush1.msra.mxu0 0.0
    %1475 = vmatprep.subr.mxu0 0.0
    %1476 = vmatpush1.msra.mxu0 0.0
    %1477 = vmatprep.subr.mxu0 0.0
    %1478 = vmatpush1.msra.mxu0 0.0
    %1479 = vmatprep.subr.mxu0 0.0
    %1480 = vmatpush1.msra.mxu0 0.0
    %1481 = vmatprep.subr.mxu0 0.0
    %1482 = vmatpush1.msra.mxu0 0.0
    %1483 = vmatprep.subr.mxu0 0.0
    %1484 = vmatpush1.msra.mxu0 0.0
    %1485 = vmatprep.subr.mxu0 0.0
    %1486 = vmatpush1.msra.mxu0 0.0
    %1487 = vmatprep.subr.mxu0 0.0
    %1488 = vmatpush1.msra.mxu0 0.0
    %1489 = vmatprep.subr.mxu0 0.0
    %1490 = vmatpush1.msra.mxu0 0.0
    %1491 = vmatprep.subr.mxu0 0.0
    %1492 = vmatpush1.msra.mxu0 0.0
    %1493 = vmatprep.subr.mxu0 0.0
    %1494 = vmatpush1.msra.mxu0 0.0
    %1495 = vmatprep.subr.mxu0 0.0
    %1496 = vmatpush1.msra.mxu0 %v1453
    %1497 = vmatprep.subr.mxu0 0.0
    %1498 = vmatpush2.msra.mxu0 0.0
    %1499 = vmatprep.subr.mxu0 0.0
    %1500 = vmatpush2.msra.mxu0 0.0
    %1501 = vmatprep.subr.mxu0 0.0
    %1502 = vmatpush2.msra.mxu0 0.0
    %1503 = vmatprep.subr.mxu0 0.0
    %1504 = vmatpush2.msra.mxu0 0.0
    %1505 = vmatprep.subr.mxu0 0.0
    %1506 = vmatpush2.msra.mxu0 0.0
    %1507 = vmatprep.subr.mxu0 0.0
    %1508 = vmatpush2.msra.mxu0 0.0
    %1509 = vmatprep.subr.mxu0 0.0
    %1510 = vmatpush2.msra.mxu0 0.0
    %1511 = vmatprep.subr.mxu0 0.0
    %1512 = vmatpush2.msra.mxu0 0.0
    %1513 = vmatprep.subr.mxu0 0.0
    %1514 = vmatpush2.msra.mxu0 0.0
    %1515 = vmatprep.subr.mxu0 0.0
    %1516 = vmatpush2.msra.mxu0 0.0
    %1517 = vmatprep.subr.mxu0 0.0
    %1518 = vmatpush2.msra.mxu0 0.0
    %1519 = vmatprep.subr.mxu0 0.0
    %1520 = vmatpush2.msra.mxu0 0.0
    %1521 = vmatprep.subr.mxu0 0.0
    %1522 = vmatpush2.msra.mxu0 0.0
    %1523 = vmatprep.subr.mxu0 0.0
    %1524 = vmatpush2.msra.mxu0 0.0
    %1525 = vmatprep.subr.mxu0 0.0
    %1526 = vmatpush2.msra.mxu0 0.0
    %1527 = vmatprep.subr.mxu0 0.0
    %1528 = vmatpush2.msra.mxu0 0.0
    %1529 = vmatprep.mubr.f32.mxu0 0.0
    %1530 = vmatmul.mubr.f32.gmra.mxu0 %v1463
    %v1531 = vpop.f32.mrf.mxu0
    %v1532 = vadd.f32 %v1460, %v1531
    %v1533 = vpop.f32.mrf.mxu0
    %1534 = vdwg.mxu0
    %v1535 = vmax.f32 %v1532, 0.0
    %v1536 = vld [vmem:[%s5] sm:$0xff]
    %v1537 = vld [vmem:[%s5 + $0x8] sm:$0xff]
    %v1538 = vld [vmem:[%s5 + $0x10] sm:$0xff]
    %v1539 = vld [vmem:[%s5 + $0x18] sm:$0xff]
    %v1540 = vld [vmem:[%s5 + $0x20] sm:$0xff]
    %v1541 = vld [vmem:[%s5 + $0x28] sm:$0xff]
    %v1542 = vld [vmem:[%s6] sm:$0x1]
    %v1544 = vlaneseq
    %v1545 = vshrl.u32 %v1544, 7
    %v1546 = vsub.s32 0, %v1545
    %v1547 = vrot.slane %v1542, %v1546
    %v1550 = vsel %vm41, %v1535, 0
    %1552 = vmatprep.subr.mxu0 0.0
    %1553 = vmatpush1.msra.mxu0 0.0
    %1554 = vmatprep.subr.mxu0 0.0
    %1555 = vmatpush1.msra.mxu0 0.0
    %1556 = vmatprep.subr.mxu0 0.0
    %1557 = vmatpush1.msra.mxu0 0.0
    %1558 = vmatprep.subr.mxu0 0.0
    %1559 = vmatpush1.msra.mxu0 0.0
    %1560 = vmatprep.subr.mxu0 0.0
    %1561 = vmatpush1.msra.mxu0 0.0
    %1562 = vmatprep.subr.mxu0 0.0
    %1563 = vmatpush1.msra.mxu0 0.0
    %1564 = vmatprep.subr.mxu0 0.0
    %1565 = vmatpush1.msra.mxu0 0.0
    %1566 = vmatprep.subr.mxu0 0.0
    %1567 = vmatpush1.msra.mxu0 0.0
    %1568 = vmatprep.subr.mxu0 0.0
    %1569 = vmatpush1.msra.mxu0 0.0
    %1570 = vmatprep.subr.mxu0 0.0
    %1571 = vmatpush1.msra.mxu0 0.0
    %1572 = vmatprep.subr.mxu0 0.0
    %1573 = vmatpush1.msra.mxu0 %v1541
    %1574 = vmatprep.subr.mxu0 0.0
    %1575 = vmatpush1.msra.mxu0 %v1540
    %1576 = vmatprep.subr.mxu0 0.0
    %1577 = vmatpush1.msra.mxu0 %v1539
    %1578 = vmatprep.subr.mxu0 0.0
    %1579 = vmatpush1.msra.mxu0 %v1538
    %1580 = vmatprep.subr.mxu0 0.0
    %1581 = vmatpush1.msra.mxu0 %v1537
    %1582 = vmatprep.subr.mxu0 0.0
    %1583 = vmatpush1.msra.mxu0 %v1536
    %1584 = vmatprep.subr.mxu0 0.0
    %1585 = vmatpush2.msra.mxu0 0.0
    %1586 = vmatprep.subr.mxu0 0.0
    %1587 = vmatpush2.msra.mxu0 0.0
    %1588 = vmatprep.subr.mxu0 0.0
    %1589 = vmatpush2.msra.mxu0 0.0
    %1590 = vmatprep.subr.mxu0 0.0
    %1591 = vmatpush2.msra.mxu0 0.0
    %1592 = vmatprep.subr.mxu0 0.0
    %1593 = vmatpush2.msra.mxu0 0.0
    %1594 = vmatprep.subr.mxu0 0.0
    %1595 = vmatpush2.msra.mxu0 0.0
    %1596 = vmatprep.subr.mxu0 0.0
    %1597 = vmatpush2.msra.mxu0 0.0
    %1598 = vmatprep.subr.mxu0 0.0
    %1599 = vmatpush2.msra.mxu0 0.0
    %1600 = vmatprep.subr.mxu0 0.0
    %1601 = vmatpush2.msra.mxu0 0.0
    %1602 = vmatprep.subr.mxu0 0.0
    %1603 = vmatpush2.msra.mxu0 0.0
    %1604 = vmatprep.subr.mxu0 0.0
    %1605 = vmatpush2.msra.mxu0 0.0
    %1606 = vmatprep.subr.mxu0 0.0
    %1607 = vmatpush2.msra.mxu0 0.0
    %1608 = vmatprep.subr.mxu0 0.0
    %1609 = vmatpush2.msra.mxu0 0.0
    %1610 = vmatprep.subr.mxu0 0.0
    %1611 = vmatpush2.msra.mxu0 0.0
    %1612 = vmatprep.subr.mxu0 0.0
    %1613 = vmatpush2.msra.mxu0 0.0
    %1614 = vmatprep.subr.mxu0 0.0
    %1615 = vmatpush2.msra.mxu0 0.0
    %1616 = vmatprep.mubr.f32.mxu0 0.0
    %1617 = vmatmul.mubr.f32.gmra.mxu0 %v1550
    %v1618 = vpop.f32.mrf.mxu0
    %v1619 = vadd.f32 %v1547, %v1618
    %v1620 = vpop.f32.mrf.mxu0
    %1621 = vdwg.mxu0
    %vm1622 = vcmask 74752
    %v1623 = vsel %vm1622, %v1619, -inf
    %1624 = vmax.xlane.f32.xlu0 %v1623
    %v1625 = vpop.xlane.xlu0 %1624
    %v1626 = vsub.f32 %v1619, %v1625
    %v1627 = vmul.f32 %v1626, 1.442695
    %v1628 = vpow.pop %v1627
    %v1629 = vsel %vm1622, %v1628, 0.0
    %1630 = vadd.xlane.f32.xlu0 %v1629
    %v1631 = vpop.xlane.xlu0 %1630
    %v1632 = vrcp.pop %v1631
    %v1633 = vmul.f32 %v1628, %v1632
    %1634 = vst.msk [vmem:[#allocation2] sm:$0x3] %vm1622, %v1633
    // Predicated region
    $region30: #{attention_net_forward.7} parent=1 // pred_check
      _
    $region31: #{attention_net_forward.7} parent=1 // pred_check_branch
      %1636 = sbr.rel (0) target = $region33
    $region32: #{attention_net_forward.7} parent=1 // pred_region
      %s1638 = ssub.s32 32, 32
      %1639 = vsyncadd [#allocation3], %s1638
      %s1641 = sshll.u32 [#allocation2], 4
      %s1642 = int_to_ptr.vmem [resolvable:$true] %s1641
      %1644 = dma.vmem_to_hbm [thread:$0]  %s1642, 32, %s7, [#allocation3]
    $region33: #{attention_net_forward.7} parent=1 // pred_fallthru
      _
    // Predicated region
    $region34: #{attention_net_forward.7} parent=1 // pred_check
      _
    $region35: #{attention_net_forward.7} parent=1 // pred_check_branch
      %1646 = sbr.rel (0) target = $region37
    $region36: #{attention_net_forward.7} parent=1 // pred_region
      %1647 = dma.done [#allocation3], 32
    $region37: #{attention_net_forward.7} parent=1 // pred_fallthru
      _
    %1648 = vsyncpa [#allocation3], 1

</llo_original>
